<compile_context>
chip_gen: v5e
topology: v5e:2x2
jax: 0.10.0
libtpu: 0.0.40
codegen_flags: <defaults>
</compile_context>

<pallas_src>
import functools

import jax
import jax.numpy as jnp
from jax.experimental import pallas as pl
from jax.experimental.pallas import tpu as pltpu

_VMEM_LIMIT = 32 * 1024 * 1024  # safe on v5e/v6e/v7x; raise for production L/D


# ------------------------- fused EncoderLayer kernel ------------------------

def _encoder_layer_kernel(x_ref, wqkv_ref, bqkv_ref, wo_ref, bo_ref,
                          w1_ref, bf1_ref, w2_ref, bf2_ref,
                          g1_ref, b1_ref, g2_ref, b2_ref, g3_ref, b3_ref,
                          o_ref, *attn_refs, H, scale, eps, apply_final_norm):
    x = x_ref[0]                                    # (L, D) f32, this batch elem
    L, D = x.shape
    Dh = D // H
    xb = x.astype(jnp.bfloat16)

    # fused QKV projection: one (L, D) x (D, 3D) bf16 matmul, f32 accumulation
    qkv = (jnp.dot(xb, wqkv_ref[...], preferred_element_type=jnp.float32)
           + bqkv_ref[...])                         # (L, 3D) f32

    # stack per-head slices -> (H, L, Dh), bf16 for the MXU
    q = jnp.stack([qkv[:, h * Dh:(h + 1) * Dh] for h in range(H)],
                  0).astype(jnp.bfloat16)
    k = jnp.stack([qkv[:, D + h * Dh:D + (h + 1) * Dh] for h in range(H)],
                  0).astype(jnp.bfloat16)
    v = jnp.stack([qkv[:, 2 * D + h * Dh:2 * D + (h + 1) * Dh] for h in range(H)],
                  0).astype(jnp.bfloat16)

    # all heads in one batched einsum; softmax in f32
    s = jnp.einsum('hqd,hkd->hqk', q, k,
                   preferred_element_type=jnp.float32) * scale       # (H, L, L)
    m = jnp.max(s, axis=-1, keepdims=True)
    p = jnp.exp(s - m)
    denom = jnp.sum(p, axis=-1, keepdims=True)
    a = p * pl.reciprocal(denom, approx=True)       # EUP reciprocal (approx)
    if attn_refs:                                   # single full-tile store
        attn_refs[0][0] = a.astype(attn_refs[0].dtype)

    ctx = jnp.einsum('hqk,hkd->hqd', a.astype(jnp.bfloat16), v,
                     preferred_element_type=jnp.float32)              # (H, L, Dh)
    ctx = jnp.concatenate([ctx[h] for h in range(H)], axis=-1)        # (L, D)

    # output projection: ONE K=D matmul (not H small ones)
    new_x = (jnp.dot(ctx.astype(jnp.bfloat16), wo_ref[...],
                     preferred_element_type=jnp.float32) + bo_ref[...])

    def layer_norm(val, g_row, b_row):
        mu = jnp.mean(val, axis=-1, keepdims=True)
        vc = val - mu
        var = jnp.mean(vc * vc, axis=-1, keepdims=True)
        return vc * jax.lax.rsqrt(var + eps) * g_row + b_row

    # x = norm1(x + dropout(new_x)); dropout == identity
    xn = layer_norm(x + new_x, g1_ref[...], b1_ref[...])

    # pointwise-conv FFN (kernel_size=1 convs == linears), ReLU, bf16 matmuls
    hdn = jnp.maximum(
        jnp.dot(xn.astype(jnp.bfloat16), w1_ref[...],
                preferred_element_type=jnp.float32) + bf1_ref[...], 0.0)
    y = (jnp.dot(hdn.astype(jnp.bfloat16), w2_ref[...],
                 preferred_element_type=jnp.float32) + bf2_ref[...])
    out = layer_norm(xn + y, g2_ref[...], b2_ref[...])

    if apply_final_norm:                            # fused Encoder final norm
        out = layer_norm(out, g3_ref[...], b3_ref[...])
    o_ref[0] = out.astype(o_ref.dtype)


def encoder_layer(x, p, H, *, final_norm=None, output_attention=True):
    B, L, D = x.shape
    Dff = p['w1'].shape[1]
    scale = 1.0 / float(D // H) ** 0.5
    apply_final_norm = final_norm is not None
    g3 = final_norm['gamma'] if apply_final_norm else jnp.ones((1, D), jnp.float32)
    b3 = final_norm['beta'] if apply_final_norm else jnp.zeros((1, D), jnp.float32)

    def wspec(r, c):                      # full weight block, resident in VMEM
        return pl.BlockSpec((r, c), lambda b: (0, 0))

    in_specs = [pl.BlockSpec((1, L, D), lambda b: (b, 0, 0)),
                wspec(D, 3 * D), wspec(1, 3 * D),
                wspec(D, D), wspec(1, D),
                wspec(D, Dff), wspec(1, Dff),
                wspec(Dff, D), wspec(1, D),
                wspec(1, D), wspec(1, D), wspec(1, D), wspec(1, D),
                wspec(1, D), wspec(1, D)]

    if output_attention:
        out_specs = (pl.BlockSpec((1, L, D), lambda b: (b, 0, 0)),
                     pl.BlockSpec((1, H, L, L), lambda b: (b, 0, 0, 0)))
        out_shape = (jax.ShapeDtypeStruct((B, L, D), jnp.float32),
                     jax.ShapeDtypeStruct((B, H, L, L), jnp.float32))
    else:
        out_specs = pl.BlockSpec((1, L, D), lambda b: (b, 0, 0))
        out_shape = jax.ShapeDtypeStruct((B, L, D), jnp.float32)

    outs = pl.pallas_call(
        functools.partial(_encoder_layer_kernel, H=H, scale=scale, eps=1e-5,
                          apply_final_norm=apply_final_norm),
        grid=(B,),
        in_specs=in_specs,
        out_specs=out_specs,
        out_shape=out_shape,
        compiler_params=pltpu.CompilerParams(
            dimension_semantics=("parallel",),
            vmem_limit_bytes=_VMEM_LIMIT),
    )(x, p['wqkv'], p['bqkv'], p['wo'], p['bo'],
      p['w1'], p['bf1'], p['w2'], p['bf2'],
      p['g1'], p['b1n'], p['g2'], p['b2n'], g3, b3)

    if output_attention:
        return outs[0], outs[1]
    return outs, None


# --------------------------- fused ConvLayer kernels -------------------------
# ConvLayer = Conv1d(k=3, padding=2, circular) -> BatchNorm1d (batch stats)
#             -> ELU -> MaxPool1d(k=3, stride=2, padding=1)

def _conv_stats_kernel(x_ref, w_ref, b_ref, y_ref, stats_ref):
    # x: (1, L, D); w: (3, D, D) bf16; b: (1, D)
    x = x_ref[0]                                    # (L, D)
    L, D = x.shape
    Lc = L + 2
    xb = x.astype(jnp.bfloat16)
    # circular pad of 2 on each side via static slices (no gather matmuls)
    xpad = jnp.concatenate([xb[L - 2:], xb, xb[:2]], axis=0)          # (L+4, D)
    acc = jnp.zeros((Lc, D), jnp.float32) + b_ref[...]
    for j in range(3):                              # three real conv-tap matmuls
        acc = acc + jnp.dot(xpad[j:j + Lc], w_ref[j],
                            preferred_element_type=jnp.float32)
    y_ref[0] = acc
    # per-batch partial stats for BatchNorm1d (training-mode, biased)
    stats_ref[0] = jnp.concatenate(
        [jnp.sum(acc, axis=0, keepdims=True),
         jnp.sum(acc * acc, axis=0, keepdims=True)], axis=0)          # (2, D)


def _bn_elu_pool_kernel(y_ref, mu_ref, inv_ref, g_ref, be_ref, o_ref, pad_scr):
    y = y_ref[0]                                    # (Lc, D) f32
    Lc, D = y.shape
    Lout = o_ref.shape[1]
    # BatchNorm apply + ELU in f32 (VPU/EUP)
    yn = (y - mu_ref[...]) * inv_ref[...] * g_ref[...] + be_ref[...]
    ya = jnp.where(yn > 0, yn, jnp.exp(yn) - 1.0)
    # MaxPool1d(k=3, stride=2, padding=1): pad scratch with a large negative
    # value (explicit -inf-style padding) and take 3 strided sublane reads.
    neg = jnp.full((1, D), -1e30, jnp.float32)
    pad_scr[pl.ds(0, 1), :] = neg
    pad_scr[pl.ds(Lc + 1, 1), :] = neg
    pad_scr[pl.ds(1, Lc), :] = ya
    p0 = pad_scr[pl.ds(0, Lout, stride=2), :]
    p1 = pad_scr[pl.ds(1, Lout, stride=2), :]
    p2 = pad_scr[pl.ds(2, Lout, stride=2), :]
    o_ref[0] = jnp.maximum(jnp.maximum(p0, p1), p2).astype(o_ref.dtype)


def conv_layer(x, cp, eps=1e-5):
    B, L, D = x.shape
    Lc = L + 2                        # Conv1d(k=3, padding=2, circular) out len
    Lout = (Lc - 1) // 2 + 1          # MaxPool1d(k=3, stride=2, padding=1)

    # pass 1: circular conv + per-batch stats (gridded over B, parallel)
    y, stats = pl.pallas_call(
        _conv_stats_kernel,
        grid=(B,),
        in_specs=[pl.BlockSpec((1, L, D), lambda b: (b, 0, 0)),
                  pl.BlockSpec((3, D, D), lambda b: (0, 0, 0)),
                  pl.BlockSpec((1, D), lambda b: (0, 0))],
        out_specs=(pl.BlockSpec((1, Lc, D), lambda b: (b, 0, 0)),
                   pl.BlockSpec((1, 2, D), lambda b: (b, 0, 0))),
        out_shape=(jax.ShapeDtypeStruct((B, Lc, D), jnp.float32),
                   jax.ShapeDtypeStruct((B, 2, D), jnp.float32)),
        compiler_params=pltpu.CompilerParams(
            dimension_semantics=("parallel",),
            vmem_limit_bytes=_VMEM_LIMIT),
    )(x, cp['w'], cp['b'])

    # tiny cross-batch reduction (XLA) for batch statistics
    total = float(B * Lc)
    mu = jnp.sum(stats[:, 0:1, :], axis=0) / total                    # (1, D)
    ex2 = jnp.sum(stats[:, 1:2, :], axis=0) / total
    var = jnp.maximum(ex2 - mu * mu, 0.0)
    inv = jax.lax.rsqrt(var + eps)                                    # (1, D)

    # pass 2: BatchNorm apply + ELU + maxpool (gridded over B, parallel)
    return pl.pallas_call(
        _bn_elu_pool_kernel,
        grid=(B,),
        in_specs=[pl.BlockSpec((1, Lc, D), lambda b: (b, 0, 0)),
                  pl.BlockSpec((1, D), lambda b: (0, 0)),
                  pl.BlockSpec((1, D), lambda b: (0, 0)),
                  pl.BlockSpec((1, D), lambda b: (0, 0)),
                  pl.BlockSpec((1, D), lambda b: (0, 0))],
        out_specs=pl.BlockSpec((1, Lout, D), lambda b: (b, 0, 0)),
        out_shape=jax.ShapeDtypeStruct((B, Lout, D), jnp.float32),
        scratch_shapes=[pltpu.VMEM((Lc + 2, D), jnp.float32)],
        compiler_params=pltpu.CompilerParams(
            dimension_semantics=("parallel",),
            vmem_limit_bytes=_VMEM_LIMIT),
    )(y, mu, inv, cp['gamma'], cp['beta'])


# -------------------------------- encoder ------------------------------------

def encoder_forward(x, params, H, output_attention=True):
    # Mirrors Encoder.forward with conv_layers present:
    #   (attn, conv) pairs, then the last attn layer, then the final norm
    # (the final norm is fused into the last encoder_layer pallas_call).
    attns = []
    layers = params['layers']
    convs = params['convs']
    for lp, cp in zip(layers[:-1], convs):
        x, a = encoder_layer(x, lp, H, output_attention=output_attention)
        attns.append(a)
        x = conv_layer(x, cp)
    x, a = encoder_layer(x, layers[-1], H, final_norm=params['norm'],
                         output_attention=output_attention)
    attns.append(a)
    return x, attns


# ------------------------------ parameters -----------------------------------

def init_params(key, D, Dff, n_layers):
    keys = jax.random.split(key, 8 * n_layers + 8)
    kit = iter(keys)

    def w(shape, scale=0.05):
        # MXU-facing weights stored in bf16 (halves VMEM/HBM weight traffic)
        return (jax.random.normal(next(kit), shape, jnp.float32)
                * scale).astype(jnp.bfloat16)

    layers = []
    for _ in range(n_layers):
        layers.append(dict(
            wqkv=w((D, 3 * D)),                     # [Wq | Wk | Wv] fused
            bqkv=jnp.zeros((1, 3 * D), jnp.float32),
            wo=w((D, D)), bo=jnp.zeros((1, D), jnp.float32),
            w1=w((D, Dff)), bf1=jnp.zeros((1, Dff), jnp.float32),
            w2=w((Dff, D)), bf2=jnp.zeros((1, D), jnp.float32),
            g1=jnp.ones((1, D), jnp.float32), b1n=jnp.zeros((1, D), jnp.float32),
            g2=jnp.ones((1, D), jnp.float32), b2n=jnp.zeros((1, D), jnp.float32),
        ))
    convs = []
    for _ in range(max(0, n_layers - 1)):
        convs.append(dict(
            w=w((3, D, D)),                         # (k, c_in, c_out) bf16
            b=jnp.zeros((1, D), jnp.float32),
            gamma=jnp.ones((1, D), jnp.float32),
            beta=jnp.zeros((1, D), jnp.float32),
        ))
    norm = dict(gamma=jnp.ones((1, D), jnp.float32),
                beta=jnp.zeros((1, D), jnp.float32))
    return dict(layers=layers, convs=convs, norm=norm)


# --------------------------------- main ---------------------------------------

if __name__ == "__main__":
    B, L, D, H, Dff = 2, 16, 32, 4, 64
    n_attn_layers = 2        # 2 attn layers, 1 conv (distilling) layer

    key = jax.random.PRNGKey(0)
    k_x, k_p = jax.random.split(key)
    x = jax.random.normal(k_x, (B, L, D), jnp.float32)
    params = init_params(k_p, D, Dff, n_attn_layers)

    fwd = jax.jit(lambda xx, pp: encoder_forward(xx, pp, H))
    out, attns = fwd(x, params)
    out = jax.block_until_ready(out)
    attns = [jax.block_until_ready(a) for a in attns]

    assert out.shape == (B, 9, D), out.shape          # distilling: 16 -> 9
    assert attns[0].shape == (B, H, 16, 16)
    assert attns[1].shape == (B, H, 9, 9)
    assert bool(jnp.all(jnp.isfinite(out)))
    assert all(bool(jnp.all(jnp.isfinite(a))) for a in attns)
    print("KERNEL_OK")
</pallas_src>

<mosaic_0001>
module attributes {stable_mosaic.version = 11 : i64} {
  func.func @_encoder_layer_kernel(%arg0: i32, %arg1: memref<1x16x32xf32, #tpu.memory_space<vmem>>, %arg2: memref<32x96xbf16, #tpu.memory_space<vmem>>, %arg3: memref<1x96xf32, #tpu.memory_space<vmem>>, %arg4: memref<32x32xbf16, #tpu.memory_space<vmem>>, %arg5: memref<1x32xf32, #tpu.memory_space<vmem>>, %arg6: memref<32x64xbf16, #tpu.memory_space<vmem>>, %arg7: memref<1x64xf32, #tpu.memory_space<vmem>>, %arg8: memref<64x32xbf16, #tpu.memory_space<vmem>>, %arg9: memref<1x32xf32, #tpu.memory_space<vmem>>, %arg10: memref<1x32xf32, #tpu.memory_space<vmem>>, %arg11: memref<1x32xf32, #tpu.memory_space<vmem>>, %arg12: memref<1x32xf32, #tpu.memory_space<vmem>>, %arg13: memref<1x32xf32, #tpu.memory_space<vmem>>, %arg14: memref<1x32xf32, #tpu.memory_space<vmem>>, %arg15: memref<1x32xf32, #tpu.memory_space<vmem>>, %arg16: memref<1x16x32xf32, #tpu.memory_space<vmem>>, %arg17: memref<1x4x16x16xf32, #tpu.memory_space<vmem>>) attributes {dimension_semantics = [#tpu.dimension_semantics<parallel>], iteration_bounds = array<i64: 2>, scalar_prefetch = 0 : i64, scratch_operands = 0 : i64, tpu.core_type = #tpu.core_type<tc>, window_params = [{transform_indices = @transform_0, window_bounds = array<i64: 1, 16, 32>}, {pipeline_mode = #tpu.pipeline_mode<synchronous>, transform_indices = @transform_1, window_bounds = array<i64: 32, 96>}, {pipeline_mode = #tpu.pipeline_mode<synchronous>, transform_indices = @transform_2, window_bounds = array<i64: 1, 96>}, {pipeline_mode = #tpu.pipeline_mode<synchronous>, transform_indices = @transform_3, window_bounds = array<i64: 32, 32>}, {pipeline_mode = #tpu.pipeline_mode<synchronous>, transform_indices = @transform_4, window_bounds = array<i64: 1, 32>}, {pipeline_mode = #tpu.pipeline_mode<synchronous>, transform_indices = @transform_5, window_bounds = array<i64: 32, 64>}, {pipeline_mode = #tpu.pipeline_mode<synchronous>, transform_indices = @transform_6, window_bounds = array<i64: 1, 64>}, {pipeline_mode = #tpu.pipeline_mode<synchronous>, transform_indices = @transform_7, window_bounds = array<i64: 64, 32>}, {pipeline_mode = #tpu.pipeline_mode<synchronous>, transform_indices = @transform_8, window_bounds = array<i64: 1, 32>}, {pipeline_mode = #tpu.pipeline_mode<synchronous>, transform_indices = @transform_9, window_bounds = array<i64: 1, 32>}, {pipeline_mode = #tpu.pipeline_mode<synchronous>, transform_indices = @transform_10, window_bounds = array<i64: 1, 32>}, {pipeline_mode = #tpu.pipeline_mode<synchronous>, transform_indices = @transform_11, window_bounds = array<i64: 1, 32>}, {pipeline_mode = #tpu.pipeline_mode<synchronous>, transform_indices = @transform_12, window_bounds = array<i64: 1, 32>}, {pipeline_mode = #tpu.pipeline_mode<synchronous>, transform_indices = @transform_13, window_bounds = array<i64: 1, 32>}, {pipeline_mode = #tpu.pipeline_mode<synchronous>, transform_indices = @transform_14, window_bounds = array<i64: 1, 32>}, {transform_indices = @transform_15, window_bounds = array<i64: 1, 16, 32>}, {transform_indices = @transform_16, window_bounds = array<i64: 1, 4, 16, 16>}]} {
    %c0 = arith.constant 0 : index
    %c0_0 = arith.constant 0 : index
    %c0_1 = arith.constant 0 : index
    %0 = vector.load %arg1[%c0, %c0_0, %c0_1] : memref<1x16x32xf32, #tpu.memory_space<vmem>>, vector<1x16x32xf32>
    %1 = vector.shape_cast %0 : vector<1x16x32xf32> to vector<16x32xf32>
    %2 = arith.truncf %1 : vector<16x32xf32> to vector<16x32xbf16>
    %c0_2 = arith.constant 0 : index
    %c0_3 = arith.constant 0 : index
    %3 = vector.load %arg2[%c0_2, %c0_3] : memref<32x96xbf16, #tpu.memory_space<vmem>>, vector<32x96xbf16>
    %cst = arith.constant dense<0.000000e+00> : vector<16x96xf32>
    %4 = tpu.matmul %2, %3, %cst {dimension_numbers = #tpu.dot_dimension_numbers<[1], [0], [0], [1], [0, 0, 1, 1], [], []>} : vector<16x32xbf16>, vector<32x96xbf16>, vector<16x96xf32> -> vector<16x96xf32>
    %c0_4 = arith.constant 0 : index
    %c0_5 = arith.constant 0 : index
    %5 = vector.load %arg3[%c0_4, %c0_5] : memref<1x96xf32, #tpu.memory_space<vmem>>, vector<1x96xf32>
    %6 = vector.broadcast %5 : vector<1x96xf32> to vector<16x96xf32>
    %7 = arith.addf %4, %6 : vector<16x96xf32>
    %8 = vector.extract_strided_slice %7 {offsets = [0, 0], sizes = [16, 8], strides = [1, 1]} : vector<16x96xf32> to vector<16x8xf32>
    %9 = vector.extract_strided_slice %7 {offsets = [0, 8], sizes = [16, 8], strides = [1, 1]} : vector<16x96xf32> to vector<16x8xf32>
    %10 = vector.extract_strided_slice %7 {offsets = [0, 16], sizes = [16, 8], strides = [1, 1]} : vector<16x96xf32> to vector<16x8xf32>
    %11 = vector.extract_strided_slice %7 {offsets = [0, 24], sizes = [16, 8], strides = [1, 1]} : vector<16x96xf32> to vector<16x8xf32>
    %12 = vector.shape_cast %8 : vector<16x8xf32> to vector<1x16x8xf32>
    %13 = vector.shape_cast %9 : vector<16x8xf32> to vector<1x16x8xf32>
    %14 = vector.shape_cast %10 : vector<16x8xf32> to vector<1x16x8xf32>
    %15 = vector.shape_cast %11 : vector<16x8xf32> to vector<1x16x8xf32>
    %16 = tpu.concatenate %12, %13, %14, %15 in 0 : vector<1x16x8xf32>, vector<1x16x8xf32>, vector<1x16x8xf32>, vector<1x16x8xf32> -> vector<4x16x8xf32>
    %17 = arith.truncf %16 : vector<4x16x8xf32> to vector<4x16x8xbf16>
    %18 = vector.extract_strided_slice %7 {offsets = [0, 32], sizes = [16, 8], strides = [1, 1]} : vector<16x96xf32> to vector<16x8xf32>
    %19 = vector.extract_strided_slice %7 {offsets = [0, 40], sizes = [16, 8], strides = [1, 1]} : vector<16x96xf32> to vector<16x8xf32>
    %20 = vector.extract_strided_slice %7 {offsets = [0, 48], sizes = [16, 8], strides = [1, 1]} : vector<16x96xf32> to vector<16x8xf32>
    %21 = vector.extract_strided_slice %7 {offsets = [0, 56], sizes = [16, 8], strides = [1, 1]} : vector<16x96xf32> to vector<16x8xf32>
    %22 = vector.shape_cast %18 : vector<16x8xf32> to vector<1x16x8xf32>
    %23 = vector.shape_cast %19 : vector<16x8xf32> to vector<1x16x8xf32>
    %24 = vector.shape_cast %20 : vector<16x8xf32> to vector<1x16x8xf32>
    %25 = vector.shape_cast %21 : vector<16x8xf32> to vector<1x16x8xf32>
    %26 = tpu.concatenate %22, %23, %24, %25 in 0 : vector<1x16x8xf32>, vector<1x16x8xf32>, vector<1x16x8xf32>, vector<1x16x8xf32> -> vector<4x16x8xf32>
    %27 = arith.truncf %26 : vector<4x16x8xf32> to vector<4x16x8xbf16>
    %28 = vector.extract_strided_slice %7 {offsets = [0, 64], sizes = [16, 8], strides = [1, 1]} : vector<16x96xf32> to vector<16x8xf32>
    %29 = vector.extract_strided_slice %7 {offsets = [0, 72], sizes = [16, 8], strides = [1, 1]} : vector<16x96xf32> to vector<16x8xf32>
    %30 = vector.extract_strided_slice %7 {offsets = [0, 80], sizes = [16, 8], strides = [1, 1]} : vector<16x96xf32> to vector<16x8xf32>
    %31 = vector.extract_strided_slice %7 {offsets = [0, 88], sizes = [16, 8], strides = [1, 1]} : vector<16x96xf32> to vector<16x8xf32>
    %32 = vector.shape_cast %28 : vector<16x8xf32> to vector<1x16x8xf32>
    %33 = vector.shape_cast %29 : vector<16x8xf32> to vector<1x16x8xf32>
    %34 = vector.shape_cast %30 : vector<16x8xf32> to vector<1x16x8xf32>
    %35 = vector.shape_cast %31 : vector<16x8xf32> to vector<1x16x8xf32>
    %36 = tpu.concatenate %32, %33, %34, %35 in 0 : vector<1x16x8xf32>, vector<1x16x8xf32>, vector<1x16x8xf32>, vector<1x16x8xf32> -> vector<4x16x8xf32>
    %37 = arith.truncf %36 : vector<4x16x8xf32> to vector<4x16x8xbf16>
    "tpu.trace_start"() <{level = 10 : i32, message = "hqd,hkd->hqk"}> : () -> ()
    %cst_6 = arith.constant dense<0.000000e+00> : vector<4x16x16xf32>
    %38 = tpu.matmul %17, %27, %cst_6 {dimension_numbers = #tpu.dot_dimension_numbers<[2], [2], [1], [1], [0, 0, 0, 1, 1, 1], [0], [0]>} : vector<4x16x8xbf16>, vector<4x16x8xbf16>, vector<4x16x16xf32> -> vector<4x16x16xf32>
    "tpu.trace_stop"() : () -> ()
    %cst_7 = arith.constant 0.353553385 : f32
    %39 = vector.broadcast %cst_7 : f32 to vector<4x16x16xf32>
    %40 = arith.mulf %38, %39 : vector<4x16x16xf32>
    %cst_8 = arith.constant dense<0xFF800000> : vector<4x16xf32>
    %41 = vector.multi_reduction <maximumf>, %40, %cst_8 [2] : vector<4x16x16xf32> to vector<4x16xf32>
    %42 = vector.shape_cast %41 : vector<4x16xf32> to vector<4x16x1xf32>
    %43 = vector.broadcast %42 : vector<4x16x1xf32> to vector<4x16x16xf32>
    %44 = arith.subf %40, %43 : vector<4x16x16xf32>
    %45 = math.exp %44 : vector<4x16x16xf32>
    %cst_9 = arith.constant dense<0.000000e+00> : vector<4x16xf32>
    %46 = vector.multi_reduction <add>, %45, %cst_9 [2] : vector<4x16x16xf32> to vector<4x16xf32>
    %47 = vector.shape_cast %46 : vector<4x16xf32> to vector<4x16x1xf32>
    %48 = tpu.reciprocal %47 {approx = true} : vector<4x16x1xf32> -> vector<4x16x1xf32>
    %49 = vector.broadcast %48 : vector<4x16x1xf32> to vector<4x16x16xf32>
    %50 = arith.mulf %45, %49 : vector<4x16x16xf32>
    %c0_10 = arith.constant 0 : index
    %c0_11 = arith.constant 0 : index
    %c0_12 = arith.constant 0 : index
    %c0_13 = arith.constant 0 : index
    %51 = vector.load %arg17[%c0_10, %c0_11, %c0_12, %c0_13] : memref<1x4x16x16xf32, #tpu.memory_space<vmem>>, vector<1x4x16x16xf32>
    %52 = vector.shape_cast %51 : vector<1x4x16x16xf32> to vector<4x16x16xf32>
    %53 = vector.shape_cast %50 : vector<4x16x16xf32> to vector<1x4x16x16xf32>
    tpu.vector_store %arg17[%c0_10, %c0_11, %c0_12, %c0_13], %53 {strides = array<i32>} : memref<1x4x16x16xf32, #tpu.memory_space<vmem>>, vector<1x4x16x16xf32>,
    %54 = arith.truncf %50 : vector<4x16x16xf32> to vector<4x16x16xbf16>
    "tpu.trace_start"() <{level = 10 : i32, message = "hqk,hkd->hqd"}> : () -> ()
    %cst_14 = arith.constant dense<0.000000e+00> : vector<4x16x8xf32>
    %55 = tpu.matmul %54, %37, %cst_14 {dimension_numbers = #tpu.dot_dimension_numbers<[2], [1], [1], [2], [0, 0, 0, 1, 1, 2], [0], [0]>} : vector<4x16x16xbf16>, vector<4x16x8xbf16>, vector<4x16x8xf32> -> vector<4x16x8xf32>
    "tpu.trace_stop"() : () -> ()
    %56 = vector.extract_strided_slice %55 {offsets = [0, 0, 0], sizes = [1, 16, 8], strides = [1, 1, 1]} : vector<4x16x8xf32> to vector<1x16x8xf32>
    %57 = vector.shape_cast %56 : vector<1x16x8xf32> to vector<16x8xf32>
    %58 = vector.extract_strided_slice %55 {offsets = [1, 0, 0], sizes = [1, 16, 8], strides = [1, 1, 1]} : vector<4x16x8xf32> to vector<1x16x8xf32>
    %59 = vector.shape_cast %58 : vector<1x16x8xf32> to vector<16x8xf32>
    %60 = vector.extract_strided_slice %55 {offsets = [2, 0, 0], sizes = [1, 16, 8], strides = [1, 1, 1]} : vector<4x16x8xf32> to vector<1x16x8xf32>
    %61 = vector.shape_cast %60 : vector<1x16x8xf32> to vector<16x8xf32>
    %62 = vector.extract_strided_slice %55 {offsets = [3, 0, 0], sizes = [1, 16, 8], strides = [1, 1, 1]} : vector<4x16x8xf32> to vector<1x16x8xf32>
    %63 = vector.shape_cast %62 : vector<1x16x8xf32> to vector<16x8xf32>
    %64 = tpu.concatenate %57, %59, %61, %63 in 1 : vector<16x8xf32>, vector<16x8xf32>, vector<16x8xf32>, vector<16x8xf32> -> vector<16x32xf32>
    %65 = arith.truncf %64 : vector<16x32xf32> to vector<16x32xbf16>
    %c0_15 = arith.constant 0 : index
    %c0_16 = arith.constant 0 : index
    %66 = vector.load %arg4[%c0_15, %c0_16] : memref<32x32xbf16, #tpu.memory_space<vmem>>, vector<32x32xbf16>
    %cst_17 = arith.constant dense<0.000000e+00> : vector<16x32xf32>
    %67 = tpu.matmul %65, %66, %cst_17 {dimension_numbers = #tpu.dot_dimension_numbers<[1], [0], [0], [1], [0, 0, 1, 1], [], []>} : vector<16x32xbf16>, vector<32x32xbf16>, vector<16x32xf32> -> vector<16x32xf32>
    %c0_18 = arith.constant 0 : index
    %c0_19 = arith.constant 0 : index
    %68 = vector.load %arg5[%c0_18, %c0_19] : memref<1x32xf32, #tpu.memory_space<vmem>>, vector<1x32xf32>
    %69 = vector.broadcast %68 : vector<1x32xf32> to vector<16x32xf32>
    %70 = arith.addf %67, %69 : vector<16x32xf32>
    %71 = arith.addf %1, %70 : vector<16x32xf32>
    %c0_20 = arith.constant 0 : index
    %c0_21 = arith.constant 0 : index
    %72 = vector.load %arg10[%c0_20, %c0_21] : memref<1x32xf32, #tpu.memory_space<vmem>>, vector<1x32xf32>
    %c0_22 = arith.constant 0 : index
    %c0_23 = arith.constant 0 : index
    %73 = vector.load %arg11[%c0_22, %c0_23] : memref<1x32xf32, #tpu.memory_space<vmem>>, vector<1x32xf32>
    %cst_24 = arith.constant dense<0.000000e+00> : vector<16xf32>
    %74 = vector.multi_reduction <add>, %71, %cst_24 [1] : vector<16x32xf32> to vector<16xf32>
    %75 = vector.shape_cast %74 : vector<16xf32> to vector<16x1xf32>
    %cst_25 = arith.constant 3.200000e+01 : f32
    %76 = vector.broadcast %cst_25 : f32 to vector<16x1xf32>
    %77 = arith.divf %75, %76 : vector<16x1xf32>
    %78 = vector.broadcast %77 : vector<16x1xf32> to vector<16x32xf32>
    %79 = arith.subf %71, %78 : vector<16x32xf32>
    %80 = arith.mulf %79, %79 : vector<16x32xf32>
    %cst_26 = arith.constant dense<0.000000e+00> : vector<16xf32>
    %81 = vector.multi_reduction <add>, %80, %cst_26 [1] : vector<16x32xf32> to vector<16xf32>
    %82 = vector.shape_cast %81 : vector<16xf32> to vector<16x1xf32>
    %cst_27 = arith.constant 3.200000e+01 : f32
    %83 = vector.broadcast %cst_27 : f32 to vector<16x1xf32>
    %84 = arith.divf %82, %83 : vector<16x1xf32>
    %cst_28 = arith.constant 9.99999974E-6 : f32
    %85 = vector.broadcast %cst_28 : f32 to vector<16x1xf32>
    %86 = arith.addf %84, %85 : vector<16x1xf32>
    %87 = math.rsqrt %86 : vector<16x1xf32>
    %88 = vector.broadcast %87 : vector<16x1xf32> to vector<16x32xf32>
    %89 = arith.mulf %79, %88 : vector<16x32xf32>
    %90 = vector.broadcast %72 : vector<1x32xf32> to vector<16x32xf32>
    %91 = arith.mulf %89, %90 : vector<16x32xf32>
    %92 = vector.broadcast %73 : vector<1x32xf32> to vector<16x32xf32>
    %93 = arith.addf %91, %92 : vector<16x32xf32>
    %94 = arith.truncf %93 : vector<16x32xf32> to vector<16x32xbf16>
    %c0_29 = arith.constant 0 : index
    %c0_30 = arith.constant 0 : index
    %95 = vector.load %arg6[%c0_29, %c0_30] : memref<32x64xbf16, #tpu.memory_space<vmem>>, vector<32x64xbf16>
    %cst_31 = arith.constant dense<0.000000e+00> : vector<16x64xf32>
    %96 = tpu.matmul %94, %95, %cst_31 {dimension_numbers = #tpu.dot_dimension_numbers<[1], [0], [0], [1], [0, 0, 1, 1], [], []>} : vector<16x32xbf16>, vector<32x64xbf16>, vector<16x64xf32> -> vector<16x64xf32>
    %c0_32 = arith.constant 0 : index
    %c0_33 = arith.constant 0 : index
    %97 = vector.load %arg7[%c0_32, %c0_33] : memref<1x64xf32, #tpu.memory_space<vmem>>, vector<1x64xf32>
    %98 = vector.broadcast %97 : vector<1x64xf32> to vector<16x64xf32>
    %99 = arith.addf %96, %98 : vector<16x64xf32>
    %cst_34 = arith.constant 0.000000e+00 : f32
    %100 = vector.broadcast %cst_34 : f32 to vector<16x64xf32>
    %101 = arith.maximumf %99, %100 : vector<16x64xf32>
    %102 = arith.truncf %101 : vector<16x64xf32> to vector<16x64xbf16>
    %c0_35 = arith.constant 0 : index
    %c0_36 = arith.constant 0 : index
    %103 = vector.load %arg8[%c0_35, %c0_36] : memref<64x32xbf16, #tpu.memory_space<vmem>>, vector<64x32xbf16>
    %cst_37 = arith.constant dense<0.000000e+00> : vector<16x32xf32>
    %104 = tpu.matmul %102, %103, %cst_37 {dimension_numbers = #tpu.dot_dimension_numbers<[1], [0], [0], [1], [0, 0, 1, 1], [], []>} : vector<16x64xbf16>, vector<64x32xbf16>, vector<16x32xf32> -> vector<16x32xf32>
    %c0_38 = arith.constant 0 : index
    %c0_39 = arith.constant 0 : index
    %105 = vector.load %arg9[%c0_38, %c0_39] : memref<1x32xf32, #tpu.memory_space<vmem>>, vector<1x32xf32>
    %106 = vector.broadcast %105 : vector<1x32xf32> to vector<16x32xf32>
    %107 = arith.addf %104, %106 : vector<16x32xf32>
    %108 = arith.addf %93, %107 : vector<16x32xf32>
    %c0_40 = arith.constant 0 : index
    %c0_41 = arith.constant 0 : index
    %109 = vector.load %arg12[%c0_40, %c0_41] : memref<1x32xf32, #tpu.memory_space<vmem>>, vector<1x32xf32>
    %c0_42 = arith.constant 0 : index
    %c0_43 = arith.constant 0 : index
    %110 = vector.load %arg13[%c0_42, %c0_43] : memref<1x32xf32, #tpu.memory_space<vmem>>, vector<1x32xf32>
    %cst_44 = arith.constant dense<0.000000e+00> : vector<16xf32>
    %111 = vector.multi_reduction <add>, %108, %cst_44 [1] : vector<16x32xf32> to vector<16xf32>
    %112 = vector.shape_cast %111 : vector<16xf32> to vector<16x1xf32>
    %cst_45 = arith.constant 3.200000e+01 : f32
    %113 = vector.broadcast %cst_45 : f32 to vector<16x1xf32>
    %114 = arith.divf %112, %113 : vector<16x1xf32>
    %115 = vector.broadcast %114 : vector<16x1xf32> to vector<16x32xf32>
    %116 = arith.subf %108, %115 : vector<16x32xf32>
    %117 = arith.mulf %116, %116 : vector<16x32xf32>
    %cst_46 = arith.constant dense<0.000000e+00> : vector<16xf32>
    %118 = vector.multi_reduction <add>, %117, %cst_46 [1] : vector<16x32xf32> to vector<16xf32>
    %119 = vector.shape_cast %118 : vector<16xf32> to vector<16x1xf32>
    %cst_47 = arith.constant 3.200000e+01 : f32
    %120 = vector.broadcast %cst_47 : f32 to vector<16x1xf32>
    %121 = arith.divf %119, %120 : vector<16x1xf32>
    %cst_48 = arith.constant 9.99999974E-6 : f32
    %122 = vector.broadcast %cst_48 : f32 to vector<16x1xf32>
    %123 = arith.addf %121, %122 : vector<16x1xf32>
    %124 = math.rsqrt %123 : vector<16x1xf32>
    %125 = vector.broadcast %124 : vector<16x1xf32> to vector<16x32xf32>
    %126 = arith.mulf %116, %125 : vector<16x32xf32>
    %127 = vector.broadcast %109 : vector<1x32xf32> to vector<16x32xf32>
    %128 = arith.mulf %126, %127 : vector<16x32xf32>
    %129 = vector.broadcast %110 : vector<1x32xf32> to vector<16x32xf32>
    %130 = arith.addf %128, %129 : vector<16x32xf32>
    %c0_49 = arith.constant 0 : index
    %c0_50 = arith.constant 0 : index
    %c0_51 = arith.constant 0 : index
    %131 = vector.load %arg16[%c0_49, %c0_50, %c0_51] : memref<1x16x32xf32, #tpu.memory_space<vmem>>, vector<1x16x32xf32>
    %132 = vector.shape_cast %131 : vector<1x16x32xf32> to vector<16x32xf32>
    %133 = vector.shape_cast %130 : vector<16x32xf32> to vector<1x16x32xf32>
    tpu.vector_store %arg16[%c0_49, %c0_50, %c0_51], %133 {strides = array<i32>} : memref<1x16x32xf32, #tpu.memory_space<vmem>>, vector<1x16x32xf32>,
    return
  }
  func.func @transform_0(%arg0: i32) -> (i32, i32, i32) {
    %c0_i32 = arith.constant 0 : i32
    %c0_i32_0 = arith.constant 0 : i32
    %c0_i32_1 = arith.constant 0 : i32
    return %arg0, %c0_i32, %c0_i32_0 : i32, i32, i32
  }
  func.func @transform_1(%arg0: i32) -> (i32, i32) {
    %c0_i32 = arith.constant 0 : i32
    %c0_i32_0 = arith.constant 0 : i32
    %c0_i32_1 = arith.constant 0 : i32
    return %c0_i32, %c0_i32_0 : i32, i32
  }
  func.func @transform_2(%arg0: i32) -> (i32, i32) {
    %c0_i32 = arith.constant 0 : i32
    %c0_i32_0 = arith.constant 0 : i32
    %c0_i32_1 = arith.constant 0 : i32
    return %c0_i32, %c0_i32_0 : i32, i32
  }
  func.func @transform_3(%arg0: i32) -> (i32, i32) {
    %c0_i32 = arith.constant 0 : i32
    %c0_i32_0 = arith.constant 0 : i32
    %c0_i32_1 = arith.constant 0 : i32
    return %c0_i32, %c0_i32_0 : i32, i32
  }
  func.func @transform_4(%arg0: i32) -> (i32, i32) {
    %c0_i32 = arith.constant 0 : i32
    %c0_i32_0 = arith.constant 0 : i32
    %c0_i32_1 = arith.constant 0 : i32
    return %c0_i32, %c0_i32_0 : i32, i32
  }
  func.func @transform_5(%arg0: i32) -> (i32, i32) {
    %c0_i32 = arith.constant 0 : i32
    %c0_i32_0 = arith.constant 0 : i32
    %c0_i32_1 = arith.constant 0 : i32
    return %c0_i32, %c0_i32_0 : i32, i32
  }
  func.func @transform_6(%arg0: i32) -> (i32, i32) {
    %c0_i32 = arith.constant 0 : i32
    %c0_i32_0 = arith.constant 0 : i32
    %c0_i32_1 = arith.constant 0 : i32
    return %c0_i32, %c0_i32_0 : i32, i32
  }
  func.func @transform_7(%arg0: i32) -> (i32, i32) {
    %c0_i32 = arith.constant 0 : i32
    %c0_i32_0 = arith.constant 0 : i32
    %c0_i32_1 = arith.constant 0 : i32
    return %c0_i32, %c0_i32_0 : i32, i32
  }
  func.func @transform_8(%arg0: i32) -> (i32, i32) {
    %c0_i32 = arith.constant 0 : i32
    %c0_i32_0 = arith.constant 0 : i32
    %c0_i32_1 = arith.constant 0 : i32
    return %c0_i32, %c0_i32_0 : i32, i32
  }
  func.func @transform_9(%arg0: i32) -> (i32, i32) {
    %c0_i32 = arith.constant 0 : i32
    %c0_i32_0 = arith.constant 0 : i32
    %c0_i32_1 = arith.constant 0 : i32
    return %c0_i32, %c0_i32_0 : i32, i32
  }
  func.func @transform_10(%arg0: i32) -> (i32, i32) {
    %c0_i32 = arith.constant 0 : i32
    %c0_i32_0 = arith.constant 0 : i32
    %c0_i32_1 = arith.constant 0 : i32
    return %c0_i32, %c0_i32_0 : i32, i32
  }
  func.func @transform_11(%arg0: i32) -> (i32, i32) {
    %c0_i32 = arith.constant 0 : i32
    %c0_i32_0 = arith.constant 0 : i32
    %c0_i32_1 = arith.constant 0 : i32
    return %c0_i32, %c0_i32_0 : i32, i32
  }
  func.func @transform_12(%arg0: i32) -> (i32, i32) {
    %c0_i32 = arith.constant 0 : i32
    %c0_i32_0 = arith.constant 0 : i32
    %c0_i32_1 = arith.constant 0 : i32
    return %c0_i32, %c0_i32_0 : i32, i32
  }
  func.func @transform_13(%arg0: i32) -> (i32, i32) {
    %c0_i32 = arith.constant 0 : i32
    %c0_i32_0 = arith.constant 0 : i32
    %c0_i32_1 = arith.constant 0 : i32
    return %c0_i32, %c0_i32_0 : i32, i32
  }
  func.func @transform_14(%arg0: i32) -> (i32, i32) {
    %c0_i32 = arith.constant 0 : i32
    %c0_i32_0 = arith.constant 0 : i32
    %c0_i32_1 = arith.constant 0 : i32
    return %c0_i32, %c0_i32_0 : i32, i32
  }
  func.func @transform_15(%arg0: i32) -> (i32, i32, i32) {
    %c0_i32 = arith.constant 0 : i32
    %c0_i32_0 = arith.constant 0 : i32
    %c0_i32_1 = arith.constant 0 : i32
    return %arg0, %c0_i32, %c0_i32_0 : i32, i32, i32
  }
  func.func @transform_16(%arg0: i32) -> (i32, i32, i32, i32) {
    %c0_i32 = arith.constant 0 : i32
    %c0_i32_0 = arith.constant 0 : i32
    %c0_i32_1 = arith.constant 0 : i32
    %c0_i32_2 = arith.constant 0 : i32
    return %arg0, %c0_i32, %c0_i32_0, %c0_i32_1 : i32, i32, i32, i32
  }
}

module attributes {stable_mosaic.version = 11 : i64} {
  func.func @_conv_stats_kernel(%arg0: i32, %arg1: memref<1x16x32xf32, #tpu.memory_space<vmem>>, %arg2: memref<3x32x32xbf16, #tpu.memory_space<vmem>>, %arg3: memref<1x32xf32, #tpu.memory_space<vmem>>, %arg4: memref<1x18x32xf32, #tpu.memory_space<vmem>>, %arg5: memref<1x2x32xf32, #tpu.memory_space<vmem>>) attributes {dimension_semantics = [#tpu.dimension_semantics<parallel>], iteration_bounds = array<i64: 2>, scalar_prefetch = 0 : i64, scratch_operands = 0 : i64, tpu.core_type = #tpu.core_type<tc>, window_params = [{transform_indices = @transform_0, window_bounds = array<i64: 1, 16, 32>}, {pipeline_mode = #tpu.pipeline_mode<synchronous>, transform_indices = @transform_1, window_bounds = array<i64: 3, 32, 32>}, {pipeline_mode = #tpu.pipeline_mode<synchronous>, transform_indices = @transform_2, window_bounds = array<i64: 1, 32>}, {transform_indices = @transform_3, window_bounds = array<i64: 1, 18, 32>}, {transform_indices = @transform_4, window_bounds = array<i64: 1, 2, 32>}]} {
    %c0 = arith.constant 0 : index
    %c0_0 = arith.constant 0 : index
    %c0_1 = arith.constant 0 : index
    %0 = vector.load %arg1[%c0, %c0_0, %c0_1] : memref<1x16x32xf32, #tpu.memory_space<vmem>>, vector<1x16x32xf32>
    %1 = vector.shape_cast %0 : vector<1x16x32xf32> to vector<16x32xf32>
    %2 = arith.truncf %1 : vector<16x32xf32> to vector<16x32xbf16>
    %3 = vector.extract_strided_slice %2 {offsets = [14, 0], sizes = [2, 32], strides = [1, 1]} : vector<16x32xbf16> to vector<2x32xbf16>
    %4 = vector.extract_strided_slice %2 {offsets = [0, 0], sizes = [2, 32], strides = [1, 1]} : vector<16x32xbf16> to vector<2x32xbf16>
    %5 = tpu.concatenate %3, %2, %4 in 0 : vector<2x32xbf16>, vector<16x32xbf16>, vector<2x32xbf16> -> vector<20x32xbf16>
    %cst = arith.constant 0.000000e+00 : f32
    %6 = vector.broadcast %cst : f32 to vector<18x32xf32>
    %c0_2 = arith.constant 0 : index
    %c0_3 = arith.constant 0 : index
    %7 = vector.load %arg3[%c0_2, %c0_3] : memref<1x32xf32, #tpu.memory_space<vmem>>, vector<1x32xf32>
    %8 = vector.broadcast %7 : vector<1x32xf32> to vector<18x32xf32>
    %9 = arith.addf %6, %8 : vector<18x32xf32>
    %10 = vector.extract_strided_slice %5 {offsets = [0, 0], sizes = [18, 32], strides = [1, 1]} : vector<20x32xbf16> to vector<18x32xbf16>
    %c0_4 = arith.constant 0 : index
    %c0_5 = arith.constant 0 : index
    %c0_6 = arith.constant 0 : index
    %11 = vector.load %arg2[%c0_4, %c0_5, %c0_6] : memref<3x32x32xbf16, #tpu.memory_space<vmem>>, vector<1x32x32xbf16>
    %12 = vector.shape_cast %11 : vector<1x32x32xbf16> to vector<32x32xbf16>
    %cst_7 = arith.constant dense<0.000000e+00> : vector<18x32xf32>
    %13 = tpu.matmul %10, %12, %cst_7 {dimension_numbers = #tpu.dot_dimension_numbers<[1], [0], [0], [1], [0, 0, 1, 1], [], []>} : vector<18x32xbf16>, vector<32x32xbf16>, vector<18x32xf32> -> vector<18x32xf32>
    %14 = arith.addf %9, %13 : vector<18x32xf32>
    %15 = vector.extract_strided_slice %5 {offsets = [1, 0], sizes = [18, 32], strides = [1, 1]} : vector<20x32xbf16> to vector<18x32xbf16>
    %c1 = arith.constant 1 : index
    %c0_8 = arith.constant 0 : index
    %c0_9 = arith.constant 0 : index
    %16 = vector.load %arg2[%c1, %c0_8, %c0_9] : memref<3x32x32xbf16, #tpu.memory_space<vmem>>, vector<1x32x32xbf16>
    %17 = vector.shape_cast %16 : vector<1x32x32xbf16> to vector<32x32xbf16>
    %cst_10 = arith.constant dense<0.000000e+00> : vector<18x32xf32>
    %18 = tpu.matmul %15, %17, %cst_10 {dimension_numbers = #tpu.dot_dimension_numbers<[1], [0], [0], [1], [0, 0, 1, 1], [], []>} : vector<18x32xbf16>, vector<32x32xbf16>, vector<18x32xf32> -> vector<18x32xf32>
    %19 = arith.addf %14, %18 : vector<18x32xf32>
    %20 = vector.extract_strided_slice %5 {offsets = [2, 0], sizes = [18, 32], strides = [1, 1]} : vector<20x32xbf16> to vector<18x32xbf16>
    %c2 = arith.constant 2 : index
    %c0_11 = arith.constant 0 : index
    %c0_12 = arith.constant 0 : index
    %21 = vector.load %arg2[%c2, %c0_11, %c0_12] : memref<3x32x32xbf16, #tpu.memory_space<vmem>>, vector<1x32x32xbf16>
    %22 = vector.shape_cast %21 : vector<1x32x32xbf16> to vector<32x32xbf16>
    %cst_13 = arith.constant dense<0.000000e+00> : vector<18x32xf32>
    %23 = tpu.matmul %20, %22, %cst_13 {dimension_numbers = #tpu.dot_dimension_numbers<[1], [0], [0], [1], [0, 0, 1, 1], [], []>} : vector<18x32xbf16>, vector<32x32xbf16>, vector<18x32xf32> -> vector<18x32xf32>
    %24 = arith.addf %19, %23 : vector<18x32xf32>
    %c0_14 = arith.constant 0 : index
    %c0_15 = arith.constant 0 : index
    %c0_16 = arith.constant 0 : index
    %25 = vector.load %arg4[%c0_14, %c0_15, %c0_16] : memref<1x18x32xf32, #tpu.memory_space<vmem>>, vector<1x18x32xf32>
    %26 = vector.shape_cast %25 : vector<1x18x32xf32> to vector<18x32xf32>
    %27 = vector.shape_cast %24 : vector<18x32xf32> to vector<1x18x32xf32>
    tpu.vector_store %arg4[%c0_14, %c0_15, %c0_16], %27 {strides = array<i32>} : memref<1x18x32xf32, #tpu.memory_space<vmem>>, vector<1x18x32xf32>,
    %cst_17 = arith.constant dense<0.000000e+00> : vector<32xf32>
    %28 = vector.multi_reduction <add>, %24, %cst_17 [0] : vector<18x32xf32> to vector<32xf32>
    %29 = vector.shape_cast %28 : vector<32xf32> to vector<1x32xf32>
    %30 = arith.mulf %24, %24 : vector<18x32xf32>
    %cst_18 = arith.constant dense<0.000000e+00> : vector<32xf32>
    %31 = vector.multi_reduction <add>, %30, %cst_18 [0] : vector<18x32xf32> to vector<32xf32>
    %32 = vector.shape_cast %31 : vector<32xf32> to vector<1x32xf32>
    %33 = tpu.concatenate %29, %32 in 0 : vector<1x32xf32>, vector<1x32xf32> -> vector<2x32xf32>
    %c0_19 = arith.constant 0 : index
    %c0_20 = arith.constant 0 : index
    %c0_21 = arith.constant 0 : index
    %34 = vector.load %arg5[%c0_19, %c0_20, %c0_21] : memref<1x2x32xf32, #tpu.memory_space<vmem>>, vector<1x2x32xf32>
    %35 = vector.shape_cast %34 : vector<1x2x32xf32> to vector<2x32xf32>
    %36 = vector.shape_cast %33 : vector<2x32xf32> to vector<1x2x32xf32>
    tpu.vector_store %arg5[%c0_19, %c0_20, %c0_21], %36 {strides = array<i32>} : memref<1x2x32xf32, #tpu.memory_space<vmem>>, vector<1x2x32xf32>,
    return
  }
  func.func @transform_0(%arg0: i32) -> (i32, i32, i32) {
    %c0_i32 = arith.constant 0 : i32
    %c0_i32_0 = arith.constant 0 : i32
    %c0_i32_1 = arith.constant 0 : i32
    return %arg0, %c0_i32, %c0_i32_0 : i32, i32, i32
  }
  func.func @transform_1(%arg0: i32) -> (i32, i32, i32) {
    %c0_i32 = arith.constant 0 : i32
    %c0_i32_0 = arith.constant 0 : i32
    %c0_i32_1 = arith.constant 0 : i32
    %c0_i32_2 = arith.constant 0 : i32
    return %c0_i32, %c0_i32_0, %c0_i32_1 : i32, i32, i32
  }
  func.func @transform_2(%arg0: i32) -> (i32, i32) {
    %c0_i32 = arith.constant 0 : i32
    %c0_i32_0 = arith.constant 0 : i32
    %c0_i32_1 = arith.constant 0 : i32
    return %c0_i32, %c0_i32_0 : i32, i32
  }
  func.func @transform_3(%arg0: i32) -> (i32, i32, i32) {
    %c0_i32 = arith.constant 0 : i32
    %c0_i32_0 = arith.constant 0 : i32
    %c0_i32_1 = arith.constant 0 : i32
    return %arg0, %c0_i32, %c0_i32_0 : i32, i32, i32
  }
  func.func @transform_4(%arg0: i32) -> (i32, i32, i32) {
    %c0_i32 = arith.constant 0 : i32
    %c0_i32_0 = arith.constant 0 : i32
    %c0_i32_1 = arith.constant 0 : i32
    return %arg0, %c0_i32, %c0_i32_0 : i32, i32, i32
  }
}

module attributes {stable_mosaic.version = 11 : i64} {
  func.func @_bn_elu_pool_kernel(%arg0: i32, %arg1: memref<1x18x32xf32, #tpu.memory_space<vmem>>, %arg2: memref<1x32xf32, #tpu.memory_space<vmem>>, %arg3: memref<1x32xf32, #tpu.memory_space<vmem>>, %arg4: memref<1x32xf32, #tpu.memory_space<vmem>>, %arg5: memref<1x32xf32, #tpu.memory_space<vmem>>, %arg6: memref<1x9x32xf32, #tpu.memory_space<vmem>>, %arg7: memref<20x32xf32, #tpu.memory_space<vmem>>) attributes {dimension_semantics = [#tpu.dimension_semantics<parallel>], iteration_bounds = array<i64: 2>, scalar_prefetch = 0 : i64, scratch_operands = 1 : i64, tpu.core_type = #tpu.core_type<tc>, window_params = [{transform_indices = @transform_0, window_bounds = array<i64: 1, 18, 32>}, {pipeline_mode = #tpu.pipeline_mode<synchronous>, transform_indices = @transform_1, window_bounds = array<i64: 1, 32>}, {pipeline_mode = #tpu.pipeline_mode<synchronous>, transform_indices = @transform_2, window_bounds = array<i64: 1, 32>}, {pipeline_mode = #tpu.pipeline_mode<synchronous>, transform_indices = @transform_3, window_bounds = array<i64: 1, 32>}, {pipeline_mode = #tpu.pipeline_mode<synchronous>, transform_indices = @transform_4, window_bounds = array<i64: 1, 32>}, {transform_indices = @transform_5, window_bounds = array<i64: 1, 9, 32>}]} {
    %c0 = arith.constant 0 : index
    %c0_0 = arith.constant 0 : index
    %c0_1 = arith.constant 0 : index
    %0 = vector.load %arg1[%c0, %c0_0, %c0_1] : memref<1x18x32xf32, #tpu.memory_space<vmem>>, vector<1x18x32xf32>
    %1 = vector.shape_cast %0 : vector<1x18x32xf32> to vector<18x32xf32>
    %c0_2 = arith.constant 0 : index
    %c0_3 = arith.constant 0 : index
    %2 = vector.load %arg2[%c0_2, %c0_3] : memref<1x32xf32, #tpu.memory_space<vmem>>, vector<1x32xf32>
    %3 = vector.broadcast %2 : vector<1x32xf32> to vector<18x32xf32>
    %4 = arith.subf %1, %3 : vector<18x32xf32>
    %c0_4 = arith.constant 0 : index
    %c0_5 = arith.constant 0 : index
    %5 = vector.load %arg3[%c0_4, %c0_5] : memref<1x32xf32, #tpu.memory_space<vmem>>, vector<1x32xf32>
    %6 = vector.broadcast %5 : vector<1x32xf32> to vector<18x32xf32>
    %7 = arith.mulf %4, %6 : vector<18x32xf32>
    %c0_6 = arith.constant 0 : index
    %c0_7 = arith.constant 0 : index
    %8 = vector.load %arg4[%c0_6, %c0_7] : memref<1x32xf32, #tpu.memory_space<vmem>>, vector<1x32xf32>
    %9 = vector.broadcast %8 : vector<1x32xf32> to vector<18x32xf32>
    %10 = arith.mulf %7, %9 : vector<18x32xf32>
    %c0_8 = arith.constant 0 : index
    %c0_9 = arith.constant 0 : index
    %11 = vector.load %arg5[%c0_8, %c0_9] : memref<1x32xf32, #tpu.memory_space<vmem>>, vector<1x32xf32>
    %12 = vector.broadcast %11 : vector<1x32xf32> to vector<18x32xf32>
    %13 = arith.addf %10, %12 : vector<18x32xf32>
    %cst = arith.constant 0.000000e+00 : f32
    %14 = vector.broadcast %cst : f32 to vector<18x32xf32>
    %15 = arith.cmpf ogt, %13, %14 : vector<18x32xf32>
    %16 = math.exp %13 : vector<18x32xf32>
    %cst_10 = arith.constant 1.000000e+00 : f32
    %17 = vector.broadcast %cst_10 : f32 to vector<18x32xf32>
    %18 = arith.subf %16, %17 : vector<18x32xf32>
    %19 = arith.select %15, %13, %18 : vector<18x32xi1>, vector<18x32xf32>
    %cst_11 = arith.constant -1.000000e+30 : f32
    %20 = vector.broadcast %cst_11 : f32 to vector<1x32xf32>
    %c0_12 = arith.constant 0 : index
    %c0_13 = arith.constant 0 : index
    %21 = vector.load %arg7[%c0_12, %c0_13] : memref<20x32xf32, #tpu.memory_space<vmem>>, vector<1x32xf32>
    tpu.vector_store %arg7[%c0_12, %c0_13], %20 {strides = array<i32>} : memref<20x32xf32, #tpu.memory_space<vmem>>, vector<1x32xf32>,
    %c19 = arith.constant 19 : index
    %c0_14 = arith.constant 0 : index
    %22 = vector.load %arg7[%c19, %c0_14] : memref<20x32xf32, #tpu.memory_space<vmem>>, vector<1x32xf32>
    tpu.vector_store %arg7[%c19, %c0_14], %20 {strides = array<i32>} : memref<20x32xf32, #tpu.memory_space<vmem>>, vector<1x32xf32>,
    %c1 = arith.constant 1 : index
    %c0_15 = arith.constant 0 : index
    %23 = vector.load %arg7[%c1, %c0_15] : memref<20x32xf32, #tpu.memory_space<vmem>>, vector<18x32xf32>
    tpu.vector_store %arg7[%c1, %c0_15], %19 {strides = array<i32>} : memref<20x32xf32, #tpu.memory_space<vmem>>, vector<18x32xf32>,
    %c0_16 = arith.constant 0 : index
    %c0_17 = arith.constant 0 : index
    %24 = tpu.strided_load %arg7[%c0_16, %c0_17] {strides = array<i32: 2, 1>} : memref<20x32xf32, #tpu.memory_space<vmem>>, vector<9x32xf32>
    %c1_18 = arith.constant 1 : index
    %c0_19 = arith.constant 0 : index
    %25 = tpu.strided_load %arg7[%c1_18, %c0_19] {strides = array<i32: 2, 1>} : memref<20x32xf32, #tpu.memory_space<vmem>>, vector<9x32xf32>
    %c2 = arith.constant 2 : index
    %c0_20 = arith.constant 0 : index
    %26 = tpu.strided_load %arg7[%c2, %c0_20] {strides = array<i32: 2, 1>} : memref<20x32xf32, #tpu.memory_space<vmem>>, vector<9x32xf32>
    %27 = arith.maximumf %24, %25 : vector<9x32xf32>
    %28 = arith.maximumf %27, %26 : vector<9x32xf32>
    %c0_21 = arith.constant 0 : index
    %c0_22 = arith.constant 0 : index
    %c0_23 = arith.constant 0 : index
    %29 = vector.load %arg6[%c0_21, %c0_22, %c0_23] : memref<1x9x32xf32, #tpu.memory_space<vmem>>, vector<1x9x32xf32>
    %30 = vector.shape_cast %29 : vector<1x9x32xf32> to vector<9x32xf32>
    %31 = vector.shape_cast %28 : vector<9x32xf32> to vector<1x9x32xf32>
    tpu.vector_store %arg6[%c0_21, %c0_22, %c0_23], %31 {strides = array<i32>} : memref<1x9x32xf32, #tpu.memory_space<vmem>>, vector<1x9x32xf32>,
    return
  }
  func.func @transform_0(%arg0: i32) -> (i32, i32, i32) {
    %c0_i32 = arith.constant 0 : i32
    %c0_i32_0 = arith.constant 0 : i32
    %c0_i32_1 = arith.constant 0 : i32
    return %arg0, %c0_i32, %c0_i32_0 : i32, i32, i32
  }
  func.func @transform_1(%arg0: i32) -> (i32, i32) {
    %c0_i32 = arith.constant 0 : i32
    %c0_i32_0 = arith.constant 0 : i32
    %c0_i32_1 = arith.constant 0 : i32
    return %c0_i32, %c0_i32_0 : i32, i32
  }
  func.func @transform_2(%arg0: i32) -> (i32, i32) {
    %c0_i32 = arith.constant 0 : i32
    %c0_i32_0 = arith.constant 0 : i32
    %c0_i32_1 = arith.constant 0 : i32
    return %c0_i32, %c0_i32_0 : i32, i32
  }
  func.func @transform_3(%arg0: i32) -> (i32, i32) {
    %c0_i32 = arith.constant 0 : i32
    %c0_i32_0 = arith.constant 0 : i32
    %c0_i32_1 = arith.constant 0 : i32
    return %c0_i32, %c0_i32_0 : i32, i32
  }
  func.func @transform_4(%arg0: i32) -> (i32, i32) {
    %c0_i32 = arith.constant 0 : i32
    %c0_i32_0 = arith.constant 0 : i32
    %c0_i32_1 = arith.constant 0 : i32
    return %c0_i32, %c0_i32_0 : i32, i32
  }
  func.func @transform_5(%arg0: i32) -> (i32, i32, i32) {
    %c0_i32 = arith.constant 0 : i32
    %c0_i32_0 = arith.constant 0 : i32
    %c0_i32_1 = arith.constant 0 : i32
    return %arg0, %c0_i32, %c0_i32_0 : i32, i32, i32
  }
}

module attributes {stable_mosaic.version = 11 : i64} {
  func.func @_encoder_layer_kernel(%arg0: i32, %arg1: memref<1x9x32xf32, #tpu.memory_space<vmem>>, %arg2: memref<32x96xbf16, #tpu.memory_space<vmem>>, %arg3: memref<1x96xf32, #tpu.memory_space<vmem>>, %arg4: memref<32x32xbf16, #tpu.memory_space<vmem>>, %arg5: memref<1x32xf32, #tpu.memory_space<vmem>>, %arg6: memref<32x64xbf16, #tpu.memory_space<vmem>>, %arg7: memref<1x64xf32, #tpu.memory_space<vmem>>, %arg8: memref<64x32xbf16, #tpu.memory_space<vmem>>, %arg9: memref<1x32xf32, #tpu.memory_space<vmem>>, %arg10: memref<1x32xf32, #tpu.memory_space<vmem>>, %arg11: memref<1x32xf32, #tpu.memory_space<vmem>>, %arg12: memref<1x32xf32, #tpu.memory_space<vmem>>, %arg13: memref<1x32xf32, #tpu.memory_space<vmem>>, %arg14: memref<1x32xf32, #tpu.memory_space<vmem>>, %arg15: memref<1x32xf32, #tpu.memory_space<vmem>>, %arg16: memref<1x9x32xf32, #tpu.memory_space<vmem>>, %arg17: memref<1x4x9x9xf32, #tpu.memory_space<vmem>>) attributes {dimension_semantics = [#tpu.dimension_semantics<parallel>], iteration_bounds = array<i64: 2>, scalar_prefetch = 0 : i64, scratch_operands = 0 : i64, tpu.core_type = #tpu.core_type<tc>, window_params = [{transform_indices = @transform_0, window_bounds = array<i64: 1, 9, 32>}, {pipeline_mode = #tpu.pipeline_mode<synchronous>, transform_indices = @transform_1, window_bounds = array<i64: 32, 96>}, {pipeline_mode = #tpu.pipeline_mode<synchronous>, transform_indices = @transform_2, window_bounds = array<i64: 1, 96>}, {pipeline_mode = #tpu.pipeline_mode<synchronous>, transform_indices = @transform_3, window_bounds = array<i64: 32, 32>}, {pipeline_mode = #tpu.pipeline_mode<synchronous>, transform_indices = @transform_4, window_bounds = array<i64: 1, 32>}, {pipeline_mode = #tpu.pipeline_mode<synchronous>, transform_indices = @transform_5, window_bounds = array<i64: 32, 64>}, {pipeline_mode = #tpu.pipeline_mode<synchronous>, transform_indices = @transform_6, window_bounds = array<i64: 1, 64>}, {pipeline_mode = #tpu.pipeline_mode<synchronous>, transform_indices = @transform_7, window_bounds = array<i64: 64, 32>}, {pipeline_mode = #tpu.pipeline_mode<synchronous>, transform_indices = @transform_8, window_bounds = array<i64: 1, 32>}, {pipeline_mode = #tpu.pipeline_mode<synchronous>, transform_indices = @transform_9, window_bounds = array<i64: 1, 32>}, {pipeline_mode = #tpu.pipeline_mode<synchronous>, transform_indices = @transform_10, window_bounds = array<i64: 1, 32>}, {pipeline_mode = #tpu.pipeline_mode<synchronous>, transform_indices = @transform_11, window_bounds = array<i64: 1, 32>}, {pipeline_mode = #tpu.pipeline_mode<synchronous>, transform_indices = @transform_12, window_bounds = array<i64: 1, 32>}, {pipeline_mode = #tpu.pipeline_mode<synchronous>, transform_indices = @transform_13, window_bounds = array<i64: 1, 32>}, {pipeline_mode = #tpu.pipeline_mode<synchronous>, transform_indices = @transform_14, window_bounds = array<i64: 1, 32>}, {transform_indices = @transform_15, window_bounds = array<i64: 1, 9, 32>}, {transform_indices = @transform_16, window_bounds = array<i64: 1, 4, 9, 9>}]} {
    %c0 = arith.constant 0 : index
    %c0_0 = arith.constant 0 : index
    %c0_1 = arith.constant 0 : index
    %0 = vector.load %arg1[%c0, %c0_0, %c0_1] : memref<1x9x32xf32, #tpu.memory_space<vmem>>, vector<1x9x32xf32>
    %1 = vector.shape_cast %0 : vector<1x9x32xf32> to vector<9x32xf32>
    %2 = arith.truncf %1 : vector<9x32xf32> to vector<9x32xbf16>
    %c0_2 = arith.constant 0 : index
    %c0_3 = arith.constant 0 : index
    %3 = vector.load %arg2[%c0_2, %c0_3] : memref<32x96xbf16, #tpu.memory_space<vmem>>, vector<32x96xbf16>
    %cst = arith.constant dense<0.000000e+00> : vector<9x96xf32>
    %4 = tpu.matmul %2, %3, %cst {dimension_numbers = #tpu.dot_dimension_numbers<[1], [0], [0], [1], [0, 0, 1, 1], [], []>} : vector<9x32xbf16>, vector<32x96xbf16>, vector<9x96xf32> -> vector<9x96xf32>
    %c0_4 = arith.constant 0 : index
    %c0_5 = arith.constant 0 : index
    %5 = vector.load %arg3[%c0_4, %c0_5] : memref<1x96xf32, #tpu.memory_space<vmem>>, vector<1x96xf32>
    %6 = vector.broadcast %5 : vector<1x96xf32> to vector<9x96xf32>
    %7 = arith.addf %4, %6 : vector<9x96xf32>
    %8 = vector.extract_strided_slice %7 {offsets = [0, 0], sizes = [9, 8], strides = [1, 1]} : vector<9x96xf32> to vector<9x8xf32>
    %9 = vector.extract_strided_slice %7 {offsets = [0, 8], sizes = [9, 8], strides = [1, 1]} : vector<9x96xf32> to vector<9x8xf32>
    %10 = vector.extract_strided_slice %7 {offsets = [0, 16], sizes = [9, 8], strides = [1, 1]} : vector<9x96xf32> to vector<9x8xf32>
    %11 = vector.extract_strided_slice %7 {offsets = [0, 24], sizes = [9, 8], strides = [1, 1]} : vector<9x96xf32> to vector<9x8xf32>
    %12 = vector.shape_cast %8 : vector<9x8xf32> to vector<1x9x8xf32>
    %13 = vector.shape_cast %9 : vector<9x8xf32> to vector<1x9x8xf32>
    %14 = vector.shape_cast %10 : vector<9x8xf32> to vector<1x9x8xf32>
    %15 = vector.shape_cast %11 : vector<9x8xf32> to vector<1x9x8xf32>
    %16 = tpu.concatenate %12, %13, %14, %15 in 0 : vector<1x9x8xf32>, vector<1x9x8xf32>, vector<1x9x8xf32>, vector<1x9x8xf32> -> vector<4x9x8xf32>
    %17 = arith.truncf %16 : vector<4x9x8xf32> to vector<4x9x8xbf16>
    %18 = vector.extract_strided_slice %7 {offsets = [0, 32], sizes = [9, 8], strides = [1, 1]} : vector<9x96xf32> to vector<9x8xf32>
    %19 = vector.extract_strided_slice %7 {offsets = [0, 40], sizes = [9, 8], strides = [1, 1]} : vector<9x96xf32> to vector<9x8xf32>
    %20 = vector.extract_strided_slice %7 {offsets = [0, 48], sizes = [9, 8], strides = [1, 1]} : vector<9x96xf32> to vector<9x8xf32>
    %21 = vector.extract_strided_slice %7 {offsets = [0, 56], sizes = [9, 8], strides = [1, 1]} : vector<9x96xf32> to vector<9x8xf32>
    %22 = vector.shape_cast %18 : vector<9x8xf32> to vector<1x9x8xf32>
    %23 = vector.shape_cast %19 : vector<9x8xf32> to vector<1x9x8xf32>
    %24 = vector.shape_cast %20 : vector<9x8xf32> to vector<1x9x8xf32>
    %25 = vector.shape_cast %21 : vector<9x8xf32> to vector<1x9x8xf32>
    %26 = tpu.concatenate %22, %23, %24, %25 in 0 : vector<1x9x8xf32>, vector<1x9x8xf32>, vector<1x9x8xf32>, vector<1x9x8xf32> -> vector<4x9x8xf32>
    %27 = arith.truncf %26 : vector<4x9x8xf32> to vector<4x9x8xbf16>
    %28 = vector.extract_strided_slice %7 {offsets = [0, 64], sizes = [9, 8], strides = [1, 1]} : vector<9x96xf32> to vector<9x8xf32>
    %29 = vector.extract_strided_slice %7 {offsets = [0, 72], sizes = [9, 8], strides = [1, 1]} : vector<9x96xf32> to vector<9x8xf32>
    %30 = vector.extract_strided_slice %7 {offsets = [0, 80], sizes = [9, 8], strides = [1, 1]} : vector<9x96xf32> to vector<9x8xf32>
    %31 = vector.extract_strided_slice %7 {offsets = [0, 88], sizes = [9, 8], strides = [1, 1]} : vector<9x96xf32> to vector<9x8xf32>
    %32 = vector.shape_cast %28 : vector<9x8xf32> to vector<1x9x8xf32>
    %33 = vector.shape_cast %29 : vector<9x8xf32> to vector<1x9x8xf32>
    %34 = vector.shape_cast %30 : vector<9x8xf32> to vector<1x9x8xf32>
    %35 = vector.shape_cast %31 : vector<9x8xf32> to vector<1x9x8xf32>
    %36 = tpu.concatenate %32, %33, %34, %35 in 0 : vector<1x9x8xf32>, vector<1x9x8xf32>, vector<1x9x8xf32>, vector<1x9x8xf32> -> vector<4x9x8xf32>
    %37 = arith.truncf %36 : vector<4x9x8xf32> to vector<4x9x8xbf16>
    "tpu.trace_start"() <{level = 10 : i32, message = "hqd,hkd->hqk"}> : () -> ()
    %cst_6 = arith.constant dense<0.000000e+00> : vector<4x9x9xf32>
    %38 = tpu.matmul %17, %27, %cst_6 {dimension_numbers = #tpu.dot_dimension_numbers<[2], [2], [1], [1], [0, 0, 0, 1, 1, 1], [0], [0]>} : vector<4x9x8xbf16>, vector<4x9x8xbf16>, vector<4x9x9xf32> -> vector<4x9x9xf32>
    "tpu.trace_stop"() : () -> ()
    %cst_7 = arith.constant 0.353553385 : f32
    %39 = vector.broadcast %cst_7 : f32 to vector<4x9x9xf32>
    %40 = arith.mulf %38, %39 : vector<4x9x9xf32>
    %cst_8 = arith.constant dense<0xFF800000> : vector<4x9xf32>
    %41 = vector.multi_reduction <maximumf>, %40, %cst_8 [2] : vector<4x9x9xf32> to vector<4x9xf32>
    %42 = vector.shape_cast %41 : vector<4x9xf32> to vector<4x9x1xf32>
    %43 = vector.broadcast %42 : vector<4x9x1xf32> to vector<4x9x9xf32>
    %44 = arith.subf %40, %43 : vector<4x9x9xf32>
    %45 = math.exp %44 : vector<4x9x9xf32>
    %cst_9 = arith.constant dense<0.000000e+00> : vector<4x9xf32>
    %46 = vector.multi_reduction <add>, %45, %cst_9 [2] : vector<4x9x9xf32> to vector<4x9xf32>
    %47 = vector.shape_cast %46 : vector<4x9xf32> to vector<4x9x1xf32>
    %48 = tpu.reciprocal %47 {approx = true} : vector<4x9x1xf32> -> vector<4x9x1xf32>
    %49 = vector.broadcast %48 : vector<4x9x1xf32> to vector<4x9x9xf32>
    %50 = arith.mulf %45, %49 : vector<4x9x9xf32>
    %c0_10 = arith.constant 0 : index
    %c0_11 = arith.constant 0 : index
    %c0_12 = arith.constant 0 : index
    %c0_13 = arith.constant 0 : index
    %51 = vector.load %arg17[%c0_10, %c0_11, %c0_12, %c0_13] : memref<1x4x9x9xf32, #tpu.memory_space<vmem>>, vector<1x4x9x9xf32>
    %52 = vector.shape_cast %51 : vector<1x4x9x9xf32> to vector<4x9x9xf32>
    %53 = vector.shape_cast %50 : vector<4x9x9xf32> to vector<1x4x9x9xf32>
    tpu.vector_store %arg17[%c0_10, %c0_11, %c0_12, %c0_13], %53 {strides = array<i32>} : memref<1x4x9x9xf32, #tpu.memory_space<vmem>>, vector<1x4x9x9xf32>,
    %54 = arith.truncf %50 : vector<4x9x9xf32> to vector<4x9x9xbf16>
    "tpu.trace_start"() <{level = 10 : i32, message = "hqk,hkd->hqd"}> : () -> ()
    %cst_14 = arith.constant dense<0.000000e+00> : vector<4x9x8xf32>
    %55 = tpu.matmul %54, %37, %cst_14 {dimension_numbers = #tpu.dot_dimension_numbers<[2], [1], [1], [2], [0, 0, 0, 1, 1, 2], [0], [0]>} : vector<4x9x9xbf16>, vector<4x9x8xbf16>, vector<4x9x8xf32> -> vector<4x9x8xf32>
    "tpu.trace_stop"() : () -> ()
    %56 = vector.extract_strided_slice %55 {offsets = [0, 0, 0], sizes = [1, 9, 8], strides = [1, 1, 1]} : vector<4x9x8xf32> to vector<1x9x8xf32>
    %57 = vector.shape_cast %56 : vector<1x9x8xf32> to vector<9x8xf32>
    %58 = vector.extract_strided_slice %55 {offsets = [1, 0, 0], sizes = [1, 9, 8], strides = [1, 1, 1]} : vector<4x9x8xf32> to vector<1x9x8xf32>
    %59 = vector.shape_cast %58 : vector<1x9x8xf32> to vector<9x8xf32>
    %60 = vector.extract_strided_slice %55 {offsets = [2, 0, 0], sizes = [1, 9, 8], strides = [1, 1, 1]} : vector<4x9x8xf32> to vector<1x9x8xf32>
    %61 = vector.shape_cast %60 : vector<1x9x8xf32> to vector<9x8xf32>
    %62 = vector.extract_strided_slice %55 {offsets = [3, 0, 0], sizes = [1, 9, 8], strides = [1, 1, 1]} : vector<4x9x8xf32> to vector<1x9x8xf32>
    %63 = vector.shape_cast %62 : vector<1x9x8xf32> to vector<9x8xf32>
    %64 = tpu.concatenate %57, %59, %61, %63 in 1 : vector<9x8xf32>, vector<9x8xf32>, vector<9x8xf32>, vector<9x8xf32> -> vector<9x32xf32>
    %65 = arith.truncf %64 : vector<9x32xf32> to vector<9x32xbf16>
    %c0_15 = arith.constant 0 : index
    %c0_16 = arith.constant 0 : index
    %66 = vector.load %arg4[%c0_15, %c0_16] : memref<32x32xbf16, #tpu.memory_space<vmem>>, vector<32x32xbf16>
    %cst_17 = arith.constant dense<0.000000e+00> : vector<9x32xf32>
    %67 = tpu.matmul %65, %66, %cst_17 {dimension_numbers = #tpu.dot_dimension_numbers<[1], [0], [0], [1], [0, 0, 1, 1], [], []>} : vector<9x32xbf16>, vector<32x32xbf16>, vector<9x32xf32> -> vector<9x32xf32>
    %c0_18 = arith.constant 0 : index
    %c0_19 = arith.constant 0 : index
    %68 = vector.load %arg5[%c0_18, %c0_19] : memref<1x32xf32, #tpu.memory_space<vmem>>, vector<1x32xf32>
    %69 = vector.broadcast %68 : vector<1x32xf32> to vector<9x32xf32>
    %70 = arith.addf %67, %69 : vector<9x32xf32>
    %71 = arith.addf %1, %70 : vector<9x32xf32>
    %c0_20 = arith.constant 0 : index
    %c0_21 = arith.constant 0 : index
    %72 = vector.load %arg10[%c0_20, %c0_21] : memref<1x32xf32, #tpu.memory_space<vmem>>, vector<1x32xf32>
    %c0_22 = arith.constant 0 : index
    %c0_23 = arith.constant 0 : index
    %73 = vector.load %arg11[%c0_22, %c0_23] : memref<1x32xf32, #tpu.memory_space<vmem>>, vector<1x32xf32>
    %cst_24 = arith.constant dense<0.000000e+00> : vector<9xf32>
    %74 = vector.multi_reduction <add>, %71, %cst_24 [1] : vector<9x32xf32> to vector<9xf32>
    %75 = vector.shape_cast %74 : vector<9xf32> to vector<9x1xf32>
    %cst_25 = arith.constant 3.200000e+01 : f32
    %76 = vector.broadcast %cst_25 : f32 to vector<9x1xf32>
    %77 = arith.divf %75, %76 : vector<9x1xf32>
    %78 = vector.broadcast %77 : vector<9x1xf32> to vector<9x32xf32>
    %79 = arith.subf %71, %78 : vector<9x32xf32>
    %80 = arith.mulf %79, %79 : vector<9x32xf32>
    %cst_26 = arith.constant dense<0.000000e+00> : vector<9xf32>
    %81 = vector.multi_reduction <add>, %80, %cst_26 [1] : vector<9x32xf32> to vector<9xf32>
    %82 = vector.shape_cast %81 : vector<9xf32> to vector<9x1xf32>
    %cst_27 = arith.constant 3.200000e+01 : f32
    %83 = vector.broadcast %cst_27 : f32 to vector<9x1xf32>
    %84 = arith.divf %82, %83 : vector<9x1xf32>
    %cst_28 = arith.constant 9.99999974E-6 : f32
    %85 = vector.broadcast %cst_28 : f32 to vector<9x1xf32>
    %86 = arith.addf %84, %85 : vector<9x1xf32>
    %87 = math.rsqrt %86 : vector<9x1xf32>
    %88 = vector.broadcast %87 : vector<9x1xf32> to vector<9x32xf32>
    %89 = arith.mulf %79, %88 : vector<9x32xf32>
    %90 = vector.broadcast %72 : vector<1x32xf32> to vector<9x32xf32>
    %91 = arith.mulf %89, %90 : vector<9x32xf32>
    %92 = vector.broadcast %73 : vector<1x32xf32> to vector<9x32xf32>
    %93 = arith.addf %91, %92 : vector<9x32xf32>
    %94 = arith.truncf %93 : vector<9x32xf32> to vector<9x32xbf16>
    %c0_29 = arith.constant 0 : index
    %c0_30 = arith.constant 0 : index
    %95 = vector.load %arg6[%c0_29, %c0_30] : memref<32x64xbf16, #tpu.memory_space<vmem>>, vector<32x64xbf16>
    %cst_31 = arith.constant dense<0.000000e+00> : vector<9x64xf32>
    %96 = tpu.matmul %94, %95, %cst_31 {dimension_numbers = #tpu.dot_dimension_numbers<[1], [0], [0], [1], [0, 0, 1, 1], [], []>} : vector<9x32xbf16>, vector<32x64xbf16>, vector<9x64xf32> -> vector<9x64xf32>
    %c0_32 = arith.constant 0 : index
    %c0_33 = arith.constant 0 : index
    %97 = vector.load %arg7[%c0_32, %c0_33] : memref<1x64xf32, #tpu.memory_space<vmem>>, vector<1x64xf32>
    %98 = vector.broadcast %97 : vector<1x64xf32> to vector<9x64xf32>
    %99 = arith.addf %96, %98 : vector<9x64xf32>
    %cst_34 = arith.constant 0.000000e+00 : f32
    %100 = vector.broadcast %cst_34 : f32 to vector<9x64xf32>
    %101 = arith.maximumf %99, %100 : vector<9x64xf32>
    %102 = arith.truncf %101 : vector<9x64xf32> to vector<9x64xbf16>
    %c0_35 = arith.constant 0 : index
    %c0_36 = arith.constant 0 : index
    %103 = vector.load %arg8[%c0_35, %c0_36] : memref<64x32xbf16, #tpu.memory_space<vmem>>, vector<64x32xbf16>
    %cst_37 = arith.constant dense<0.000000e+00> : vector<9x32xf32>
    %104 = tpu.matmul %102, %103, %cst_37 {dimension_numbers = #tpu.dot_dimension_numbers<[1], [0], [0], [1], [0, 0, 1, 1], [], []>} : vector<9x64xbf16>, vector<64x32xbf16>, vector<9x32xf32> -> vector<9x32xf32>
    %c0_38 = arith.constant 0 : index
    %c0_39 = arith.constant 0 : index
    %105 = vector.load %arg9[%c0_38, %c0_39] : memref<1x32xf32, #tpu.memory_space<vmem>>, vector<1x32xf32>
    %106 = vector.broadcast %105 : vector<1x32xf32> to vector<9x32xf32>
    %107 = arith.addf %104, %106 : vector<9x32xf32>
    %108 = arith.addf %93, %107 : vector<9x32xf32>
    %c0_40 = arith.constant 0 : index
    %c0_41 = arith.constant 0 : index
    %109 = vector.load %arg12[%c0_40, %c0_41] : memref<1x32xf32, #tpu.memory_space<vmem>>, vector<1x32xf32>
    %c0_42 = arith.constant 0 : index
    %c0_43 = arith.constant 0 : index
    %110 = vector.load %arg13[%c0_42, %c0_43] : memref<1x32xf32, #tpu.memory_space<vmem>>, vector<1x32xf32>
    %cst_44 = arith.constant dense<0.000000e+00> : vector<9xf32>
    %111 = vector.multi_reduction <add>, %108, %cst_44 [1] : vector<9x32xf32> to vector<9xf32>
    %112 = vector.shape_cast %111 : vector<9xf32> to vector<9x1xf32>
    %cst_45 = arith.constant 3.200000e+01 : f32
    %113 = vector.broadcast %cst_45 : f32 to vector<9x1xf32>
    %114 = arith.divf %112, %113 : vector<9x1xf32>
    %115 = vector.broadcast %114 : vector<9x1xf32> to vector<9x32xf32>
    %116 = arith.subf %108, %115 : vector<9x32xf32>
    %117 = arith.mulf %116, %116 : vector<9x32xf32>
    %cst_46 = arith.constant dense<0.000000e+00> : vector<9xf32>
    %118 = vector.multi_reduction <add>, %117, %cst_46 [1] : vector<9x32xf32> to vector<9xf32>
    %119 = vector.shape_cast %118 : vector<9xf32> to vector<9x1xf32>
    %cst_47 = arith.constant 3.200000e+01 : f32
    %120 = vector.broadcast %cst_47 : f32 to vector<9x1xf32>
    %121 = arith.divf %119, %120 : vector<9x1xf32>
    %cst_48 = arith.constant 9.99999974E-6 : f32
    %122 = vector.broadcast %cst_48 : f32 to vector<9x1xf32>
    %123 = arith.addf %121, %122 : vector<9x1xf32>
    %124 = math.rsqrt %123 : vector<9x1xf32>
    %125 = vector.broadcast %124 : vector<9x1xf32> to vector<9x32xf32>
    %126 = arith.mulf %116, %125 : vector<9x32xf32>
    %127 = vector.broadcast %109 : vector<1x32xf32> to vector<9x32xf32>
    %128 = arith.mulf %126, %127 : vector<9x32xf32>
    %129 = vector.broadcast %110 : vector<1x32xf32> to vector<9x32xf32>
    %130 = arith.addf %128, %129 : vector<9x32xf32>
    %c0_49 = arith.constant 0 : index
    %c0_50 = arith.constant 0 : index
    %131 = vector.load %arg14[%c0_49, %c0_50] : memref<1x32xf32, #tpu.memory_space<vmem>>, vector<1x32xf32>
    %c0_51 = arith.constant 0 : index
    %c0_52 = arith.constant 0 : index
    %132 = vector.load %arg15[%c0_51, %c0_52] : memref<1x32xf32, #tpu.memory_space<vmem>>, vector<1x32xf32>
    %cst_53 = arith.constant dense<0.000000e+00> : vector<9xf32>
    %133 = vector.multi_reduction <add>, %130, %cst_53 [1] : vector<9x32xf32> to vector<9xf32>
    %134 = vector.shape_cast %133 : vector<9xf32> to vector<9x1xf32>
    %cst_54 = arith.constant 3.200000e+01 : f32
    %135 = vector.broadcast %cst_54 : f32 to vector<9x1xf32>
    %136 = arith.divf %134, %135 : vector<9x1xf32>
    %137 = vector.broadcast %136 : vector<9x1xf32> to vector<9x32xf32>
    %138 = arith.subf %130, %137 : vector<9x32xf32>
    %139 = arith.mulf %138, %138 : vector<9x32xf32>
    %cst_55 = arith.constant dense<0.000000e+00> : vector<9xf32>
    %140 = vector.multi_reduction <add>, %139, %cst_55 [1] : vector<9x32xf32> to vector<9xf32>
    %141 = vector.shape_cast %140 : vector<9xf32> to vector<9x1xf32>
    %cst_56 = arith.constant 3.200000e+01 : f32
    %142 = vector.broadcast %cst_56 : f32 to vector<9x1xf32>
    %143 = arith.divf %141, %142 : vector<9x1xf32>
    %cst_57 = arith.constant 9.99999974E-6 : f32
    %144 = vector.broadcast %cst_57 : f32 to vector<9x1xf32>
    %145 = arith.addf %143, %144 : vector<9x1xf32>
    %146 = math.rsqrt %145 : vector<9x1xf32>
    %147 = vector.broadcast %146 : vector<9x1xf32> to vector<9x32xf32>
    %148 = arith.mulf %138, %147 : vector<9x32xf32>
    %149 = vector.broadcast %131 : vector<1x32xf32> to vector<9x32xf32>
    %150 = arith.mulf %148, %149 : vector<9x32xf32>
    %151 = vector.broadcast %132 : vector<1x32xf32> to vector<9x32xf32>
    %152 = arith.addf %150, %151 : vector<9x32xf32>
    %c0_58 = arith.constant 0 : index
    %c0_59 = arith.constant 0 : index
    %c0_60 = arith.constant 0 : index
    %153 = vector.load %arg16[%c0_58, %c0_59, %c0_60] : memref<1x9x32xf32, #tpu.memory_space<vmem>>, vector<1x9x32xf32>
    %154 = vector.shape_cast %153 : vector<1x9x32xf32> to vector<9x32xf32>
    %155 = vector.shape_cast %152 : vector<9x32xf32> to vector<1x9x32xf32>
    tpu.vector_store %arg16[%c0_58, %c0_59, %c0_60], %155 {strides = array<i32>} : memref<1x9x32xf32, #tpu.memory_space<vmem>>, vector<1x9x32xf32>,
    return
  }
  func.func @transform_0(%arg0: i32) -> (i32, i32, i32) {
    %c0_i32 = arith.constant 0 : i32
    %c0_i32_0 = arith.constant 0 : i32
    %c0_i32_1 = arith.constant 0 : i32
    return %arg0, %c0_i32, %c0_i32_0 : i32, i32, i32
  }
  func.func @transform_1(%arg0: i32) -> (i32, i32) {
    %c0_i32 = arith.constant 0 : i32
    %c0_i32_0 = arith.constant 0 : i32
    %c0_i32_1 = arith.constant 0 : i32
    return %c0_i32, %c0_i32_0 : i32, i32
  }
  func.func @transform_2(%arg0: i32) -> (i32, i32) {
    %c0_i32 = arith.constant 0 : i32
    %c0_i32_0 = arith.constant 0 : i32
    %c0_i32_1 = arith.constant 0 : i32
    return %c0_i32, %c0_i32_0 : i32, i32
  }
  func.func @transform_3(%arg0: i32) -> (i32, i32) {
    %c0_i32 = arith.constant 0 : i32
    %c0_i32_0 = arith.constant 0 : i32
    %c0_i32_1 = arith.constant 0 : i32
    return %c0_i32, %c0_i32_0 : i32, i32
  }
  func.func @transform_4(%arg0: i32) -> (i32, i32) {
    %c0_i32 = arith.constant 0 : i32
    %c0_i32_0 = arith.constant 0 : i32
    %c0_i32_1 = arith.constant 0 : i32
    return %c0_i32, %c0_i32_0 : i32, i32
  }
  func.func @transform_5(%arg0: i32) -> (i32, i32) {
    %c0_i32 = arith.constant 0 : i32
    %c0_i32_0 = arith.constant 0 : i32
    %c0_i32_1 = arith.constant 0 : i32
    return %c0_i32, %c0_i32_0 : i32, i32
  }
  func.func @transform_6(%arg0: i32) -> (i32, i32) {
    %c0_i32 = arith.constant 0 : i32
    %c0_i32_0 = arith.constant 0 : i32
    %c0_i32_1 = arith.constant 0 : i32
    return %c0_i32, %c0_i32_0 : i32, i32
  }
  func.func @transform_7(%arg0: i32) -> (i32, i32) {
    %c0_i32 = arith.constant 0 : i32
    %c0_i32_0 = arith.constant 0 : i32
    %c0_i32_1 = arith.constant 0 : i32
    return %c0_i32, %c0_i32_0 : i32, i32
  }
  func.func @transform_8(%arg0: i32) -> (i32, i32) {
    %c0_i32 = arith.constant 0 : i32
    %c0_i32_0 = arith.constant 0 : i32
    %c0_i32_1 = arith.constant 0 : i32
    return %c0_i32, %c0_i32_0 : i32, i32
  }
  func.func @transform_9(%arg0: i32) -> (i32, i32) {
    %c0_i32 = arith.constant 0 : i32
    %c0_i32_0 = arith.constant 0 : i32
    %c0_i32_1 = arith.constant 0 : i32
    return %c0_i32, %c0_i32_0 : i32, i32
  }
  func.func @transform_10(%arg0: i32) -> (i32, i32) {
    %c0_i32 = arith.constant 0 : i32
    %c0_i32_0 = arith.constant 0 : i32
    %c0_i32_1 = arith.constant 0 : i32
    return %c0_i32, %c0_i32_0 : i32, i32
  }
  func.func @transform_11(%arg0: i32) -> (i32, i32) {
    %c0_i32 = arith.constant 0 : i32
    %c0_i32_0 = arith.constant 0 : i32
    %c0_i32_1 = arith.constant 0 : i32
    return %c0_i32, %c0_i32_0 : i32, i32
  }
  func.func @transform_12(%arg0: i32) -> (i32, i32) {
    %c0_i32 = arith.constant 0 : i32
    %c0_i32_0 = arith.constant 0 : i32
    %c0_i32_1 = arith.constant 0 : i32
    return %c0_i32, %c0_i32_0 : i32, i32
  }
  func.func @transform_13(%arg0: i32) -> (i32, i32) {
    %c0_i32 = arith.constant 0 : i32
    %c0_i32_0 = arith.constant 0 : i32
    %c0_i32_1 = arith.constant 0 : i32
    return %c0_i32, %c0_i32_0 : i32, i32
  }
  func.func @transform_14(%arg0: i32) -> (i32, i32) {
    %c0_i32 = arith.constant 0 : i32
    %c0_i32_0 = arith.constant 0 : i32
    %c0_i32_1 = arith.constant 0 : i32
    return %c0_i32, %c0_i32_0 : i32, i32
  }
  func.func @transform_15(%arg0: i32) -> (i32, i32, i32) {
    %c0_i32 = arith.constant 0 : i32
    %c0_i32_0 = arith.constant 0 : i32
    %c0_i32_1 = arith.constant 0 : i32
    return %arg0, %c0_i32, %c0_i32_0 : i32, i32, i32
  }
  func.func @transform_16(%arg0: i32) -> (i32, i32, i32, i32) {
    %c0_i32 = arith.constant 0 : i32
    %c0_i32_0 = arith.constant 0 : i32
    %c0_i32_1 = arith.constant 0 : i32
    %c0_i32_2 = arith.constant 0 : i32
    return %arg0, %c0_i32, %c0_i32_0, %c0_i32_1 : i32, i32, i32, i32
  }
}

</mosaic_0001>

<llo_original>
// kernel: _lambda_.6
$region0: #{_lambda_.6}
  #allocation0 [shape = 'u32[]', space=smem, size = 0x4, offset = 0x4, fixed_abs, tag = 'smem constant byte address 0x4 - core index']
  #allocation1 [shape = 'u32[72,128]{1,0:T(1,128)}', space=vmem, size = 0x9000, scoped, tag = 'internal scratch']
  #allocation2 [shape = 'f32[20,32]{1,0:T(8,128)}', space=vmem, size = 0x3000, scoped, tag = 'scratch operand']
  %s0 = inlined_call_operand.vmem [shape: f32[2,18,32], index: 0, kind: input, shape index: {}]
  %s1 = inlined_call_operand.vmem [shape: f32[1,32], index: 1, kind: input, shape index: {}]
  %s2 = inlined_call_operand.vmem [shape: f32[1,32], index: 2, kind: input, shape index: {}]
  %s3 = inlined_call_operand.vmem [shape: f32[1,32], index: 3, kind: input, shape index: {}]
  %s4 = inlined_call_operand.vmem [shape: f32[1,32], index: 4, kind: input, shape index: {}]
  %s5 = inlined_call_operand.vmem [shape: f32[2,9,32], index: 5, kind: output, shape index: {}]
  %s6 = sld [smem:[#allocation0]]
  $region53: #{_lambda_.6} parent=0
    _
  %s8 = ssub.s32 1, %s6
  %s9 = scalar_select 0, %s8, %s6
  loop: start=0, step=1, limit=4
  $region2: #{_lambda_.6} parent=0 // loop_pre_header
    _
  $region3: #{_lambda_.6} parent=0 // loop_header
    %s11 = sphi 0, %s15
    %p12 = scmp.ge.s32.totalorder %s11, 4
    %s21 = sphi 0, %s23
    %s24 = sphi 0, %s21
    %s25 = sphi 0, %s24
    %s41 = sphi 0, %s25
    %s45 = sphi 0, %s45
    %s47 = sphi 0, %s45
    %s48 = sphi 0, %s47
    %s62 = sphi 0, %s48
    %s66 = sphi 0, %s66
    %s68 = sphi 0, %s66
    %s69 = sphi 0, %s68
    %s83 = sphi 0, %s69
    %s87 = sphi 0, %s87
    %s89 = sphi 0, %s87
    %s90 = sphi 0, %s89
    %s104 = sphi 0, %s90
    %s108 = sphi 0, %s108
    %s110 = sphi 0, %s108
    %s111 = sphi 0, %s110
    %s125 = sphi 0, %s111
    %s131 = sphi 0, %s133
    %s134 = sphi 0, %s131
    %s135 = sphi 0, %s134
    %s151 = sphi 0, %s135
  $region4: #{_lambda_.6} parent=0 // loop_header_branch
    %14 = sbr.rel (%p12) target = $region8
  $region5: #{_lambda_.6} parent=0 // loop_body
    %s16 = ssub.s32 %s11, 1
    %s17 = ssub.s32 %s11, 2
    %s18 = sadd.s32 %s11, 1
    %s19 = ssub.s32 %s11, %s18
    %p20 = scmp.eq.s32.totalorder %s19, 0
    %s22 = sadd.s32 %s21, 1
    %s23 = scalar_select %p20, %s21, %s22
    %p26 = pneg %p20
    %p27 = scmp.eq.s32.totalorder %s11, 1
    %p28 = por %p26, %p27
    %p29 = scmp.ne.s32.totalorder %s21, %s24
    %p30 = scmp.eq.s32.totalorder %s11, 0
    %p31 = por %p29, %p30
    %p32 = scmp.ne.s32.totalorder %s21, %s24
    %p33 = scmp.eq.s32.totalorder %s16, 1
    %p34 = por %p32, %p33
    %p35 = scmp.ne.s32.totalorder %s24, %s25
    %p36 = scmp.eq.s32.totalorder %s16, 0
    %p37 = por %p35, %p36
    %p38 = scmp.ne.s32.totalorder %s24, %s25
    %p39 = scmp.eq.s32.totalorder %s17, 1
    %p40 = por %p38, %p39
    %p42 = scmp.ne.s32.totalorder %s25, %s41
    %p43 = scmp.eq.s32.totalorder %s17, 0
    %p44 = por %p42, %p43
    %s46 = sadd.s32 %s45, 1
    %p49 = scmp.eq.s32.totalorder %s11, 1
    %p50 = scmp.ne.s32.totalorder %s45, %s47
    %p51 = scmp.eq.s32.totalorder %s11, 0
    %p52 = por %p50, %p51
    %p53 = scmp.ne.s32.totalorder %s45, %s47
    %p54 = scmp.eq.s32.totalorder %s16, 1
    %p55 = por %p53, %p54
    %p56 = scmp.ne.s32.totalorder %s47, %s48
    %p57 = scmp.eq.s32.totalorder %s16, 0
    %p58 = por %p56, %p57
    %p59 = scmp.ne.s32.totalorder %s47, %s48
    %p60 = scmp.eq.s32.totalorder %s17, 1
    %p61 = por %p59, %p60
    %p63 = scmp.ne.s32.totalorder %s48, %s62
    %p64 = scmp.eq.s32.totalorder %s17, 0
    %p65 = por %p63, %p64
    %s67 = sadd.s32 %s66, 1
    %p70 = scmp.eq.s32.totalorder %s11, 1
    %p71 = scmp.ne.s32.totalorder %s66, %s68
    %p72 = scmp.eq.s32.totalorder %s11, 0
    %p73 = por %p71, %p72
    %p74 = scmp.ne.s32.totalorder %s66, %s68
    %p75 = scmp.eq.s32.totalorder %s16, 1
    %p76 = por %p74, %p75
    %p77 = scmp.ne.s32.totalorder %s68, %s69
    %p78 = scmp.eq.s32.totalorder %s16, 0
    %p79 = por %p77, %p78
    %p80 = scmp.ne.s32.totalorder %s68, %s69
    %p81 = scmp.eq.s32.totalorder %s17, 1
    %p82 = por %p80, %p81
    %p84 = scmp.ne.s32.totalorder %s69, %s83
    %p85 = scmp.eq.s32.totalorder %s17, 0
    %p86 = por %p84, %p85
    %s88 = sadd.s32 %s87, 1
    %p91 = scmp.eq.s32.totalorder %s11, 1
    %p92 = scmp.ne.s32.totalorder %s87, %s89
    %p93 = scmp.eq.s32.totalorder %s11, 0
    %p94 = por %p92, %p93
    %p95 = scmp.ne.s32.totalorder %s87, %s89
    %p96 = scmp.eq.s32.totalorder %s16, 1
    %p97 = por %p95, %p96
    %p98 = scmp.ne.s32.totalorder %s89, %s90
    %p99 = scmp.eq.s32.totalorder %s16, 0
    %p100 = por %p98, %p99
    %p101 = scmp.ne.s32.totalorder %s89, %s90
    %p102 = scmp.eq.s32.totalorder %s17, 1
    %p103 = por %p101, %p102
    %p105 = scmp.ne.s32.totalorder %s90, %s104
    %p106 = scmp.eq.s32.totalorder %s17, 0
    %p107 = por %p105, %p106
    %s109 = sadd.s32 %s108, 1
    %p112 = scmp.eq.s32.totalorder %s11, 1
    %p113 = scmp.ne.s32.totalorder %s108, %s110
    %p114 = scmp.eq.s32.totalorder %s11, 0
    %p115 = por %p113, %p114
    %p116 = scmp.ne.s32.totalorder %s108, %s110
    %p117 = scmp.eq.s32.totalorder %s16, 1
    %p118 = por %p116, %p117
    %p119 = scmp.ne.s32.totalorder %s110, %s111
    %p120 = scmp.eq.s32.totalorder %s16, 0
    %p121 = por %p119, %p120
    %p122 = scmp.ne.s32.totalorder %s110, %s111
    %p123 = scmp.eq.s32.totalorder %s17, 1
    %p124 = por %p122, %p123
    %p126 = scmp.ne.s32.totalorder %s111, %s125
    %p127 = scmp.eq.s32.totalorder %s17, 0
    %p128 = por %p126, %p127
    %s129 = ssub.s32 %s11, %s18
    %p130 = scmp.eq.s32.totalorder %s129, 0
    %s132 = sadd.s32 %s131, 1
    %s133 = scalar_select %p130, %s131, %s132
    %p136 = pneg %p130
    %p137 = scmp.eq.s32.totalorder %s11, 1
    %p138 = por %p136, %p137
    %p139 = scmp.ne.s32.totalorder %s131, %s134
    %p140 = scmp.eq.s32.totalorder %s11, 0
    %p141 = por %p139, %p140
    %p142 = scmp.ne.s32.totalorder %s131, %s134
    %p143 = scmp.eq.s32.totalorder %s16, 1
    %p144 = por %p142, %p143
    %p145 = scmp.ne.s32.totalorder %s134, %s135
    %p146 = scmp.eq.s32.totalorder %s16, 0
    %p147 = por %p145, %p146
    %p148 = scmp.ne.s32.totalorder %s134, %s135
    %p149 = scmp.eq.s32.totalorder %s17, 1
    %p150 = por %p148, %p149
    %p152 = scmp.ne.s32.totalorder %s135, %s151
    %p153 = scmp.eq.s32.totalorder %s17, 0
    %p154 = por %p152, %p153
    %p155 = scmp.le.s32.totalorder 1, %s11
    %p156 = scmp.lt.s32.totalorder %s11, 3
    %p157 = pnand %p155, %p156
    %p158 = pneg %p157
    // Predicated region
    $region9: #{_lambda_.6} parent=5 // pred_check
      _
    $region10: #{_lambda_.6} parent=5 // pred_check_branch
      %160 = sbr.rel (%p157) target = $region12
    $region11: #{_lambda_.6} parent=5 // pred_region
      %s161 = ssub.s32 %s11, 1
      // Predicated region
      $region13: #{_lambda_.6} parent=11 // pred_check
        %p162 = pneg %p58
      $region14: #{_lambda_.6} parent=11 // pred_check_branch
        %164 = sbr.rel (%p162) target = $region16
      $region15: #{_lambda_.6} parent=11 // pred_region
        _
      $region16: #{_lambda_.6} parent=11 // pred_fallthru
        _
      // Predicated region
      $region17: #{_lambda_.6} parent=11 // pred_check
        %p165 = pneg %p79
      $region18: #{_lambda_.6} parent=11 // pred_check_branch
        %167 = sbr.rel (%p165) target = $region20
      $region19: #{_lambda_.6} parent=11 // pred_region
        _
      $region20: #{_lambda_.6} parent=11 // pred_fallthru
        _
      // Predicated region
      $region21: #{_lambda_.6} parent=11 // pred_check
        %p168 = pneg %p100
      $region22: #{_lambda_.6} parent=11 // pred_check_branch
        %170 = sbr.rel (%p168) target = $region24
      $region23: #{_lambda_.6} parent=11 // pred_region
        _
      $region24: #{_lambda_.6} parent=11 // pred_fallthru
        _
      // Predicated region
      $region25: #{_lambda_.6} parent=11 // pred_check
        %p171 = pneg %p121
      $region26: #{_lambda_.6} parent=11 // pred_check_branch
        %173 = sbr.rel (%p171) target = $region28
      $region27: #{_lambda_.6} parent=11 // pred_region
        _
      $region28: #{_lambda_.6} parent=11 // pred_fallthru
        _
    $region12: #{_lambda_.6} parent=5 // pred_fallthru
      _
    %p174 = scmp.lt.s32.totalorder %s11, 2
    // Predicated region
    $region29: #{_lambda_.6} parent=5 // pred_check
      %p175 = pneg %p174
    $region30: #{_lambda_.6} parent=5 // pred_check_branch
      %177 = sbr.rel (%p175) target = $region32
    $region31: #{_lambda_.6} parent=5 // pred_region
      // Predicated region
      $region33: #{_lambda_.6} parent=31 // pred_check
        %p178 = pneg %p31
      $region34: #{_lambda_.6} parent=31 // pred_check_branch
        %180 = sbr.rel (%p178) target = $region36
      $region35: #{_lambda_.6} parent=31 // pred_region
        %p181 = scmp.lt.s32.totalorder %s11, 1
        %s182 = scalar_select %p181, %s11, 1
        %s183 = smul.addr %s182, 3
        %s184 = smul.addr %s183, 8
        %s185 = scalar_lea.vmem %s0, %s184
      $region36: #{_lambda_.6} parent=31 // pred_fallthru
        _
    $region32: #{_lambda_.6} parent=5 // pred_fallthru
      _
    %p186 = scmp.le.s32.totalorder 1, %s11
    %p187 = scmp.lt.s32.totalorder %s11, 3
    %p188 = pnand %p186, %p187
    %p189 = pneg %p188
    // Predicated region
    $region37: #{_lambda_.6} parent=5 // pred_check
      _
    $region38: #{_lambda_.6} parent=5 // pred_check_branch
      %191 = sbr.rel (%p188) target = $region40
    $region39: #{_lambda_.6} parent=5 // pred_region
      %s192 = ssub.s32 %s11, 1
      %p193 = scmp.lt.s32.totalorder %s16, 1
      %s194 = scalar_select %p193, %s16, 1
      %s195 = smul.addr %s194, 3
      %s196 = smul.addr %s195, 8
      %s197 = scalar_lea.vmem %s0, %s196
      %p198 = pneg %p37
      %p199 = pneg %p34
      %p200 = pneg %p58
      %p201 = pneg %p55
      %p202 = pneg %p79
      %p203 = pneg %p76
      %p204 = pneg %p100
      %p205 = pneg %p97
      %p206 = pneg %p121
      %p207 = pneg %p118
      %p208 = pneg %p147
      %p209 = pneg %p144
      %p210 = scmp.lt.s32.totalorder %s16, 1
      %s211 = scalar_select %p210, %s16, 1
      %s212 = smul.addr %s211, 2
      %s213 = smul.addr %s212, 8
      %s214 = scalar_lea.vmem %s5, %s213
      %p215 = scmp.lt.s32.totalorder %s16, 1
      %s216 = scalar_select %p215, %s16, 1
      %s217 = smul.addr %s216, 3
      %s218 = smul.addr %s217, 8
      %s219 = scalar_lea.vmem %s0, %s218
      %p220 = scmp.lt.s32.totalorder %s16, 1
      %s221 = scalar_select %p220, %s16, 1
      %s222 = smul.addr %s221, 2
      %s223 = smul.addr %s222, 8
      %s224 = scalar_lea.vmem %s5, %s223
      %v225 = vld [vmem:[%s219] sm:$0xff]
      %v226 = vld [vmem:[%s219 + $0x8] sm:$0xff]
      %v227 = vld [vmem:[%s219 + $0x10] sm:$0x3]
      %v228 = vld [vmem:[%s1] sm:$0x1]
      %v230 = vperm.slane %v228, 0
      %v232 = vsub.f32 %v225, %v230
      %v233 = vsub.f32 %v226, %v230
      %v234 = vsub.f32 %v227, %v230
      %v235 = vld [vmem:[%s2] sm:$0x1]
      %v237 = vperm.slane %v235, 0
      %v239 = vmul.f32 %v232, %v237
      %v240 = vmul.f32 %v233, %v237
      %v241 = vmul.f32 %v234, %v237
      %v242 = vld [vmem:[%s3] sm:$0x1]
      %v244 = vperm.slane %v242, 0
      %v246 = vmul.f32 %v239, %v244
      %v247 = vmul.f32 %v240, %v244
      %v248 = vmul.f32 %v241, %v244
      %v249 = vld [vmem:[%s4] sm:$0x1]
      %v251 = vperm.slane %v249, 0
      %v253 = vadd.f32 %v246, %v251
      %v254 = vadd.f32 %v247, %v251
      %v255 = vadd.f32 %v248, %v251
      %vm256 = vcmp.gt.f32.partialorder %v253, 0.0
      %vm257 = vcmp.gt.f32.partialorder %v254, 0.0
      %vm258 = vcmp.gt.f32.partialorder %v255, 0.0
      %v259 = vmul.f32 %v253, 1.442695
      %v260 = vpow.pop %v259
      %v261 = vmul.f32 %v254, 1.442695
      %v262 = vpow.pop %v261
      %v263 = vmul.f32 %v255, 1.442695
      %v264 = vpow.pop %v263
      %v265 = vsub.f32 %v260, 1.0
      %v266 = vsub.f32 %v262, 1.0
      %v267 = vsub.f32 %v264, 1.0
      %v268 = vsel %vm256, %v253, %v265
      %v269 = vsel %vm257, %v254, %v266
      %v270 = vsel %vm258, %v255, %v267
      %vm271 = vcmask 253952
      %272 = vst.msk [vmem:[#allocation2] sm:$0x1] %vm271, -1e+30
      %273 = vst.msk [vmem:[#allocation2 + $0x13] sm:$0x1] %vm271, -1e+30
      %vm274 = vcmask 261120
      %275 = vst.msk [vmem:[#allocation2 + $0x1] sm:$0xff] %vm274, %v268
      %276 = vst.msk [vmem:[#allocation2 + $0x9] sm:$0xff] %vm274, %v269
      %vm277 = vcmask 254976
      %278 = vst.msk [vmem:[#allocation2 + $0x11] sm:$0x3] %vm277, %v270
      %v279 = vld [vmem:[#allocation2] ss:$2 sm:$0xff]
      %s280 = scalar_lea.vmem [#allocation2], 16
      %v281 = vld [vmem:[%s280] ss:$2 sm:$0x1]
      %s282 = scalar_lea.vmem [#allocation2], 1
      %v283 = vld [vmem:[%s282] ss:$2 sm:$0xff]
      %s284 = scalar_lea.vmem [#allocation2], 17
      %v285 = vld [vmem:[%s284] ss:$2 sm:$0x1]
      %s286 = scalar_lea.vmem [#allocation2], 2
      %v287 = vld [vmem:[%s286] ss:$2 sm:$0xff]
      %s288 = scalar_lea.vmem [#allocation2], 18
      %v289 = vld [vmem:[%s288] ss:$2 sm:$0x1]
      %v290 = vmax.f32 %v279, %v283
      %v291 = vmax.f32 %v281, %v285
      %v292 = vmax.f32 %v290, %v287
      %v293 = vmax.f32 %v291, %v289
      %294 = vst.msk [vmem:[%s224] sm:$0xff] %vm274, %v292
      %295 = vst.msk [vmem:[%s224 + $0x8] sm:$0x1] %vm271, %v293
      %p296 = scmp.lt.s32.totalorder %s16, 1
      %s297 = scalar_select %p296, %s16, 1
      %s298 = smul.addr %s297, 2
      %s299 = smul.addr %s298, 8
      %s300 = scalar_lea.vmem %s5, %s299
      // Predicated region
      $region41: #{_lambda_.6} parent=39 // pred_check
        %p301 = pneg %p144
      $region42: #{_lambda_.6} parent=39 // pred_check_branch
        %303 = sbr.rel (%p301) target = $region44
      $region43: #{_lambda_.6} parent=39 // pred_region
        _
      $region44: #{_lambda_.6} parent=39 // pred_fallthru
        _
    $region40: #{_lambda_.6} parent=5 // pred_fallthru
      _
    %p304 = scmp.le.s32.totalorder 2, %s11
    // Predicated region
    $region45: #{_lambda_.6} parent=5 // pred_check
      %p305 = pneg %p304
    $region46: #{_lambda_.6} parent=5 // pred_check_branch
      %307 = sbr.rel (%p305) target = $region48
    $region47: #{_lambda_.6} parent=5 // pred_region
      %s308 = ssub.s32 %s11, 2
      // Predicated region
      $region49: #{_lambda_.6} parent=47 // pred_check
        %p309 = pneg %p150
      $region50: #{_lambda_.6} parent=47 // pred_check_branch
        %311 = sbr.rel (%p309) target = $region52
      $region51: #{_lambda_.6} parent=47 // pred_region
        %p312 = scmp.lt.s32.totalorder %s17, 1
        %s313 = scalar_select %p312, %s17, 1
        %s314 = smul.addr %s313, 2
        %s315 = smul.addr %s314, 8
        %s316 = scalar_lea.vmem %s5, %s315
      $region52: #{_lambda_.6} parent=47 // pred_fallthru
        _
    $region48: #{_lambda_.6} parent=5 // pred_fallthru
      _
  $region6: #{_lambda_.6} parent=0 // loop_footer
    %s15 = sadd.s32 1, %s11
  $region7: #{_lambda_.6} parent=0 // loop_footer_branch
    %10 = sbr.rel target = $region3
  $region8: #{_lambda_.6} parent=0 // loop_exit
    _

// kernel: _lambda_.5
$region0: #{_lambda_.5}
  #allocation0 [shape = 'u32[]', space=smem, size = 0x4, offset = 0x4, fixed_abs, tag = 'smem constant byte address 0x4 - core index']
  #allocation1 [shape = 'u32[72,128]{1,0:T(1,128)}', space=vmem, size = 0x9000, scoped, tag = 'internal scratch']
  %s0 = inlined_call_operand.vmem [shape: f32[2,16,32], index: 0, kind: input, shape index: {}]
  %s1 = inlined_call_operand.vmem [shape: bf16[3,32,32], index: 1, kind: input, shape index: {}]
  %s2 = inlined_call_operand.vmem [shape: f32[1,32], index: 2, kind: input, shape index: {}]
  %s3 = inlined_call_operand.vmem [shape: f32[2,18,32], index: 3, kind: output, shape index: {0}]
  %s4 = inlined_call_operand.vmem [shape: f32[2,2,32], index: 4, kind: output, shape index: {1}]
  %5 = xla_tuple %s3, %s4
  %s6 = sld [smem:[#allocation0]]
  $region53: #{_lambda_.5} parent=0
    _
  %s8 = ssub.s32 1, %s6
  %s9 = scalar_select 0, %s8, %s6
  loop: start=0, step=1, limit=4
  $region2: #{_lambda_.5} parent=0 // loop_pre_header
    _
  $region3: #{_lambda_.5} parent=0 // loop_header
    %s11 = sphi 0, %s15
    %p12 = scmp.ge.s32.totalorder %s11, 4
    %s21 = sphi 0, %s23
    %s24 = sphi 0, %s21
    %s25 = sphi 0, %s24
    %s41 = sphi 0, %s25
    %s45 = sphi 0, %s45
    %s47 = sphi 0, %s45
    %s48 = sphi 0, %s47
    %s62 = sphi 0, %s48
    %s66 = sphi 0, %s66
    %s68 = sphi 0, %s66
    %s69 = sphi 0, %s68
    %s83 = sphi 0, %s69
    %s89 = sphi 0, %s91
    %s92 = sphi 0, %s89
    %s93 = sphi 0, %s92
    %s109 = sphi 0, %s93
    %s115 = sphi 0, %s117
    %s118 = sphi 0, %s115
    %s119 = sphi 0, %s118
    %s135 = sphi 0, %s119
  $region4: #{_lambda_.5} parent=0 // loop_header_branch
    %14 = sbr.rel (%p12) target = $region8
  $region5: #{_lambda_.5} parent=0 // loop_body
    %s16 = ssub.s32 %s11, 1
    %s17 = ssub.s32 %s11, 2
    %s18 = sadd.s32 %s11, 1
    %s19 = ssub.s32 %s11, %s18
    %p20 = scmp.eq.s32.totalorder %s19, 0
    %s22 = sadd.s32 %s21, 1
    %s23 = scalar_select %p20, %s21, %s22
    %p26 = pneg %p20
    %p27 = scmp.eq.s32.totalorder %s11, 1
    %p28 = por %p26, %p27
    %p29 = scmp.ne.s32.totalorder %s21, %s24
    %p30 = scmp.eq.s32.totalorder %s11, 0
    %p31 = por %p29, %p30
    %p32 = scmp.ne.s32.totalorder %s21, %s24
    %p33 = scmp.eq.s32.totalorder %s16, 1
    %p34 = por %p32, %p33
    %p35 = scmp.ne.s32.totalorder %s24, %s25
    %p36 = scmp.eq.s32.totalorder %s16, 0
    %p37 = por %p35, %p36
    %p38 = scmp.ne.s32.totalorder %s24, %s25
    %p39 = scmp.eq.s32.totalorder %s17, 1
    %p40 = por %p38, %p39
    %p42 = scmp.ne.s32.totalorder %s25, %s41
    %p43 = scmp.eq.s32.totalorder %s17, 0
    %p44 = por %p42, %p43
    %s46 = sadd.s32 %s45, 1
    %p49 = scmp.eq.s32.totalorder %s11, 1
    %p50 = scmp.ne.s32.totalorder %s45, %s47
    %p51 = scmp.eq.s32.totalorder %s11, 0
    %p52 = por %p50, %p51
    %p53 = scmp.ne.s32.totalorder %s45, %s47
    %p54 = scmp.eq.s32.totalorder %s16, 1
    %p55 = por %p53, %p54
    %p56 = scmp.ne.s32.totalorder %s47, %s48
    %p57 = scmp.eq.s32.totalorder %s16, 0
    %p58 = por %p56, %p57
    %p59 = scmp.ne.s32.totalorder %s47, %s48
    %p60 = scmp.eq.s32.totalorder %s17, 1
    %p61 = por %p59, %p60
    %p63 = scmp.ne.s32.totalorder %s48, %s62
    %p64 = scmp.eq.s32.totalorder %s17, 0
    %p65 = por %p63, %p64
    %s67 = sadd.s32 %s66, 1
    %p70 = scmp.eq.s32.totalorder %s11, 1
    %p71 = scmp.ne.s32.totalorder %s66, %s68
    %p72 = scmp.eq.s32.totalorder %s11, 0
    %p73 = por %p71, %p72
    %p74 = scmp.ne.s32.totalorder %s66, %s68
    %p75 = scmp.eq.s32.totalorder %s16, 1
    %p76 = por %p74, %p75
    %p77 = scmp.ne.s32.totalorder %s68, %s69
    %p78 = scmp.eq.s32.totalorder %s16, 0
    %p79 = por %p77, %p78
    %p80 = scmp.ne.s32.totalorder %s68, %s69
    %p81 = scmp.eq.s32.totalorder %s17, 1
    %p82 = por %p80, %p81
    %p84 = scmp.ne.s32.totalorder %s69, %s83
    %p85 = scmp.eq.s32.totalorder %s17, 0
    %p86 = por %p84, %p85
    %s87 = ssub.s32 %s11, %s18
    %p88 = scmp.eq.s32.totalorder %s87, 0
    %s90 = sadd.s32 %s89, 1
    %s91 = scalar_select %p88, %s89, %s90
    %p94 = pneg %p88
    %p95 = scmp.eq.s32.totalorder %s11, 1
    %p96 = por %p94, %p95
    %p97 = scmp.ne.s32.totalorder %s89, %s92
    %p98 = scmp.eq.s32.totalorder %s11, 0
    %p99 = por %p97, %p98
    %p100 = scmp.ne.s32.totalorder %s89, %s92
    %p101 = scmp.eq.s32.totalorder %s16, 1
    %p102 = por %p100, %p101
    %p103 = scmp.ne.s32.totalorder %s92, %s93
    %p104 = scmp.eq.s32.totalorder %s16, 0
    %p105 = por %p103, %p104
    %p106 = scmp.ne.s32.totalorder %s92, %s93
    %p107 = scmp.eq.s32.totalorder %s17, 1
    %p108 = por %p106, %p107
    %p110 = scmp.ne.s32.totalorder %s93, %s109
    %p111 = scmp.eq.s32.totalorder %s17, 0
    %p112 = por %p110, %p111
    %s113 = ssub.s32 %s11, %s18
    %p114 = scmp.eq.s32.totalorder %s113, 0
    %s116 = sadd.s32 %s115, 1
    %s117 = scalar_select %p114, %s115, %s116
    %p120 = pneg %p114
    %p121 = scmp.eq.s32.totalorder %s11, 1
    %p122 = por %p120, %p121
    %p123 = scmp.ne.s32.totalorder %s115, %s118
    %p124 = scmp.eq.s32.totalorder %s11, 0
    %p125 = por %p123, %p124
    %p126 = scmp.ne.s32.totalorder %s115, %s118
    %p127 = scmp.eq.s32.totalorder %s16, 1
    %p128 = por %p126, %p127
    %p129 = scmp.ne.s32.totalorder %s118, %s119
    %p130 = scmp.eq.s32.totalorder %s16, 0
    %p131 = por %p129, %p130
    %p132 = scmp.ne.s32.totalorder %s118, %s119
    %p133 = scmp.eq.s32.totalorder %s17, 1
    %p134 = por %p132, %p133
    %p136 = scmp.ne.s32.totalorder %s119, %s135
    %p137 = scmp.eq.s32.totalorder %s17, 0
    %p138 = por %p136, %p137
    %p139 = scmp.le.s32.totalorder 1, %s11
    %p140 = scmp.lt.s32.totalorder %s11, 3
    %p141 = pnand %p139, %p140
    %p142 = pneg %p141
    // Predicated region
    $region9: #{_lambda_.5} parent=5 // pred_check
      _
    $region10: #{_lambda_.5} parent=5 // pred_check_branch
      %144 = sbr.rel (%p141) target = $region12
    $region11: #{_lambda_.5} parent=5 // pred_region
      %s145 = ssub.s32 %s11, 1
      // Predicated region
      $region13: #{_lambda_.5} parent=11 // pred_check
        %p146 = pneg %p58
      $region14: #{_lambda_.5} parent=11 // pred_check_branch
        %148 = sbr.rel (%p146) target = $region16
      $region15: #{_lambda_.5} parent=11 // pred_region
        _
      $region16: #{_lambda_.5} parent=11 // pred_fallthru
        _
      // Predicated region
      $region17: #{_lambda_.5} parent=11 // pred_check
        %p149 = pneg %p79
      $region18: #{_lambda_.5} parent=11 // pred_check_branch
        %151 = sbr.rel (%p149) target = $region20
      $region19: #{_lambda_.5} parent=11 // pred_region
        _
      $region20: #{_lambda_.5} parent=11 // pred_fallthru
        _
    $region12: #{_lambda_.5} parent=5 // pred_fallthru
      _
    %p152 = scmp.lt.s32.totalorder %s11, 2
    // Predicated region
    $region21: #{_lambda_.5} parent=5 // pred_check
      %p153 = pneg %p152
    $region22: #{_lambda_.5} parent=5 // pred_check_branch
      %155 = sbr.rel (%p153) target = $region24
    $region23: #{_lambda_.5} parent=5 // pred_region
      // Predicated region
      $region25: #{_lambda_.5} parent=23 // pred_check
        %p156 = pneg %p31
      $region26: #{_lambda_.5} parent=23 // pred_check_branch
        %158 = sbr.rel (%p156) target = $region28
      $region27: #{_lambda_.5} parent=23 // pred_region
        %p159 = scmp.lt.s32.totalorder %s11, 1
        %s160 = scalar_select %p159, %s11, 1
        %s161 = smul.addr %s160, 2
        %s162 = smul.addr %s161, 8
        %s163 = scalar_lea.vmem %s0, %s162
      $region28: #{_lambda_.5} parent=23 // pred_fallthru
        _
    $region24: #{_lambda_.5} parent=5 // pred_fallthru
      _
    %p164 = scmp.le.s32.totalorder 1, %s11
    %p165 = scmp.lt.s32.totalorder %s11, 3
    %p166 = pnand %p164, %p165
    %p167 = pneg %p166
    // Predicated region
    $region29: #{_lambda_.5} parent=5 // pred_check
      _
    $region30: #{_lambda_.5} parent=5 // pred_check_branch
      %169 = sbr.rel (%p166) target = $region32
    $region31: #{_lambda_.5} parent=5 // pred_region
      %s170 = ssub.s32 %s11, 1
      %p171 = scmp.lt.s32.totalorder %s16, 1
      %s172 = scalar_select %p171, %s16, 1
      %s173 = smul.addr %s172, 2
      %s174 = smul.addr %s173, 8
      %s175 = scalar_lea.vmem %s0, %s174
      %p176 = pneg %p37
      %p177 = pneg %p34
      %p178 = pneg %p58
      %p179 = pneg %p55
      %p180 = pneg %p79
      %p181 = pneg %p76
      %p182 = pneg %p105
      %p183 = pneg %p102
      %p184 = scmp.lt.s32.totalorder %s16, 1
      %s185 = scalar_select %p184, %s16, 1
      %s186 = smul.addr %s185, 3
      %s187 = smul.addr %s186, 8
      %s188 = scalar_lea.vmem %s3, %s187
      %p189 = pneg %p131
      %p190 = pneg %p128
      %p191 = scmp.lt.s32.totalorder %s16, 1
      %s192 = scalar_select %p191, %s16, 1
      %s193 = smul.addr %s192, 2
      %s194 = scalar_lea.vmem %s4, %s193
      %p195 = scmp.lt.s32.totalorder %s16, 1
      %s196 = scalar_select %p195, %s16, 1
      %s197 = smul.addr %s196, 2
      %s198 = smul.addr %s197, 8
      %s199 = scalar_lea.vmem %s0, %s198
      %p200 = scmp.lt.s32.totalorder %s16, 1
      %s201 = scalar_select %p200, %s16, 1
      %s202 = smul.addr %s201, 3
      %s203 = smul.addr %s202, 8
      %s204 = scalar_lea.vmem %s3, %s203
      %p205 = scmp.lt.s32.totalorder %s16, 1
      %s206 = scalar_select %p205, %s16, 1
      %s207 = smul.addr %s206, 2
      %s208 = scalar_lea.vmem %s4, %s207
      %v210 = vld [vmem:[%s199] sm:$0xff]
      %v211 = vld [vmem:[%s199 + $0x8] sm:$0xff]
      %v212 = vpack.c.bf16 %v210, %v210
      %v213 = vpack.c.bf16 %v211, %v211
      %v215 = vunpack.c.l.b16 %v213
      %v216 = vpack.c.b16 %v215, %v215
      %v217 = vrot.slane %v216, 3
      %v219 = vunpack.c.l.b16 %v212
      %v220 = vpack.c.b16 %v215, %v219
      %v221 = vrot.slane %v220, 7
      %v222 = vpack.c.b16 %v219, %v219
      %v223 = vrot.slane %v222, 7
      %vm224 = vcmask 1040384
      %v227 = vsel %vm224, %v217, %v221
      %v229 = vsel %vm224, %v221, %v223
      %v230 = vld [vmem:[%s2] sm:$0x1]
      %v232 = vperm.slane %v230, 0
      %v234 = vadd.f32 %v232, 0.0
      %v235 = vld [vmem:[%s1] sm:$0xf]
      %v236 = vld [vmem:[%s1 + $0x4] sm:$0xf]
      %v237 = vld [vmem:[%s1 + $0x8] sm:$0xf]
      %v238 = vld [vmem:[%s1 + $0xc] sm:$0xf]
      %v243 = vunpack.c.l.b16 %v235
      %v244 = vunpack.c.l.b16 %v236
      %v245 = vunpack.c.l.b16 %v237
      %v246 = vunpack.c.l.b16 %v238
      %v247 = vpack.c.b16 %v244, %v243
      %v248 = vpack.c.b16 %v246, %v245
      %vm251 = vcmask 261120
      %v252 = vsel %vm251, %v227, 0
      %v254 = vsel %vm251, %v229, 0
      %256 = vmatpush.bf16.msra.mxu0 0
      %257 = vmatpush.bf16.msra.mxu0 0
      %258 = vmatpush.bf16.msra.mxu0 0
      %259 = vmatpush.bf16.msra.mxu0 0
      %260 = vmatpush.bf16.msra.mxu0 0
      %261 = vmatpush.bf16.msra.mxu0 0
      %262 = vmatpush.bf16.msra.mxu0 %v248
      %263 = vmatpush.bf16.msra.mxu0 %v247
      %264 = vmatmul.bf16.gmra.mxu0 %v252
      %v265 = vpop.f32.mrf.mxu0
      %v266 = vadd.f32 0.0, %v265
      %v267 = vpop.f32.mrf.mxu0
      %v268 = vadd.f32 0.0, %v267
      %269 = vmatmul.bf16.gmra.mxu0 %v254
      %v270 = vpop.f32.mrf.mxu0
      %v271 = vadd.f32 0.0, %v270
      %v272 = vpop.f32.mrf.mxu0
      %273 = vdwg.mxu0
      %v274 = vadd.f32 %v234, %v266
      %v275 = vadd.f32 %v234, %v268
      %v276 = vadd.f32 %v234, %v271
      %s277 = scalar_lea.vmem %s1, 16
      %v278 = vld [vmem:[%s277] sm:$0xf]
      %v279 = vld [vmem:[%s277 + $0x4] sm:$0xf]
      %v280 = vld [vmem:[%s277 + $0x8] sm:$0xf]
      %v281 = vld [vmem:[%s277 + $0xc] sm:$0xf]
      %vm282 = vsmask.f32 7424
      %v283 = vshrl.u32 %v227, 16
      %v285 = vshll.u32 %v227, 16
      %v287 = vrot.slane %v285, 1
      %v288 = vor.u32 %v283, %v287
      %v289 = vshll.u32 %v229, 16
      %v291 = vrot.slane %v289, 1
      %v292 = vsel %vm282, %v288, %v291
      %v293 = vshrl.u32 %v229, 16
      %v295 = vor.u32 %v293, %v291
      %v300 = vunpack.c.l.b16 %v278
      %v301 = vunpack.c.l.b16 %v279
      %v302 = vunpack.c.l.b16 %v280
      %v303 = vunpack.c.l.b16 %v281
      %v304 = vpack.c.b16 %v301, %v300
      %v305 = vpack.c.b16 %v303, %v302
      %v309 = vsel %vm251, %v292, 0
      %v312 = vsel %vm251, %v295, 0
      %314 = vmatpush.bf16.msra.mxu0 0
      %315 = vmatpush.bf16.msra.mxu0 0
      %316 = vmatpush.bf16.msra.mxu0 0
      %317 = vmatpush.bf16.msra.mxu0 0
      %318 = vmatpush.bf16.msra.mxu0 0
      %319 = vmatpush.bf16.msra.mxu0 0
      %320 = vmatpush.bf16.msra.mxu0 %v305
      %321 = vmatpush.bf16.msra.mxu0 %v304
      %322 = vmatmul.bf16.gmra.mxu0 %v309
      %v323 = vpop.f32.mrf.mxu0
      %v324 = vadd.f32 0.0, %v323
      %v325 = vpop.f32.mrf.mxu0
      %v326 = vadd.f32 0.0, %v325
      %327 = vmatmul.bf16.gmra.mxu0 %v312
      %v328 = vpop.f32.mrf.mxu0
      %v329 = vadd.f32 0.0, %v328
      %v330 = vpop.f32.mrf.mxu0
      %331 = vdwg.mxu0
      %v332 = vadd.f32 %v274, %v324
      %v333 = vadd.f32 %v275, %v326
      %v334 = vadd.f32 %v276, %v329
      %s335 = scalar_lea.vmem %s1, 32
      %v336 = vld [vmem:[%s335] sm:$0xf]
      %v337 = vld [vmem:[%s335 + $0x4] sm:$0xf]
      %v338 = vld [vmem:[%s335 + $0x8] sm:$0xf]
      %v339 = vld [vmem:[%s335 + $0xc] sm:$0xf]
      %vm342 = vcmask 1046528
      %v343 = vrot.slane %v227, 1
      %v344 = vrot.slane %v229, 1
      %v345 = vsel %vm342, %v343, %v344
      %v350 = vunpack.c.l.b16 %v336
      %v351 = vunpack.c.l.b16 %v337
      %v352 = vunpack.c.l.b16 %v338
      %v353 = vunpack.c.l.b16 %v339
      %v354 = vpack.c.b16 %v351, %v350
      %v355 = vpack.c.b16 %v353, %v352
      %v359 = vsel %vm251, %v345, 0
      %v362 = vsel %vm251, %v344, 0
      %364 = vmatpush.bf16.msra.mxu0 0
      %365 = vmatpush.bf16.msra.mxu0 0
      %366 = vmatpush.bf16.msra.mxu0 0
      %367 = vmatpush.bf16.msra.mxu0 0
      %368 = vmatpush.bf16.msra.mxu0 0
      %369 = vmatpush.bf16.msra.mxu0 0
      %370 = vmatpush.bf16.msra.mxu0 %v355
      %371 = vmatpush.bf16.msra.mxu0 %v354
      %372 = vmatmul.bf16.gmra.mxu0 %v359
      %v373 = vpop.f32.mrf.mxu0
      %v374 = vadd.f32 0.0, %v373
      %v375 = vpop.f32.mrf.mxu0
      %v376 = vadd.f32 0.0, %v375
      %377 = vmatmul.bf16.gmra.mxu0 %v362
      %v378 = vpop.f32.mrf.mxu0
      %v379 = vadd.f32 0.0, %v378
      %v380 = vpop.f32.mrf.mxu0
      %381 = vdwg.mxu0
      %v382 = vadd.f32 %v332, %v374
      %v383 = vadd.f32 %v333, %v376
      %v384 = vadd.f32 %v334, %v379
      %385 = vst.msk [vmem:[%s204] sm:$0xff] %vm251, %v382
      %386 = vst.msk [vmem:[%s204 + $0x8] sm:$0xff] %vm251, %v383
      %vm387 = vcmask 254976
      %388 = vst.msk [vmem:[%s204 + $0x10] sm:$0x3] %vm387, %v384
      %v389 = vsel %vm251, %v382, 0.0
      %v390 = vsel %vm251, %v383, 0.0
      %v391 = vadd.f32 %v389, %v390
      %v392 = vsel %vm387, %v384, 0.0
      %v393 = vadd.f32 %v391, %v392
      %v394 = vrot.slane %v393, 4
      %v395 = vadd.f32 %v393, %v394
      %v396 = vrot.slane %v395, 2
      %v397 = vadd.f32 %v395, %v396
      %v398 = vrot.slane %v397, 1
      %v399 = vadd.f32 %v397, %v398
      %v400 = vmul.f32 %v382, %v382
      %v401 = vmul.f32 %v383, %v383
      %v402 = vmul.f32 %v384, %v384
      %v403 = vsel %vm251, %v400, 0.0
      %v404 = vsel %vm251, %v401, 0.0
      %v405 = vadd.f32 %v403, %v404
      %v406 = vsel %vm387, %v402, 0.0
      %v407 = vadd.f32 %v405, %v406
      %v408 = vrot.slane %v407, 4
      %v409 = vadd.f32 %v407, %v408
      %v410 = vrot.slane %v409, 2
      %v411 = vadd.f32 %v409, %v410
      %v412 = vrot.slane %v411, 1
      %v413 = vadd.f32 %v411, %v412
      %v414 = vsel %vm224, %v399, %v413
      %415 = vst.msk [vmem:[%s208] sm:$0x3] %vm387, %v414
      %p416 = scmp.lt.s32.totalorder %s16, 1
      %s417 = scalar_select %p416, %s16, 1
      %s418 = smul.addr %s417, 3
      %s419 = smul.addr %s418, 8
      %s420 = scalar_lea.vmem %s3, %s419
      %p421 = scmp.lt.s32.totalorder %s16, 1
      %s422 = scalar_select %p421, %s16, 1
      %s423 = smul.addr %s422, 2
      %s424 = scalar_lea.vmem %s4, %s423
      // Predicated region
      $region33: #{_lambda_.5} parent=31 // pred_check
        %p425 = pneg %p102
      $region34: #{_lambda_.5} parent=31 // pred_check_branch
        %427 = sbr.rel (%p425) target = $region36
      $region35: #{_lambda_.5} parent=31 // pred_region
        _
      $region36: #{_lambda_.5} parent=31 // pred_fallthru
        _
      // Predicated region
      $region37: #{_lambda_.5} parent=31 // pred_check
        %p428 = pneg %p128
      $region38: #{_lambda_.5} parent=31 // pred_check_branch
        %430 = sbr.rel (%p428) target = $region40
      $region39: #{_lambda_.5} parent=31 // pred_region
        _
      $region40: #{_lambda_.5} parent=31 // pred_fallthru
        _
    $region32: #{_lambda_.5} parent=5 // pred_fallthru
      _
    %p431 = scmp.le.s32.totalorder 2, %s11
    // Predicated region
    $region41: #{_lambda_.5} parent=5 // pred_check
      %p432 = pneg %p431
    $region42: #{_lambda_.5} parent=5 // pred_check_branch
      %434 = sbr.rel (%p432) target = $region44
    $region43: #{_lambda_.5} parent=5 // pred_region
      %s435 = ssub.s32 %s11, 2
      // Predicated region
      $region45: #{_lambda_.5} parent=43 // pred_check
        %p436 = pneg %p108
      $region46: #{_lambda_.5} parent=43 // pred_check_branch
        %438 = sbr.rel (%p436) target = $region48
      $region47: #{_lambda_.5} parent=43 // pred_region
        %p439 = scmp.lt.s32.totalorder %s17, 1
        %s440 = scalar_select %p439, %s17, 1
        %s441 = smul.addr %s440, 3
        %s442 = smul.addr %s441, 8
        %s443 = scalar_lea.vmem %s3, %s442
      $region48: #{_lambda_.5} parent=43 // pred_fallthru
        _
      // Predicated region
      $region49: #{_lambda_.5} parent=43 // pred_check
        %p444 = pneg %p134
      $region50: #{_lambda_.5} parent=43 // pred_check_branch
        %446 = sbr.rel (%p444) target = $region52
      $region51: #{_lambda_.5} parent=43 // pred_region
        %p447 = scmp.lt.s32.totalorder %s17, 1
        %s448 = scalar_select %p447, %s17, 1
        %s449 = smul.addr %s448, 2
        %s450 = scalar_lea.vmem %s4, %s449
      $region52: #{_lambda_.5} parent=43 // pred_fallthru
        _
    $region44: #{_lambda_.5} parent=5 // pred_fallthru
      _
  $region6: #{_lambda_.5} parent=0 // loop_footer
    %s15 = sadd.s32 1, %s11
  $region7: #{_lambda_.5} parent=0 // loop_footer_branch
    %10 = sbr.rel target = $region3
  $region8: #{_lambda_.5} parent=0 // loop_exit
    _

// kernel: _lambda_.4
$region0: #{_lambda_.4}
  #allocation0 [shape = 'u32[]', space=smem, size = 0x4, offset = 0x4, fixed_abs, tag = 'smem constant byte address 0x4 - core index']
  #allocation1 [shape = 'u32[72,128]{1,0:T(1,128)}', space=vmem, size = 0x9000, scoped, tag = 'internal scratch']
  %s0 = inlined_call_operand.vmem [shape: f32[2,16,32], index: 0, kind: input, shape index: {}]
  %s1 = inlined_call_operand.vmem [shape: bf16[32,96], index: 1, kind: input, shape index: {}]
  %s2 = inlined_call_operand.vmem [shape: f32[1,96], index: 2, kind: input, shape index: {}]
  %s3 = inlined_call_operand.hbm [shape: bf16[32,32], index: 3, kind: input, shape index: {}]
  %s4 = inlined_call_operand.hbm [shape: f32[1,32], index: 4, kind: input, shape index: {}]
  %s5 = inlined_call_operand.hbm [shape: bf16[32,64], index: 5, kind: input, shape index: {}]
  %s6 = inlined_call_operand.hbm [shape: f32[1,64], index: 6, kind: input, shape index: {}]
  %s7 = inlined_call_operand.vmem [shape: bf16[64,32], index: 7, kind: input, shape index: {}]
  %s8 = inlined_call_operand.hbm [shape: f32[1,32], index: 8, kind: input, shape index: {}]
  %s9 = inlined_call_operand.hbm [shape: f32[1,32], index: 9, kind: input, shape index: {}]
  %s10 = inlined_call_operand.hbm [shape: f32[1,32], index: 10, kind: input, shape index: {}]
  %s11 = inlined_call_operand.hbm [shape: f32[1,32], index: 11, kind: input, shape index: {}]
  %s12 = inlined_call_operand.hbm [shape: f32[1,32], index: 12, kind: input, shape index: {}]
  %s13 = inlined_call_operand.vmem [shape: f32[1,32], index: 13, kind: input, shape index: {}]
  %s14 = inlined_call_operand.vmem [shape: f32[1,32], index: 14, kind: input, shape index: {}]
  %s15 = inlined_call_operand.vmem [shape: f32[2,16,32], index: 15, kind: output, shape index: {0}]
  %s16 = inlined_call_operand.hbm [shape: f32[2,4,16,16], index: 16, kind: output, shape index: {1}]
  %17 = xla_tuple %s15, %s16
  %s18 = sld [smem:[#allocation0]]
  $region137: #{_lambda_.4} parent=0
    _
  %s20 = ssub.s32 1, %s18
  %s21 = scalar_select 0, %s20, %s18
  $region1: #{_lambda_.4} parent=0
    #allocation2 [shape = 'u8[8192]{0}', space=vmem, size = 0x2000, scoped, tag = 'input window, operand 3, single buffered']
    #allocation3 [shape = 's32[2]{0}', space=sflag, size = 0x8, scoped, tag = 'scoped memory for _lambda_.4']
    #allocation4 [shape = 's32[2]{0}', space=sflag, size = 0x8, scoped, tag = 'scoped memory for _lambda_.4']
    #allocation5 [shape = 'u8[512]{0}', space=vmem, size = 0x400, scoped, tag = 'input window, operand 4, single buffered']
    #allocation6 [shape = 's32[1]{0}', space=sflag, size = 0x4, scoped, tag = 'scoped memory for _lambda_.4']
    #allocation7 [shape = 'u8[8192]{0}', space=vmem, size = 0x2000, scoped, tag = 'input window, operand 5, single buffered']
    #allocation8 [shape = 'u8[512]{0}', space=vmem, size = 0x400, scoped, tag = 'input window, operand 6, single buffered']
    #allocation9 [shape = 's32[1]{0}', space=sflag, size = 0x4, scoped, tag = 'scoped memory for _lambda_.4']
    #allocation10 [shape = 'u8[512]{0}', space=vmem, size = 0x400, scoped, tag = 'input window, operand 8, single buffered']
    #allocation11 [shape = 'u8[512]{0}', space=vmem, size = 0x400, scoped, tag = 'input window, operand 9, single buffered']
    #allocation12 [shape = 's32[1]{0}', space=sflag, size = 0x4, scoped, tag = 'scoped memory for _lambda_.4']
    #allocation13 [shape = 'u8[512]{0}', space=vmem, size = 0x400, scoped, tag = 'input window, operand 10, single buffered']
    #allocation14 [shape = 'u8[512]{0}', space=vmem, size = 0x400, scoped, tag = 'input window, operand 11, single buffered']
    #allocation15 [shape = 's32[1]{0}', space=sflag, size = 0x4, scoped, tag = 'scoped memory for _lambda_.4']
    #allocation16 [shape = 'u8[512]{0}', space=vmem, size = 0x400, scoped, tag = 'input window, operand 12, single buffered']
    #allocation17 [shape = 'u8[65536]{0}', space=vmem, size = 0x10000, scoped, tag = 'output window, operand 1']
    %22 = vsyncpa [#allocation3], 0
    %23 = vsyncpa [#allocation6], 0
    %24 = vsyncpa [#allocation9], 0
    %25 = vsyncpa [#allocation12], 0
    %26 = vsyncpa [#allocation15], 0
    %27 = vsyncpa [#allocation4], 0
    %s28 = scalar_lea.sflag [#allocation4], 1
    %29 = vsyncpa %s28, 0
    loop: start=0, step=1, limit=4
    $region2: #{_lambda_.4} parent=1 // loop_pre_header
      _
    $region3: #{_lambda_.4} parent=1 // loop_header
      %s31 = sphi 0, %s35
      %p32 = scmp.ge.s32.totalorder %s31, 4
      %s41 = sphi 0, %s43
      %s44 = sphi 0, %s41
      %s45 = sphi 0, %s44
      %s61 = sphi 0, %s45
      %s65 = sphi 0, %s65
      %s67 = sphi 0, %s65
      %s68 = sphi 0, %s67
      %s82 = sphi 0, %s68
      %s86 = sphi 0, %s86
      %s88 = sphi 0, %s86
      %s89 = sphi 0, %s88
      %s103 = sphi 0, %s89
      %s107 = sphi 0, %s107
      %s109 = sphi 0, %s107
      %s110 = sphi 0, %s109
      %s124 = sphi 0, %s110
      %s128 = sphi 0, %s128
      %s130 = sphi 0, %s128
      %s131 = sphi 0, %s130
      %s145 = sphi 0, %s131
      %s149 = sphi 0, %s149
      %s151 = sphi 0, %s149
      %s152 = sphi 0, %s151
      %s166 = sphi 0, %s152
      %s170 = sphi 0, %s170
      %s172 = sphi 0, %s170
      %s173 = sphi 0, %s172
      %s187 = sphi 0, %s173
      %s191 = sphi 0, %s191
      %s193 = sphi 0, %s191
      %s194 = sphi 0, %s193
      %s208 = sphi 0, %s194
      %s212 = sphi 0, %s212
      %s214 = sphi 0, %s212
      %s215 = sphi 0, %s214
      %s229 = sphi 0, %s215
      %s233 = sphi 0, %s233
      %s235 = sphi 0, %s233
      %s236 = sphi 0, %s235
      %s250 = sphi 0, %s236
      %s254 = sphi 0, %s254
      %s256 = sphi 0, %s254
      %s257 = sphi 0, %s256
      %s271 = sphi 0, %s257
      %s275 = sphi 0, %s275
      %s277 = sphi 0, %s275
      %s278 = sphi 0, %s277
      %s292 = sphi 0, %s278
      %s296 = sphi 0, %s296
      %s298 = sphi 0, %s296
      %s299 = sphi 0, %s298
      %s313 = sphi 0, %s299
      %s317 = sphi 0, %s317
      %s319 = sphi 0, %s317
      %s320 = sphi 0, %s319
      %s334 = sphi 0, %s320
      %s338 = sphi 0, %s338
      %s340 = sphi 0, %s338
      %s341 = sphi 0, %s340
      %s355 = sphi 0, %s341
      %s361 = sphi 0, %s363
      %s364 = sphi 0, %s361
      %s365 = sphi 0, %s364
      %s381 = sphi 0, %s365
      %s387 = sphi 0, %s389
      %s390 = sphi 0, %s387
      %s391 = sphi 0, %s390
      %s407 = sphi 0, %s391
    $region4: #{_lambda_.4} parent=1 // loop_header_branch
      %34 = sbr.rel (%p32) target = $region8
    $region5: #{_lambda_.4} parent=1 // loop_body
      %s36 = ssub.s32 %s31, 1
      %s37 = ssub.s32 %s31, 2
      %s38 = sadd.s32 %s31, 1
      %s39 = ssub.s32 %s31, %s38
      %p40 = scmp.eq.s32.totalorder %s39, 0
      %s42 = sadd.s32 %s41, 1
      %s43 = scalar_select %p40, %s41, %s42
      %p46 = pneg %p40
      %p47 = scmp.eq.s32.totalorder %s31, 1
      %p48 = por %p46, %p47
      %p49 = scmp.ne.s32.totalorder %s41, %s44
      %p50 = scmp.eq.s32.totalorder %s31, 0
      %p51 = por %p49, %p50
      %p52 = scmp.ne.s32.totalorder %s41, %s44
      %p53 = scmp.eq.s32.totalorder %s36, 1
      %p54 = por %p52, %p53
      %p55 = scmp.ne.s32.totalorder %s44, %s45
      %p56 = scmp.eq.s32.totalorder %s36, 0
      %p57 = por %p55, %p56
      %p58 = scmp.ne.s32.totalorder %s44, %s45
      %p59 = scmp.eq.s32.totalorder %s37, 1
      %p60 = por %p58, %p59
      %p62 = scmp.ne.s32.totalorder %s45, %s61
      %p63 = scmp.eq.s32.totalorder %s37, 0
      %p64 = por %p62, %p63
      %s66 = sadd.s32 %s65, 1
      %p69 = scmp.eq.s32.totalorder %s31, 1
      %p70 = scmp.ne.s32.totalorder %s65, %s67
      %p71 = scmp.eq.s32.totalorder %s31, 0
      %p72 = por %p70, %p71
      %p73 = scmp.ne.s32.totalorder %s65, %s67
      %p74 = scmp.eq.s32.totalorder %s36, 1
      %p75 = por %p73, %p74
      %p76 = scmp.ne.s32.totalorder %s67, %s68
      %p77 = scmp.eq.s32.totalorder %s36, 0
      %p78 = por %p76, %p77
      %p79 = scmp.ne.s32.totalorder %s67, %s68
      %p80 = scmp.eq.s32.totalorder %s37, 1
      %p81 = por %p79, %p80
      %p83 = scmp.ne.s32.totalorder %s68, %s82
      %p84 = scmp.eq.s32.totalorder %s37, 0
      %p85 = por %p83, %p84
      %s87 = sadd.s32 %s86, 1
      %p90 = scmp.eq.s32.totalorder %s31, 1
      %p91 = scmp.ne.s32.totalorder %s86, %s88
      %p92 = scmp.eq.s32.totalorder %s31, 0
      %p93 = por %p91, %p92
      %p94 = scmp.ne.s32.totalorder %s86, %s88
      %p95 = scmp.eq.s32.totalorder %s36, 1
      %p96 = por %p94, %p95
      %p97 = scmp.ne.s32.totalorder %s88, %s89
      %p98 = scmp.eq.s32.totalorder %s36, 0
      %p99 = por %p97, %p98
      %p100 = scmp.ne.s32.totalorder %s88, %s89
      %p101 = scmp.eq.s32.totalorder %s37, 1
      %p102 = por %p100, %p101
      %p104 = scmp.ne.s32.totalorder %s89, %s103
      %p105 = scmp.eq.s32.totalorder %s37, 0
      %p106 = por %p104, %p105
      %s108 = sadd.s32 %s107, 1
      %p111 = scmp.eq.s32.totalorder %s31, 1
      %p112 = scmp.ne.s32.totalorder %s107, %s109
      %p113 = scmp.eq.s32.totalorder %s31, 0
      %p114 = por %p112, %p113
      %p115 = scmp.ne.s32.totalorder %s107, %s109
      %p116 = scmp.eq.s32.totalorder %s36, 1
      %p117 = por %p115, %p116
      %p118 = scmp.ne.s32.totalorder %s109, %s110
      %p119 = scmp.eq.s32.totalorder %s36, 0
      %p120 = por %p118, %p119
      %p121 = scmp.ne.s32.totalorder %s109, %s110
      %p122 = scmp.eq.s32.totalorder %s37, 1
      %p123 = por %p121, %p122
      %p125 = scmp.ne.s32.totalorder %s110, %s124
      %p126 = scmp.eq.s32.totalorder %s37, 0
      %p127 = por %p125, %p126
      %s129 = sadd.s32 %s128, 1
      %p132 = scmp.eq.s32.totalorder %s31, 1
      %p133 = scmp.ne.s32.totalorder %s128, %s130
      %p134 = scmp.eq.s32.totalorder %s31, 0
      %p135 = por %p133, %p134
      %p136 = scmp.ne.s32.totalorder %s128, %s130
      %p137 = scmp.eq.s32.totalorder %s36, 1
      %p138 = por %p136, %p137
      %p139 = scmp.ne.s32.totalorder %s130, %s131
      %p140 = scmp.eq.s32.totalorder %s36, 0
      %p141 = por %p139, %p140
      %p142 = scmp.ne.s32.totalorder %s130, %s131
      %p143 = scmp.eq.s32.totalorder %s37, 1
      %p144 = por %p142, %p143
      %p146 = scmp.ne.s32.totalorder %s131, %s145
      %p147 = scmp.eq.s32.totalorder %s37, 0
      %p148 = por %p146, %p147
      %s150 = sadd.s32 %s149, 1
      %p153 = scmp.eq.s32.totalorder %s31, 1
      %p154 = scmp.ne.s32.totalorder %s149, %s151
      %p155 = scmp.eq.s32.totalorder %s31, 0
      %p156 = por %p154, %p155
      %p157 = scmp.ne.s32.totalorder %s149, %s151
      %p158 = scmp.eq.s32.totalorder %s36, 1
      %p159 = por %p157, %p158
      %p160 = scmp.ne.s32.totalorder %s151, %s152
      %p161 = scmp.eq.s32.totalorder %s36, 0
      %p162 = por %p160, %p161
      %p163 = scmp.ne.s32.totalorder %s151, %s152
      %p164 = scmp.eq.s32.totalorder %s37, 1
      %p165 = por %p163, %p164
      %p167 = scmp.ne.s32.totalorder %s152, %s166
      %p168 = scmp.eq.s32.totalorder %s37, 0
      %p169 = por %p167, %p168
      %s171 = sadd.s32 %s170, 1
      %p174 = scmp.eq.s32.totalorder %s31, 1
      %p175 = scmp.ne.s32.totalorder %s170, %s172
      %p176 = scmp.eq.s32.totalorder %s31, 0
      %p177 = por %p175, %p176
      %p178 = scmp.ne.s32.totalorder %s170, %s172
      %p179 = scmp.eq.s32.totalorder %s36, 1
      %p180 = por %p178, %p179
      %p181 = scmp.ne.s32.totalorder %s172, %s173
      %p182 = scmp.eq.s32.totalorder %s36, 0
      %p183 = por %p181, %p182
      %p184 = scmp.ne.s32.totalorder %s172, %s173
      %p185 = scmp.eq.s32.totalorder %s37, 1
      %p186 = por %p184, %p185
      %p188 = scmp.ne.s32.totalorder %s173, %s187
      %p189 = scmp.eq.s32.totalorder %s37, 0
      %p190 = por %p188, %p189
      %s192 = sadd.s32 %s191, 1
      %p195 = scmp.eq.s32.totalorder %s31, 1
      %p196 = scmp.ne.s32.totalorder %s191, %s193
      %p197 = scmp.eq.s32.totalorder %s31, 0
      %p198 = por %p196, %p197
      %p199 = scmp.ne.s32.totalorder %s191, %s193
      %p200 = scmp.eq.s32.totalorder %s36, 1
      %p201 = por %p199, %p200
      %p202 = scmp.ne.s32.totalorder %s193, %s194
      %p203 = scmp.eq.s32.totalorder %s36, 0
      %p204 = por %p202, %p203
      %p205 = scmp.ne.s32.totalorder %s193, %s194
      %p206 = scmp.eq.s32.totalorder %s37, 1
      %p207 = por %p205, %p206
      %p209 = scmp.ne.s32.totalorder %s194, %s208
      %p210 = scmp.eq.s32.totalorder %s37, 0
      %p211 = por %p209, %p210
      %s213 = sadd.s32 %s212, 1
      %p216 = scmp.eq.s32.totalorder %s31, 1
      %p217 = scmp.ne.s32.totalorder %s212, %s214
      %p218 = scmp.eq.s32.totalorder %s31, 0
      %p219 = por %p217, %p218
      %p220 = scmp.ne.s32.totalorder %s212, %s214
      %p221 = scmp.eq.s32.totalorder %s36, 1
      %p222 = por %p220, %p221
      %p223 = scmp.ne.s32.totalorder %s214, %s215
      %p224 = scmp.eq.s32.totalorder %s36, 0
      %p225 = por %p223, %p224
      %p226 = scmp.ne.s32.totalorder %s214, %s215
      %p227 = scmp.eq.s32.totalorder %s37, 1
      %p228 = por %p226, %p227
      %p230 = scmp.ne.s32.totalorder %s215, %s229
      %p231 = scmp.eq.s32.totalorder %s37, 0
      %p232 = por %p230, %p231
      %s234 = sadd.s32 %s233, 1
      %p237 = scmp.eq.s32.totalorder %s31, 1
      %p238 = scmp.ne.s32.totalorder %s233, %s235
      %p239 = scmp.eq.s32.totalorder %s31, 0
      %p240 = por %p238, %p239
      %p241 = scmp.ne.s32.totalorder %s233, %s235
      %p242 = scmp.eq.s32.totalorder %s36, 1
      %p243 = por %p241, %p242
      %p244 = scmp.ne.s32.totalorder %s235, %s236
      %p245 = scmp.eq.s32.totalorder %s36, 0
      %p246 = por %p244, %p245
      %p247 = scmp.ne.s32.totalorder %s235, %s236
      %p248 = scmp.eq.s32.totalorder %s37, 1
      %p249 = por %p247, %p248
      %p251 = scmp.ne.s32.totalorder %s236, %s250
      %p252 = scmp.eq.s32.totalorder %s37, 0
      %p253 = por %p251, %p252
      %s255 = sadd.s32 %s254, 1
      %p258 = scmp.eq.s32.totalorder %s31, 1
      %p259 = scmp.ne.s32.totalorder %s254, %s256
      %p260 = scmp.eq.s32.totalorder %s31, 0
      %p261 = por %p259, %p260
      %p262 = scmp.ne.s32.totalorder %s254, %s256
      %p263 = scmp.eq.s32.totalorder %s36, 1
      %p264 = por %p262, %p263
      %p265 = scmp.ne.s32.totalorder %s256, %s257
      %p266 = scmp.eq.s32.totalorder %s36, 0
      %p267 = por %p265, %p266
      %p268 = scmp.ne.s32.totalorder %s256, %s257
      %p269 = scmp.eq.s32.totalorder %s37, 1
      %p270 = por %p268, %p269
      %p272 = scmp.ne.s32.totalorder %s257, %s271
      %p273 = scmp.eq.s32.totalorder %s37, 0
      %p274 = por %p272, %p273
      %s276 = sadd.s32 %s275, 1
      %p279 = scmp.eq.s32.totalorder %s31, 1
      %p280 = scmp.ne.s32.totalorder %s275, %s277
      %p281 = scmp.eq.s32.totalorder %s31, 0
      %p282 = por %p280, %p281
      %p283 = scmp.ne.s32.totalorder %s275, %s277
      %p284 = scmp.eq.s32.totalorder %s36, 1
      %p285 = por %p283, %p284
      %p286 = scmp.ne.s32.totalorder %s277, %s278
      %p287 = scmp.eq.s32.totalorder %s36, 0
      %p288 = por %p286, %p287
      %p289 = scmp.ne.s32.totalorder %s277, %s278
      %p290 = scmp.eq.s32.totalorder %s37, 1
      %p291 = por %p289, %p290
      %p293 = scmp.ne.s32.totalorder %s278, %s292
      %p294 = scmp.eq.s32.totalorder %s37, 0
      %p295 = por %p293, %p294
      %s297 = sadd.s32 %s296, 1
      %p300 = scmp.eq.s32.totalorder %s31, 1
      %p301 = scmp.ne.s32.totalorder %s296, %s298
      %p302 = scmp.eq.s32.totalorder %s31, 0
      %p303 = por %p301, %p302
      %p304 = scmp.ne.s32.totalorder %s296, %s298
      %p305 = scmp.eq.s32.totalorder %s36, 1
      %p306 = por %p304, %p305
      %p307 = scmp.ne.s32.totalorder %s298, %s299
      %p308 = scmp.eq.s32.totalorder %s36, 0
      %p309 = por %p307, %p308
      %p310 = scmp.ne.s32.totalorder %s298, %s299
      %p311 = scmp.eq.s32.totalorder %s37, 1
      %p312 = por %p310, %p311
      %p314 = scmp.ne.s32.totalorder %s299, %s313
      %p315 = scmp.eq.s32.totalorder %s37, 0
      %p316 = por %p314, %p315
      %s318 = sadd.s32 %s317, 1
      %p321 = scmp.eq.s32.totalorder %s31, 1
      %p322 = scmp.ne.s32.totalorder %s317, %s319
      %p323 = scmp.eq.s32.totalorder %s31, 0
      %p324 = por %p322, %p323
      %p325 = scmp.ne.s32.totalorder %s317, %s319
      %p326 = scmp.eq.s32.totalorder %s36, 1
      %p327 = por %p325, %p326
      %p328 = scmp.ne.s32.totalorder %s319, %s320
      %p329 = scmp.eq.s32.totalorder %s36, 0
      %p330 = por %p328, %p329
      %p331 = scmp.ne.s32.totalorder %s319, %s320
      %p332 = scmp.eq.s32.totalorder %s37, 1
      %p333 = por %p331, %p332
      %p335 = scmp.ne.s32.totalorder %s320, %s334
      %p336 = scmp.eq.s32.totalorder %s37, 0
      %p337 = por %p335, %p336
      %s339 = sadd.s32 %s338, 1
      %p342 = scmp.eq.s32.totalorder %s31, 1
      %p343 = scmp.ne.s32.totalorder %s338, %s340
      %p344 = scmp.eq.s32.totalorder %s31, 0
      %p345 = por %p343, %p344
      %p346 = scmp.ne.s32.totalorder %s338, %s340
      %p347 = scmp.eq.s32.totalorder %s36, 1
      %p348 = por %p346, %p347
      %p349 = scmp.ne.s32.totalorder %s340, %s341
      %p350 = scmp.eq.s32.totalorder %s36, 0
      %p351 = por %p349, %p350
      %p352 = scmp.ne.s32.totalorder %s340, %s341
      %p353 = scmp.eq.s32.totalorder %s37, 1
      %p354 = por %p352, %p353
      %p356 = scmp.ne.s32.totalorder %s341, %s355
      %p357 = scmp.eq.s32.totalorder %s37, 0
      %p358 = por %p356, %p357
      %s359 = ssub.s32 %s31, %s38
      %p360 = scmp.eq.s32.totalorder %s359, 0
      %s362 = sadd.s32 %s361, 1
      %s363 = scalar_select %p360, %s361, %s362
      %p366 = pneg %p360
      %p367 = scmp.eq.s32.totalorder %s31, 1
      %p368 = por %p366, %p367
      %p369 = scmp.ne.s32.totalorder %s361, %s364
      %p370 = scmp.eq.s32.totalorder %s31, 0
      %p371 = por %p369, %p370
      %p372 = scmp.ne.s32.totalorder %s361, %s364
      %p373 = scmp.eq.s32.totalorder %s36, 1
      %p374 = por %p372, %p373
      %p375 = scmp.ne.s32.totalorder %s364, %s365
      %p376 = scmp.eq.s32.totalorder %s36, 0
      %p377 = por %p375, %p376
      %p378 = scmp.ne.s32.totalorder %s364, %s365
      %p379 = scmp.eq.s32.totalorder %s37, 1
      %p380 = por %p378, %p379
      %p382 = scmp.ne.s32.totalorder %s365, %s381
      %p383 = scmp.eq.s32.totalorder %s37, 0
      %p384 = por %p382, %p383
      %s385 = ssub.s32 %s31, %s38
      %p386 = scmp.eq.s32.totalorder %s385, 0
      %s388 = sadd.s32 %s387, 1
      %s389 = scalar_select %p386, %s387, %s388
      %p392 = pneg %p386
      %p393 = scmp.eq.s32.totalorder %s31, 1
      %p394 = por %p392, %p393
      %p395 = scmp.ne.s32.totalorder %s387, %s390
      %p396 = scmp.eq.s32.totalorder %s31, 0
      %p397 = por %p395, %p396
      %p398 = scmp.ne.s32.totalorder %s387, %s390
      %p399 = scmp.eq.s32.totalorder %s36, 1
      %p400 = por %p398, %p399
      %p401 = scmp.ne.s32.totalorder %s390, %s391
      %p402 = scmp.eq.s32.totalorder %s36, 0
      %p403 = por %p401, %p402
      %p404 = scmp.ne.s32.totalorder %s390, %s391
      %p405 = scmp.eq.s32.totalorder %s37, 1
      %p406 = por %p404, %p405
      %p408 = scmp.ne.s32.totalorder %s391, %s407
      %p409 = scmp.eq.s32.totalorder %s37, 0
      %p410 = por %p408, %p409
      %p411 = scmp.le.s32.totalorder 1, %s31
      %p412 = scmp.lt.s32.totalorder %s31, 3
      %p413 = pnand %p411, %p412
      %p414 = pneg %p413
      // Predicated region
      $region9: #{_lambda_.4} parent=5 // pred_check
        _
      $region10: #{_lambda_.4} parent=5 // pred_check_branch
        %416 = sbr.rel (%p413) target = $region12
      $region11: #{_lambda_.4} parent=5 // pred_region
        %s417 = ssub.s32 %s31, 1
        // Predicated region
        $region13: #{_lambda_.4} parent=11 // pred_check
          %p418 = pneg %p78
        $region14: #{_lambda_.4} parent=11 // pred_check_branch
          %420 = sbr.rel (%p418) target = $region16
        $region15: #{_lambda_.4} parent=11 // pred_region
          _
        $region16: #{_lambda_.4} parent=11 // pred_fallthru
          _
        // Predicated region
        $region17: #{_lambda_.4} parent=11 // pred_check
          %p421 = pneg %p99
        $region18: #{_lambda_.4} parent=11 // pred_check_branch
          %423 = sbr.rel (%p421) target = $region20
        $region19: #{_lambda_.4} parent=11 // pred_region
          _
        $region20: #{_lambda_.4} parent=11 // pred_fallthru
          _
        // Predicated region
        $region21: #{_lambda_.4} parent=11 // pred_check
          %p424 = pneg %p120
        $region22: #{_lambda_.4} parent=11 // pred_check_branch
          %426 = sbr.rel (%p424) target = $region24
        $region23: #{_lambda_.4} parent=11 // pred_region
          %428 = vsyncadd [#allocation3], 0
          %s429 = sshll.u32 %s3, 4
          %s430 = int_to_ptr.hbm [resolvable:$true] %s429
          %s431 = sshll.u32 [#allocation2], 4
          %s432 = int_to_ptr.vmem [resolvable:$true] %s431
          %437 = dma.hbm_to_vmem [thread:$0]  %s430, 256, %s432, [#allocation3], 64, 64, 4
        $region24: #{_lambda_.4} parent=11 // pred_fallthru
          _
        // Predicated region
        $region25: #{_lambda_.4} parent=11 // pred_check
          %p438 = pneg %p141
        $region26: #{_lambda_.4} parent=11 // pred_check_branch
          %440 = sbr.rel (%p438) target = $region28
        $region27: #{_lambda_.4} parent=11 // pred_region
          %442 = vsyncadd [#allocation6], 0
          %s444 = sshll.u32 %s4, 4
          %s445 = int_to_ptr.hbm [resolvable:$true] %s444
          %s446 = sshll.u32 [#allocation5], 4
          %s447 = int_to_ptr.vmem [resolvable:$true] %s446
          %449 = dma.hbm_to_vmem [thread:$0]  %s445, 16, %s447, [#allocation6]
        $region28: #{_lambda_.4} parent=11 // pred_fallthru
          _
        // Predicated region
        $region29: #{_lambda_.4} parent=11 // pred_check
          %p450 = pneg %p162
        $region30: #{_lambda_.4} parent=11 // pred_check_branch
          %452 = sbr.rel (%p450) target = $region32
        $region31: #{_lambda_.4} parent=11 // pred_region
          %454 = vsyncadd [#allocation6], 0
          %s455 = sshll.u32 %s5, 4
          %s456 = int_to_ptr.hbm [resolvable:$true] %s455
          %s457 = sshll.u32 [#allocation7], 4
          %s458 = int_to_ptr.vmem [resolvable:$true] %s457
          %463 = dma.hbm_to_vmem [thread:$0]  %s456, 256, %s458, [#allocation6], 64, 64, 4
        $region32: #{_lambda_.4} parent=11 // pred_fallthru
          _
        // Predicated region
        $region33: #{_lambda_.4} parent=11 // pred_check
          %p464 = pneg %p183
        $region34: #{_lambda_.4} parent=11 // pred_check_branch
          %466 = sbr.rel (%p464) target = $region36
        $region35: #{_lambda_.4} parent=11 // pred_region
          %468 = vsyncadd [#allocation9], 0
          %s470 = sshll.u32 %s6, 4
          %s471 = int_to_ptr.hbm [resolvable:$true] %s470
          %s472 = sshll.u32 [#allocation8], 4
          %s473 = int_to_ptr.vmem [resolvable:$true] %s472
          %475 = dma.hbm_to_vmem [thread:$0]  %s471, 16, %s473, [#allocation9]
        $region36: #{_lambda_.4} parent=11 // pred_fallthru
          _
        // Predicated region
        $region37: #{_lambda_.4} parent=11 // pred_check
          %p476 = pneg %p204
        $region38: #{_lambda_.4} parent=11 // pred_check_branch
          %478 = sbr.rel (%p476) target = $region40
        $region39: #{_lambda_.4} parent=11 // pred_region
          _
        $region40: #{_lambda_.4} parent=11 // pred_fallthru
          _
        // Predicated region
        $region41: #{_lambda_.4} parent=11 // pred_check
          %p479 = pneg %p225
        $region42: #{_lambda_.4} parent=11 // pred_check_branch
          %481 = sbr.rel (%p479) target = $region44
        $region43: #{_lambda_.4} parent=11 // pred_region
          %483 = vsyncadd [#allocation9], 0
          %s485 = sshll.u32 %s8, 4
          %s486 = int_to_ptr.hbm [resolvable:$true] %s485
          %s487 = sshll.u32 [#allocation10], 4
          %s488 = int_to_ptr.vmem [resolvable:$true] %s487
          %490 = dma.hbm_to_vmem [thread:$0]  %s486, 16, %s488, [#allocation9]
        $region44: #{_lambda_.4} parent=11 // pred_fallthru
          _
        // Predicated region
        $region45: #{_lambda_.4} parent=11 // pred_check
          %p491 = pneg %p246
        $region46: #{_lambda_.4} parent=11 // pred_check_branch
          %493 = sbr.rel (%p491) target = $region48
        $region47: #{_lambda_.4} parent=11 // pred_region
          %495 = vsyncadd [#allocation12], 0
          %s497 = sshll.u32 %s9, 4
          %s498 = int_to_ptr.hbm [resolvable:$true] %s497
          %s499 = sshll.u32 [#allocation11], 4
          %s500 = int_to_ptr.vmem [resolvable:$true] %s499
          %502 = dma.hbm_to_vmem [thread:$0]  %s498, 16, %s500, [#allocation12]
        $region48: #{_lambda_.4} parent=11 // pred_fallthru
          _
        // Predicated region
        $region49: #{_lambda_.4} parent=11 // pred_check
          %p503 = pneg %p267
        $region50: #{_lambda_.4} parent=11 // pred_check_branch
          %505 = sbr.rel (%p503) target = $region52
        $region51: #{_lambda_.4} parent=11 // pred_region
          %507 = vsyncadd [#allocation12], 0
          %s509 = sshll.u32 %s10, 4
          %s510 = int_to_ptr.hbm [resolvable:$true] %s509
          %s511 = sshll.u32 [#allocation13], 4
          %s512 = int_to_ptr.vmem [resolvable:$true] %s511
          %514 = dma.hbm_to_vmem [thread:$0]  %s510, 16, %s512, [#allocation12]
        $region52: #{_lambda_.4} parent=11 // pred_fallthru
          _
        // Predicated region
        $region53: #{_lambda_.4} parent=11 // pred_check
          %p515 = pneg %p288
        $region54: #{_lambda_.4} parent=11 // pred_check_branch
          %517 = sbr.rel (%p515) target = $region56
        $region55: #{_lambda_.4} parent=11 // pred_region
          %519 = vsyncadd [#allocation15], 0
          %s521 = sshll.u32 %s11, 4
          %s522 = int_to_ptr.hbm [resolvable:$true] %s521
          %s523 = sshll.u32 [#allocation14], 4
          %s524 = int_to_ptr.vmem [resolvable:$true] %s523
          %526 = dma.hbm_to_vmem [thread:$0]  %s522, 16, %s524, [#allocation15]
        $region56: #{_lambda_.4} parent=11 // pred_fallthru
          _
        // Predicated region
        $region57: #{_lambda_.4} parent=11 // pred_check
          %p527 = pneg %p309
        $region58: #{_lambda_.4} parent=11 // pred_check_branch
          %529 = sbr.rel (%p527) target = $region60
        $region59: #{_lambda_.4} parent=11 // pred_region
          %531 = vsyncadd [#allocation15], 0
          %s533 = sshll.u32 %s12, 4
          %s534 = int_to_ptr.hbm [resolvable:$true] %s533
          %s535 = sshll.u32 [#allocation16], 4
          %s536 = int_to_ptr.vmem [resolvable:$true] %s535
          %538 = dma.hbm_to_vmem [thread:$0]  %s534, 16, %s536, [#allocation15]
        $region60: #{_lambda_.4} parent=11 // pred_fallthru
          _
        // Predicated region
        $region61: #{_lambda_.4} parent=11 // pred_check
          %p539 = pneg %p330
        $region62: #{_lambda_.4} parent=11 // pred_check_branch
          %541 = sbr.rel (%p539) target = $region64
        $region63: #{_lambda_.4} parent=11 // pred_region
          _
        $region64: #{_lambda_.4} parent=11 // pred_fallthru
          _
        // Predicated region
        $region65: #{_lambda_.4} parent=11 // pred_check
          %p542 = pneg %p351
        $region66: #{_lambda_.4} parent=11 // pred_check_branch
          %544 = sbr.rel (%p542) target = $region68
        $region67: #{_lambda_.4} parent=11 // pred_region
          _
        $region68: #{_lambda_.4} parent=11 // pred_fallthru
          _
      $region12: #{_lambda_.4} parent=5 // pred_fallthru
        _
      %p545 = scmp.lt.s32.totalorder %s31, 2
      // Predicated region
      $region69: #{_lambda_.4} parent=5 // pred_check
        %p546 = pneg %p545
      $region70: #{_lambda_.4} parent=5 // pred_check_branch
        %548 = sbr.rel (%p546) target = $region72
      $region71: #{_lambda_.4} parent=5 // pred_region
        // Predicated region
        $region73: #{_lambda_.4} parent=71 // pred_check
          %p549 = pneg %p51
        $region74: #{_lambda_.4} parent=71 // pred_check_branch
          %551 = sbr.rel (%p549) target = $region76
        $region75: #{_lambda_.4} parent=71 // pred_region
          %p552 = scmp.lt.s32.totalorder %s31, 1
          %s553 = scalar_select %p552, %s31, 1
          %s554 = smul.addr %s553, 2
          %s555 = smul.addr %s554, 8
          %s556 = scalar_lea.vmem %s0, %s555
        $region76: #{_lambda_.4} parent=71 // pred_fallthru
          _
      $region72: #{_lambda_.4} parent=5 // pred_fallthru
        _
      %p557 = scmp.le.s32.totalorder 1, %s31
      %p558 = scmp.lt.s32.totalorder %s31, 3
      %p559 = pnand %p557, %p558
      %p560 = pneg %p559
      // Predicated region
      $region77: #{_lambda_.4} parent=5 // pred_check
        _
      $region78: #{_lambda_.4} parent=5 // pred_check_branch
        %562 = sbr.rel (%p559) target = $region80
      $region79: #{_lambda_.4} parent=5 // pred_region
        %s563 = ssub.s32 %s31, 1
        // Predicated region
        $region81: #{_lambda_.4} parent=79 // pred_check
          %p564 = pneg %p120
        $region82: #{_lambda_.4} parent=79 // pred_check_branch
          %566 = sbr.rel (%p564) target = $region84
        $region83: #{_lambda_.4} parent=79 // pred_region
          %568 = dma.done [#allocation3], 256
        $region84: #{_lambda_.4} parent=79 // pred_fallthru
          _
        // Predicated region
        $region85: #{_lambda_.4} parent=79 // pred_check
          %p569 = pneg %p141
        $region86: #{_lambda_.4} parent=79 // pred_check_branch
          %571 = sbr.rel (%p569) target = $region88
        $region87: #{_lambda_.4} parent=79 // pred_region
          %573 = dma.done [#allocation6], 16
        $region88: #{_lambda_.4} parent=79 // pred_fallthru
          _
        // Predicated region
        $region89: #{_lambda_.4} parent=79 // pred_check
          %p574 = pneg %p162
        $region90: #{_lambda_.4} parent=79 // pred_check_branch
          %576 = sbr.rel (%p574) target = $region92
        $region91: #{_lambda_.4} parent=79 // pred_region
          %578 = dma.done [#allocation6], 256
        $region92: #{_lambda_.4} parent=79 // pred_fallthru
          _
        // Predicated region
        $region93: #{_lambda_.4} parent=79 // pred_check
          %p579 = pneg %p183
        $region94: #{_lambda_.4} parent=79 // pred_check_branch
          %581 = sbr.rel (%p579) target = $region96
        $region95: #{_lambda_.4} parent=79 // pred_region
          %583 = dma.done [#allocation9], 16
        $region96: #{_lambda_.4} parent=79 // pred_fallthru
          _
        // Predicated region
        $region97: #{_lambda_.4} parent=79 // pred_check
          %p584 = pneg %p225
        $region98: #{_lambda_.4} parent=79 // pred_check_branch
          %586 = sbr.rel (%p584) target = $region100
        $region99: #{_lambda_.4} parent=79 // pred_region
          %588 = dma.done [#allocation9], 16
        $region100: #{_lambda_.4} parent=79 // pred_fallthru
          _
        // Predicated region
        $region101: #{_lambda_.4} parent=79 // pred_check
          %p589 = pneg %p246
        $region102: #{_lambda_.4} parent=79 // pred_check_branch
          %591 = sbr.rel (%p589) target = $region104
        $region103: #{_lambda_.4} parent=79 // pred_region
          %593 = dma.done [#allocation12], 16
        $region104: #{_lambda_.4} parent=79 // pred_fallthru
          _
        // Predicated region
        $region105: #{_lambda_.4} parent=79 // pred_check
          %p594 = pneg %p267
        $region106: #{_lambda_.4} parent=79 // pred_check_branch
          %596 = sbr.rel (%p594) target = $region108
        $region107: #{_lambda_.4} parent=79 // pred_region
          %598 = dma.done [#allocation12], 16
        $region108: #{_lambda_.4} parent=79 // pred_fallthru
          _
        // Predicated region
        $region109: #{_lambda_.4} parent=79 // pred_check
          %p599 = pneg %p288
        $region110: #{_lambda_.4} parent=79 // pred_check_branch
          %601 = sbr.rel (%p599) target = $region112
        $region111: #{_lambda_.4} parent=79 // pred_region
          %603 = dma.done [#allocation15], 16
        $region112: #{_lambda_.4} parent=79 // pred_fallthru
          _
        // Predicated region
        $region113: #{_lambda_.4} parent=79 // pred_check
          %p604 = pneg %p309
        $region114: #{_lambda_.4} parent=79 // pred_check_branch
          %606 = sbr.rel (%p604) target = $region116
        $region115: #{_lambda_.4} parent=79 // pred_region
          %608 = dma.done [#allocation15], 16
        $region116: #{_lambda_.4} parent=79 // pred_fallthru
          _
        %p609 = scmp.lt.s32.totalorder %s36, 1
        %s610 = scalar_select %p609, %s36, 1
        %s611 = smul.addr %s610, 2
        %s612 = smul.addr %s611, 8
        %s613 = scalar_lea.vmem %s0, %s612
        %p614 = pneg %p57
        %p615 = pneg %p54
        %p616 = pneg %p78
        %p617 = pneg %p75
        %p618 = pneg %p99
        %p619 = pneg %p96
        %p620 = pneg %p120
        %p621 = pneg %p117
        %p622 = pneg %p141
        %p623 = pneg %p138
        %p624 = pneg %p162
        %p625 = pneg %p159
        %p626 = pneg %p183
        %p627 = pneg %p180
        %p628 = pneg %p204
        %p629 = pneg %p201
        %p630 = pneg %p225
        %p631 = pneg %p222
        %p632 = pneg %p246
        %p633 = pneg %p243
        %p634 = pneg %p267
        %p635 = pneg %p264
        %p636 = pneg %p288
        %p637 = pneg %p285
        %p638 = pneg %p309
        %p639 = pneg %p306
        %p640 = pneg %p330
        %p641 = pneg %p327
        %p642 = pneg %p351
        %p643 = pneg %p348
        %p644 = pneg %p377
        %p645 = pneg %p374
        %p646 = scmp.lt.s32.totalorder %s36, 1
        %s647 = scalar_select %p646, %s36, 1
        %s648 = smul.addr %s647, 2
        %s649 = smul.addr %s648, 8
        %s650 = scalar_lea.vmem %s15, %s649
        %p651 = pneg %p403
        %p652 = pneg %p400
        %s653 = sand.u32 %s390, 1
        %s654 = scalar_lea.sflag [#allocation4], %s653
        %s655 = sand.u32 %s390, 1
        %s656 = smul.addr %s655, 64
        %s657 = scalar_lea.vmem [#allocation17], %s656
        %p658 = scmp.lt.s32.totalorder %s36, 1
        %s659 = scalar_select %p658, %s36, 1
        %s660 = smul.addr %s659, 2
        %s661 = smul.addr %s660, 8
        %s662 = scalar_lea.vmem %s0, %s661
        %p663 = scmp.lt.s32.totalorder %s36, 1
        %s664 = scalar_select %p663, %s36, 1
        %s665 = smul.addr %s664, 2
        %s666 = smul.addr %s665, 8
        %s667 = scalar_lea.vmem %s15, %s666
        %v669 = vld [vmem:[%s662] sm:$0xff]
        %v670 = vld [vmem:[%s662 + $0x8] sm:$0xff]
        %v671 = vpack.c.bf16 %v670, %v669
        %v672 = vld [vmem:[%s1] sm:$0xf]
        %v673 = vld [vmem:[%s1 + $0x4] sm:$0xf]
        %v674 = vld [vmem:[%s1 + $0x8] sm:$0xf]
        %v675 = vld [vmem:[%s1 + $0xc] sm:$0xf]
        %v676 = vld [vmem:[%s2] sm:$0x1]
        %v678 = vperm.slane %v676, 0
        %v684 = vunpack.c.l.b16 %v672
        %v685 = vunpack.c.l.b16 %v673
        %v686 = vunpack.c.l.b16 %v674
        %v687 = vunpack.c.l.b16 %v675
        %v688 = vpack.c.b16 %v685, %v684
        %v689 = vpack.c.b16 %v687, %v686
        %vm692 = vcmask 261120
        %v694 = vsel %vm692, %v671, 0
        %696 = vmatpush.bf16.msra.mxu0 0
        %697 = vmatpush.bf16.msra.mxu0 0
        %698 = vmatpush.bf16.msra.mxu0 0
        %699 = vmatpush.bf16.msra.mxu0 0
        %700 = vmatpush.bf16.msra.mxu0 0
        %701 = vmatpush.bf16.msra.mxu0 0
        %702 = vmatpush.bf16.msra.mxu0 %v689
        %703 = vmatpush.bf16.msra.mxu0 %v688
        %704 = vmatmul.bf16.gmra.mxu0 %v694
        %v705 = vpop.f32.mrf.mxu0
        %v706 = vadd.f32 %v678, %v705
        %v707 = vpop.f32.mrf.mxu0
        %v708 = vadd.f32 %v678, %v707
        %709 = vdwg.mxu0
        %712 = vrot.lane.b32.xlu0 %v706, 120
        %v713 = vpop.permute.xlu0 %712
        %714 = vrot.lane.b32.xlu0 %v708, 120
        %v715 = vpop.permute.xlu0 %714
        %718 = vrot.lane.b32.xlu0 %v706, 112
        %v719 = vpop.permute.xlu0 %718
        %720 = vrot.lane.b32.xlu0 %v708, 112
        %v721 = vpop.permute.xlu0 %720
        %724 = vrot.lane.b32.xlu0 %v706, 104
        %v725 = vpop.permute.xlu0 %724
        %726 = vrot.lane.b32.xlu0 %v708, 104
        %v727 = vpop.permute.xlu0 %726
        %v730 = vpack.c.bf16 %v706, %v706
        %v731 = vpack.c.bf16 %v708, %v708
        %v732 = vpack.c.bf16 %v713, %v713
        %v733 = vpack.c.bf16 %v715, %v715
        %v734 = vpack.c.bf16 %v719, %v719
        %v735 = vpack.c.bf16 %v721, %v721
        %v736 = vpack.c.bf16 %v725, %v725
        %v737 = vpack.c.bf16 %v727, %v727
        %v740 = vunpack.c.l.b16 %v730
        %v741 = vunpack.c.l.b16 %v731
        %v742 = vpack.c.b16 %v741, %v740
        %743 = vrot.lane.b32.xlu0 %v742, 96
        %v744 = vpop.permute.xlu0 %743
        %vm745 = vcmask 64512
        %v747 = vsel %vm745, %v742, 0
        %v750 = vsel %vm745, %v744, 0
        %752 = vmatpush.bf16.xpose.msra.mxu0 0
        %753 = vmatpush.bf16.xpose.msra.mxu0 0
        %754 = vmatpush.bf16.xpose.msra.mxu0 0
        %755 = vmatpush.bf16.xpose.msra.mxu0 0
        %756 = vmatpush.bf16.xpose.msra.mxu0 0
        %757 = vmatpush.bf16.xpose.msra.mxu0 0
        %758 = vmatpush.bf16.xpose.msra.mxu0 0
        %759 = vmatpush.bf16.xpose.msra.mxu0 %v750
        %760 = vmatmul.bf16.gmra.mxu0 %v747
        %v761 = vpop.f32.mrf.mxu0
        %v762 = vadd.f32 0.0, %v761
        %v763 = vpop.f32.mrf.mxu0
        %v764 = vadd.f32 0.0, %v763
        %765 = vdwg.mxu0
        %v768 = vunpack.c.l.b16 %v732
        %v769 = vunpack.c.l.b16 %v733
        %v770 = vpack.c.b16 %v769, %v768
        %771 = vrot.lane.b32.xlu0 %v770, 96
        %v772 = vpop.permute.xlu0 %771
        %v774 = vsel %vm745, %v770, 0
        %v777 = vsel %vm745, %v772, 0
        %779 = vmatpush.bf16.xpose.msra.mxu0 0
        %780 = vmatpush.bf16.xpose.msra.mxu0 0
        %781 = vmatpush.bf16.xpose.msra.mxu0 0
        %782 = vmatpush.bf16.xpose.msra.mxu0 0
        %783 = vmatpush.bf16.xpose.msra.mxu0 0
        %784 = vmatpush.bf16.xpose.msra.mxu0 0
        %785 = vmatpush.bf16.xpose.msra.mxu0 0
        %786 = vmatpush.bf16.xpose.msra.mxu0 %v777
        %787 = vmatmul.bf16.gmra.mxu0 %v774
        %v788 = vpop.f32.mrf.mxu0
        %v789 = vadd.f32 0.0, %v788
        %v790 = vpop.f32.mrf.mxu0
        %v791 = vadd.f32 0.0, %v790
        %792 = vdwg.mxu0
        %v795 = vunpack.c.l.b16 %v734
        %v796 = vunpack.c.l.b16 %v735
        %v797 = vpack.c.b16 %v796, %v795
        %798 = vrot.lane.b32.xlu0 %v797, 96
        %v799 = vpop.permute.xlu0 %798
        %v801 = vsel %vm745, %v797, 0
        %v804 = vsel %vm745, %v799, 0
        %806 = vmatpush.bf16.xpose.msra.mxu0 0
        %807 = vmatpush.bf16.xpose.msra.mxu0 0
        %808 = vmatpush.bf16.xpose.msra.mxu0 0
        %809 = vmatpush.bf16.xpose.msra.mxu0 0
        %810 = vmatpush.bf16.xpose.msra.mxu0 0
        %811 = vmatpush.bf16.xpose.msra.mxu0 0
        %812 = vmatpush.bf16.xpose.msra.mxu0 0
        %813 = vmatpush.bf16.xpose.msra.mxu0 %v804
        %814 = vmatmul.bf16.gmra.mxu0 %v801
        %v815 = vpop.f32.mrf.mxu0
        %v816 = vadd.f32 0.0, %v815
        %v817 = vpop.f32.mrf.mxu0
        %v818 = vadd.f32 0.0, %v817
        %819 = vdwg.mxu0
        %v822 = vunpack.c.l.b16 %v736
        %v823 = vunpack.c.l.b16 %v737
        %v824 = vpack.c.b16 %v823, %v822
        %825 = vrot.lane.b32.xlu0 %v824, 96
        %v826 = vpop.permute.xlu0 %825
        %v828 = vsel %vm745, %v824, 0
        %v831 = vsel %vm745, %v826, 0
        %833 = vmatpush.bf16.xpose.msra.mxu0 0
        %834 = vmatpush.bf16.xpose.msra.mxu0 0
        %835 = vmatpush.bf16.xpose.msra.mxu0 0
        %836 = vmatpush.bf16.xpose.msra.mxu0 0
        %837 = vmatpush.bf16.xpose.msra.mxu0 0
        %838 = vmatpush.bf16.xpose.msra.mxu0 0
        %839 = vmatpush.bf16.xpose.msra.mxu0 0
        %840 = vmatpush.bf16.xpose.msra.mxu0 %v831
        %841 = vmatmul.bf16.gmra.mxu0 %v828
        %v842 = vpop.f32.mrf.mxu0
        %v843 = vadd.f32 0.0, %v842
        %v844 = vpop.f32.mrf.mxu0
        %v845 = vadd.f32 0.0, %v844
        %846 = vdwg.mxu0
        %v847 = vmul.f32 %v762, 0.35355338
        %v848 = vmul.f32 %v764, 0.35355338
        %v849 = vmul.f32 %v789, 0.35355338
        %v850 = vmul.f32 %v791, 0.35355338
        %v851 = vmul.f32 %v816, 0.35355338
        %v852 = vmul.f32 %v818, 0.35355338
        %v853 = vmul.f32 %v843, 0.35355338
        %v854 = vmul.f32 %v845, 0.35355338
        %vm855 = vcmask 130048
        %v856 = vsel %vm855, %v847, -inf
        %857 = vmax.xlane.f32.xlu0 %v856
        %v858 = vpop.xlane.xlu0 %857
        %v859 = vsel %vm855, %v848, -inf
        %860 = vmax.xlane.f32.xlu0 %v859
        %v861 = vpop.xlane.xlu0 %860
        %v862 = vsel %vm855, %v849, -inf
        %863 = vmax.xlane.f32.xlu0 %v862
        %v864 = vpop.xlane.xlu0 %863
        %v865 = vsel %vm855, %v850, -inf
        %866 = vmax.xlane.f32.xlu0 %v865
        %v867 = vpop.xlane.xlu0 %866
        %v868 = vsel %vm855, %v851, -inf
        %869 = vmax.xlane.f32.xlu0 %v868
        %v870 = vpop.xlane.xlu0 %869
        %v871 = vsel %vm855, %v852, -inf
        %872 = vmax.xlane.f32.xlu0 %v871
        %v873 = vpop.xlane.xlu0 %872
        %v874 = vsel %vm855, %v853, -inf
        %875 = vmax.xlane.f32.xlu0 %v874
        %v876 = vpop.xlane.xlu0 %875
        %v877 = vsel %vm855, %v854, -inf
        %878 = vmax.xlane.f32.xlu0 %v877
        %v879 = vpop.xlane.xlu0 %878
        %v880 = vsub.f32 %v847, %v858
        %v881 = vsub.f32 %v848, %v861
        %v882 = vsub.f32 %v849, %v864
        %v883 = vsub.f32 %v850, %v867
        %v884 = vsub.f32 %v851, %v870
        %v885 = vsub.f32 %v852, %v873
        %v886 = vsub.f32 %v853, %v876
        %v887 = vsub.f32 %v854, %v879
        %v888 = vmul.f32 %v880, 1.442695
        %v889 = vpow.pop %v888
        %v890 = vmul.f32 %v881, 1.442695
        %v891 = vpow.pop %v890
        %v892 = vmul.f32 %v882, 1.442695
        %v893 = vpow.pop %v892
        %v894 = vmul.f32 %v883, 1.442695
        %v895 = vpow.pop %v894
        %v896 = vmul.f32 %v884, 1.442695
        %v897 = vpow.pop %v896
        %v898 = vmul.f32 %v885, 1.442695
        %v899 = vpow.pop %v898
        %v900 = vmul.f32 %v886, 1.442695
        %v901 = vpow.pop %v900
        %v902 = vmul.f32 %v887, 1.442695
        %v903 = vpow.pop %v902
        %v904 = vsel %vm855, %v889, 0.0
        %905 = vadd.xlane.f32.xlu0 %v904
        %v906 = vpop.xlane.xlu0 %905
        %v907 = vsel %vm855, %v891, 0.0
        %908 = vadd.xlane.f32.xlu0 %v907
        %v909 = vpop.xlane.xlu0 %908
        %v910 = vsel %vm855, %v893, 0.0
        %911 = vadd.xlane.f32.xlu0 %v910
        %v912 = vpop.xlane.xlu0 %911
        %v913 = vsel %vm855, %v895, 0.0
        %914 = vadd.xlane.f32.xlu0 %v913
        %v915 = vpop.xlane.xlu0 %914
        %v916 = vsel %vm855, %v897, 0.0
        %917 = vadd.xlane.f32.xlu0 %v916
        %v918 = vpop.xlane.xlu0 %917
        %v919 = vsel %vm855, %v899, 0.0
        %920 = vadd.xlane.f32.xlu0 %v919
        %v921 = vpop.xlane.xlu0 %920
        %v922 = vsel %vm855, %v901, 0.0
        %923 = vadd.xlane.f32.xlu0 %v922
        %v924 = vpop.xlane.xlu0 %923
        %v925 = vsel %vm855, %v903, 0.0
        %926 = vadd.xlane.f32.xlu0 %v925
        %v927 = vpop.xlane.xlu0 %926
        %v928 = vrcp.pop %v906
        %v929 = vrcp.pop %v909
        %v930 = vrcp.pop %v912
        %v931 = vrcp.pop %v915
        %v932 = vrcp.pop %v918
        %v933 = vrcp.pop %v921
        %v934 = vrcp.pop %v924
        %v935 = vrcp.pop %v927
        %v936 = vmul.f32 %v889, %v928
        %v937 = vmul.f32 %v891, %v929
        %v938 = vmul.f32 %v893, %v930
        %v939 = vmul.f32 %v895, %v931
        %v940 = vmul.f32 %v897, %v932
        %v941 = vmul.f32 %v899, %v933
        %v942 = vmul.f32 %v901, %v934
        %v943 = vmul.f32 %v903, %v935
        %944 = vst.msk [vmem:[%s657] sm:$0xff] %vm855, %v936
        %945 = vst.msk [vmem:[%s657 + $0x8] sm:$0xff] %vm855, %v937
        %946 = vst.msk [vmem:[%s657 + $0x10] sm:$0xff] %vm855, %v938
        %947 = vst.msk [vmem:[%s657 + $0x18] sm:$0xff] %vm855, %v939
        %948 = vst.msk [vmem:[%s657 + $0x20] sm:$0xff] %vm855, %v940
        %949 = vst.msk [vmem:[%s657 + $0x28] sm:$0xff] %vm855, %v941
        %950 = vst.msk [vmem:[%s657 + $0x30] sm:$0xff] %vm855, %v942
        %951 = vst.msk [vmem:[%s657 + $0x38] sm:$0xff] %vm855, %v943
        %v952 = vpack.c.bf16 %v936, %v936
        %v953 = vpack.c.bf16 %v937, %v937
        %v954 = vpack.c.bf16 %v938, %v938
        %v955 = vpack.c.bf16 %v939, %v939
        %v956 = vpack.c.bf16 %v940, %v940
        %v957 = vpack.c.bf16 %v941, %v941
        %v958 = vpack.c.bf16 %v942, %v942
        %v959 = vpack.c.bf16 %v943, %v943
        %v962 = vunpack.c.l.b16 %v952
        %v963 = vunpack.c.l.b16 %v953
        %v964 = vpack.c.b16 %v963, %v962
        %965 = vrot.lane.b32.xlu0 %v742, 64
        %v966 = vpop.permute.xlu0 %965
        %v969 = vsel %vm855, %v964, 0
        %971 = vmatpush.bf16.msra.mxu0 0
        %972 = vmatpush.bf16.msra.mxu0 0
        %973 = vmatpush.bf16.msra.mxu0 0
        %974 = vmatpush.bf16.msra.mxu0 0
        %975 = vmatpush.bf16.msra.mxu0 0
        %976 = vmatpush.bf16.msra.mxu0 0
        %977 = vmatpush.bf16.msra.mxu0 0
        %978 = vmatpush.bf16.msra.mxu0 %v966
        %979 = vmatmul.bf16.gmra.mxu0 %v969
        %v980 = vpop.f32.mrf.mxu0
        %v981 = vadd.f32 0.0, %v980
        %v982 = vpop.f32.mrf.mxu0
        %v983 = vadd.f32 0.0, %v982
        %984 = vdwg.mxu0
        %v987 = vunpack.c.l.b16 %v954
        %v988 = vunpack.c.l.b16 %v955
        %v989 = vpack.c.b16 %v988, %v987
        %990 = vrot.lane.b32.xlu0 %v770, 64
        %v991 = vpop.permute.xlu0 %990
        %v994 = vsel %vm855, %v989, 0
        %996 = vmatpush.bf16.msra.mxu0 0
        %997 = vmatpush.bf16.msra.mxu0 0
        %998 = vmatpush.bf16.msra.mxu0 0
        %999 = vmatpush.bf16.msra.mxu0 0
        %1000 = vmatpush.bf16.msra.mxu0 0
        %1001 = vmatpush.bf16.msra.mxu0 0
        %1002 = vmatpush.bf16.msra.mxu0 0
        %1003 = vmatpush.bf16.msra.mxu0 %v991
        %1004 = vmatmul.bf16.gmra.mxu0 %v994
        %v1005 = vpop.f32.mrf.mxu0
        %v1006 = vadd.f32 0.0, %v1005
        %v1007 = vpop.f32.mrf.mxu0
        %v1008 = vadd.f32 0.0, %v1007
        %1009 = vdwg.mxu0
        %v1012 = vunpack.c.l.b16 %v956
        %v1013 = vunpack.c.l.b16 %v957
        %v1014 = vpack.c.b16 %v1013, %v1012
        %1015 = vrot.lane.b32.xlu0 %v797, 64
        %v1016 = vpop.permute.xlu0 %1015
        %v1019 = vsel %vm855, %v1014, 0
        %1021 = vmatpush.bf16.msra.mxu0 0
        %1022 = vmatpush.bf16.msra.mxu0 0
        %1023 = vmatpush.bf16.msra.mxu0 0
        %1024 = vmatpush.bf16.msra.mxu0 0
        %1025 = vmatpush.bf16.msra.mxu0 0
        %1026 = vmatpush.bf16.msra.mxu0 0
        %1027 = vmatpush.bf16.msra.mxu0 0
        %1028 = vmatpush.bf16.msra.mxu0 %v1016
        %1029 = vmatmul.bf16.gmra.mxu0 %v1019
        %v1030 = vpop.f32.mrf.mxu0
        %v1031 = vadd.f32 0.0, %v1030
        %v1032 = vpop.f32.mrf.mxu0
        %v1033 = vadd.f32 0.0, %v1032
        %1034 = vdwg.mxu0
        %v1037 = vunpack.c.l.b16 %v958
        %v1038 = vunpack.c.l.b16 %v959
        %v1039 = vpack.c.b16 %v1038, %v1037
        %1040 = vrot.lane.b32.xlu0 %v824, 64
        %v1041 = vpop.permute.xlu0 %1040
        %v1044 = vsel %vm855, %v1039, 0
        %1046 = vmatpush.bf16.msra.mxu0 0
        %1047 = vmatpush.bf16.msra.mxu0 0
        %1048 = vmatpush.bf16.msra.mxu0 0
        %1049 = vmatpush.bf16.msra.mxu0 0
        %1050 = vmatpush.bf16.msra.mxu0 0
        %1051 = vmatpush.bf16.msra.mxu0 0
        %1052 = vmatpush.bf16.msra.mxu0 0
        %1053 = vmatpush.bf16.msra.mxu0 %v1041
        %1054 = vmatmul.bf16.gmra.mxu0 %v1044
        %v1055 = vpop.f32.mrf.mxu0
        %v1056 = vadd.f32 0.0, %v1055
        %v1057 = vpop.f32.mrf.mxu0
        %v1058 = vadd.f32 0.0, %v1057
        %1059 = vdwg.mxu0
        %1062 = vrot.lane.b32.xlu0 %v1006, 8
        %v1063 = vpop.permute.xlu0 %1062
        %1064 = vrot.lane.b32.xlu0 %v1008, 8
        %v1065 = vpop.permute.xlu0 %1064
        %1070 = vrot.lane.b32.xlu0 %v1031, 16
        %v1071 = vpop.permute.xlu0 %1070
        %1072 = vrot.lane.b32.xlu0 %v1033, 16
        %v1073 = vpop.permute.xlu0 %1072
        %1078 = vrot.lane.b32.xlu0 %v1056, 24
        %v1079 = vpop.permute.xlu0 %1078
        %1080 = vrot.lane.b32.xlu0 %v1058, 24
        %v1081 = vpop.permute.xlu0 %1080
        %v1084 = vsel %vm745, %v981, %v1063
        %v1085 = vsel %vm745, %v983, %v1065
        %v1086 = vsel %vm855, %v1084, %v1071
        %v1087 = vsel %vm855, %v1085, %v1073
        %vm1088 = vcmask 195584
        %v1089 = vsel %vm1088, %v1086, %v1079
        %v1090 = vsel %vm1088, %v1087, %v1081
        %v1091 = vpack.c.bf16 %v1090, %v1089
        %v1092 = vld [vmem:[#allocation2] sm:$0xf]
        %v1093 = vld [vmem:[#allocation2 + $0x4] sm:$0xf]
        %v1094 = vld [vmem:[#allocation2 + $0x8] sm:$0xf]
        %v1095 = vld [vmem:[#allocation2 + $0xc] sm:$0xf]
        %v1096 = vld [vmem:[#allocation5] sm:$0x1]
        %v1098 = vperm.slane %v1096, 0
        %v1104 = vunpack.c.l.b16 %v1092
        %v1105 = vunpack.c.l.b16 %v1093
        %v1106 = vunpack.c.l.b16 %v1094
        %v1107 = vunpack.c.l.b16 %v1095
        %v1108 = vpack.c.b16 %v1105, %v1104
        %v1109 = vpack.c.b16 %v1107, %v1106
        %v1113 = vsel %vm692, %v1091, 0
        %1115 = vmatpush.bf16.msra.mxu0 0
        %1116 = vmatpush.bf16.msra.mxu0 0
        %1117 = vmatpush.bf16.msra.mxu0 0
        %1118 = vmatpush.bf16.msra.mxu0 0
        %1119 = vmatpush.bf16.msra.mxu0 0
        %1120 = vmatpush.bf16.msra.mxu0 0
        %1121 = vmatpush.bf16.msra.mxu0 %v1109
        %1122 = vmatpush.bf16.msra.mxu0 %v1108
        %1123 = vmatmul.bf16.gmra.mxu0 %v1113
        %v1124 = vpop.f32.mrf.mxu0
        %v1125 = vadd.f32 %v1098, %v1124
        %v1126 = vpop.f32.mrf.mxu0
        %v1127 = vadd.f32 %v1098, %v1126
        %1128 = vdwg.mxu0
        %v1129 = vadd.f32 %v669, %v1125
        %v1130 = vadd.f32 %v670, %v1127
        %v1131 = vld [vmem:[#allocation11] sm:$0x1]
        %v1132 = vld [vmem:[#allocation13] sm:$0x1]
        %v1133 = vsel %vm692, %v1129, 0.0
        %1134 = vadd.xlane.f32.xlu0 %v1133
        %v1135 = vpop.xlane.xlu0 %1134
        %v1136 = vsel %vm692, %v1130, 0.0
        %1137 = vadd.xlane.f32.xlu0 %v1136
        %v1138 = vpop.xlane.xlu0 %1137
        %v1139 = vrcp.pop 32.0
        %v1140 = vmul.f32 32.0, %v1139
        %v1141 = vsub.f32 1.0, %v1140
        %v1142 = vmul.f32 %v1139, %v1141
        %v1143 = vadd.f32 %v1139, %v1142
        %vm1144 = vweird.f32 %v1139
        %v1145 = vsel %vm1144, %v1139, %v1143
        %v1146 = vmul.f32 %v1135, %v1145
        %v1147 = vmul.f32 %v1138, %v1145
        %v1148 = vsub.f32 %v1129, %v1146
        %v1149 = vsub.f32 %v1130, %v1147
        %v1150 = vmul.f32 %v1148, %v1148
        %v1151 = vmul.f32 %v1149, %v1149
        %v1152 = vsel %vm692, %v1150, 0.0
        %1153 = vadd.xlane.f32.xlu0 %v1152
        %v1154 = vpop.xlane.xlu0 %1153
        %v1155 = vsel %vm692, %v1151, 0.0
        %1156 = vadd.xlane.f32.xlu0 %v1155
        %v1157 = vpop.xlane.xlu0 %1156
        %v1158 = vmul.f32 %v1154, %v1145
        %v1159 = vmul.f32 %v1157, %v1145
        %v1160 = vadd.f32 %v1158, 1e-05
        %v1161 = vadd.f32 %v1159, 1e-05
        %v1162 = vrsqrt.pop %v1160
        %v1163 = vmul.f32 %v1162, %v1160
        %v1164 = vmul.f32 %v1163, %v1162
        %v1165 = vmul.f32 0.5, %v1164
        %v1166 = vsub.f32 1.5, %v1165
        %v1167 = vmul.f32 %v1162, %v1166
        %vm1168 = vweird.f32 %v1160
        %vm1169 = vweird.f32 %v1162
        %vm1170 = vmor %vm1168, %vm1169
        %v1171 = vsel %vm1170, %v1162, %v1167
        %v1172 = vrsqrt.pop %v1161
        %v1173 = vmul.f32 %v1172, %v1161
        %v1174 = vmul.f32 %v1173, %v1172
        %v1175 = vmul.f32 0.5, %v1174
        %v1176 = vsub.f32 1.5, %v1175
        %v1177 = vmul.f32 %v1172, %v1176
        %vm1178 = vweird.f32 %v1161
        %vm1179 = vweird.f32 %v1172
        %vm1180 = vmor %vm1178, %vm1179
        %v1181 = vsel %vm1180, %v1172, %v1177
        %v1182 = vmul.f32 %v1148, %v1171
        %v1183 = vmul.f32 %v1149, %v1181
        %v1185 = vperm.slane %v1131, 0
        %v1187 = vmul.f32 %v1182, %v1185
        %v1188 = vmul.f32 %v1183, %v1185
        %v1190 = vperm.slane %v1132, 0
        %v1192 = vadd.f32 %v1187, %v1190
        %v1193 = vadd.f32 %v1188, %v1190
        %v1194 = vpack.c.bf16 %v1193, %v1192
        %v1195 = vld [vmem:[#allocation7] sm:$0xf]
        %v1196 = vld [vmem:[#allocation7 + $0x4] sm:$0xf]
        %v1197 = vld [vmem:[#allocation7 + $0x8] sm:$0xf]
        %v1198 = vld [vmem:[#allocation7 + $0xc] sm:$0xf]
        %v1199 = vld [vmem:[#allocation8] sm:$0x1]
        %v1201 = vperm.slane %v1199, 0
        %v1207 = vunpack.c.l.b16 %v1195
        %v1208 = vunpack.c.l.b16 %v1196
        %v1209 = vunpack.c.l.b16 %v1197
        %v1210 = vunpack.c.l.b16 %v1198
        %v1211 = vpack.c.b16 %v1208, %v1207
        %v1212 = vpack.c.b16 %v1210, %v1209
        %v1216 = vsel %vm692, %v1194, 0
        %1218 = vmatpush.bf16.msra.mxu0 0
        %1219 = vmatpush.bf16.msra.mxu0 0
        %1220 = vmatpush.bf16.msra.mxu0 0
        %1221 = vmatpush.bf16.msra.mxu0 0
        %1222 = vmatpush.bf16.msra.mxu0 0
        %1223 = vmatpush.bf16.msra.mxu0 0
        %1224 = vmatpush.bf16.msra.mxu0 %v1212
        %1225 = vmatpush.bf16.msra.mxu0 %v1211
        %1226 = vmatmul.bf16.gmra.mxu0 %v1216
        %v1227 = vpop.f32.mrf.mxu0
        %v1228 = vadd.f32 %v1201, %v1227
        %v1229 = vpop.f32.mrf.mxu0
        %v1230 = vadd.f32 %v1201, %v1229
        %1231 = vdwg.mxu0
        %v1232 = vmax.f32 %v1228, 0.0
        %v1233 = vmax.f32 %v1230, 0.0
        %v1234 = vpack.c.bf16 %v1233, %v1232
        %v1235 = vld [vmem:[%s7] sm:$0xf]
        %v1236 = vld [vmem:[%s7 + $0x4] sm:$0xf]
        %v1237 = vld [vmem:[%s7 + $0x8] sm:$0xf]
        %v1238 = vld [vmem:[%s7 + $0xc] sm:$0xf]
        %v1239 = vld [vmem:[%s7 + $0x10] sm:$0xf]
        %v1240 = vld [vmem:[%s7 + $0x14] sm:$0xf]
        %v1241 = vld [vmem:[%s7 + $0x18] sm:$0xf]
        %v1242 = vld [vmem:[%s7 + $0x1c] sm:$0xf]
        %v1243 = vld [vmem:[#allocation10] sm:$0x1]
        %v1245 = vperm.slane %v1243, 0
        %v1255 = vunpack.c.l.b16 %v1235
        %v1256 = vunpack.c.l.b16 %v1236
        %v1257 = vunpack.c.l.b16 %v1237
        %v1258 = vunpack.c.l.b16 %v1238
        %v1259 = vunpack.c.l.b16 %v1239
        %v1260 = vunpack.c.l.b16 %v1240
        %v1261 = vunpack.c.l.b16 %v1241
        %v1262 = vunpack.c.l.b16 %v1242
        %v1263 = vpack.c.b16 %v1256, %v1255
        %v1264 = vpack.c.b16 %v1258, %v1257
        %v1265 = vpack.c.b16 %v1260, %v1259
        %v1266 = vpack.c.b16 %v1262, %v1261
        %vm1271 = vcmask 523264
        %v1273 = vsel %vm1271, %v1234, 0
        %1275 = vmatpush.bf16.msra.mxu0 0
        %1276 = vmatpush.bf16.msra.mxu0 0
        %1277 = vmatpush.bf16.msra.mxu0 0
        %1278 = vmatpush.bf16.msra.mxu0 0
        %1279 = vmatpush.bf16.msra.mxu0 %v1266
        %1280 = vmatpush.bf16.msra.mxu0 %v1265
        %1281 = vmatpush.bf16.msra.mxu0 %v1264
        %1282 = vmatpush.bf16.msra.mxu0 %v1263
        %1283 = vmatmul.bf16.gmra.mxu0 %v1273
        %v1284 = vpop.f32.mrf.mxu0
        %v1285 = vadd.f32 %v1245, %v1284
        %v1286 = vpop.f32.mrf.mxu0
        %v1287 = vadd.f32 %v1245, %v1286
        %1288 = vdwg.mxu0
        %v1289 = vadd.f32 %v1192, %v1285
        %v1290 = vadd.f32 %v1193, %v1287
        %v1291 = vld [vmem:[#allocation14] sm:$0x1]
        %v1292 = vld [vmem:[#allocation16] sm:$0x1]
        %v1293 = vsel %vm692, %v1289, 0.0
        %1294 = vadd.xlane.f32.xlu0 %v1293
        %v1295 = vpop.xlane.xlu0 %1294
        %v1296 = vsel %vm692, %v1290, 0.0
        %1297 = vadd.xlane.f32.xlu0 %v1296
        %v1298 = vpop.xlane.xlu0 %1297
        %v1299 = vmul.f32 %v1295, %v1145
        %v1300 = vmul.f32 %v1298, %v1145
        %v1301 = vsub.f32 %v1289, %v1299
        %v1302 = vsub.f32 %v1290, %v1300
        %v1303 = vmul.f32 %v1301, %v1301
        %v1304 = vmul.f32 %v1302, %v1302
        %v1305 = vsel %vm692, %v1303, 0.0
        %1306 = vadd.xlane.f32.xlu0 %v1305
        %v1307 = vpop.xlane.xlu0 %1306
        %v1308 = vsel %vm692, %v1304, 0.0
        %1309 = vadd.xlane.f32.xlu0 %v1308
        %v1310 = vpop.xlane.xlu0 %1309
        %v1311 = vmul.f32 %v1307, %v1145
        %v1312 = vmul.f32 %v1310, %v1145
        %v1313 = vadd.f32 %v1311, 1e-05
        %v1314 = vadd.f32 %v1312, 1e-05
        %v1315 = vrsqrt.pop %v1313
        %v1316 = vmul.f32 %v1315, %v1313
        %v1317 = vmul.f32 %v1316, %v1315
        %v1318 = vmul.f32 0.5, %v1317
        %v1319 = vsub.f32 1.5, %v1318
        %v1320 = vmul.f32 %v1315, %v1319
        %vm1321 = vweird.f32 %v1313
        %vm1322 = vweird.f32 %v1315
        %vm1323 = vmor %vm1321, %vm1322
        %v1324 = vsel %vm1323, %v1315, %v1320
        %v1325 = vrsqrt.pop %v1314
        %v1326 = vmul.f32 %v1325, %v1314
        %v1327 = vmul.f32 %v1326, %v1325
        %v1328 = vmul.f32 0.5, %v1327
        %v1329 = vsub.f32 1.5, %v1328
        %v1330 = vmul.f32 %v1325, %v1329
        %vm1331 = vweird.f32 %v1314
        %vm1332 = vweird.f32 %v1325
        %vm1333 = vmor %vm1331, %vm1332
        %v1334 = vsel %vm1333, %v1325, %v1330
        %v1335 = vmul.f32 %v1301, %v1324
        %v1336 = vmul.f32 %v1302, %v1334
        %v1338 = vperm.slane %v1291, 0
        %v1340 = vmul.f32 %v1335, %v1338
        %v1341 = vmul.f32 %v1336, %v1338
        %v1343 = vperm.slane %v1292, 0
        %v1345 = vadd.f32 %v1340, %v1343
        %v1346 = vadd.f32 %v1341, %v1343
        %1347 = vst.msk [vmem:[%s667] sm:$0xff] %vm692, %v1345
        %1348 = vst.msk [vmem:[%s667 + $0x8] sm:$0xff] %vm692, %v1346
        %p1349 = scmp.lt.s32.totalorder %s36, 1
        %s1350 = scalar_select %p1349, %s36, 1
        %s1351 = smul.addr %s1350, 2
        %s1352 = smul.addr %s1351, 8
        %s1353 = scalar_lea.vmem %s15, %s1352
        %s1354 = sand.u32 %s390, 1
        %s1355 = scalar_lea.sflag [#allocation4], %s1354
        %s1356 = sand.u32 %s390, 1
        %s1357 = smul.addr %s1356, 64
        %s1358 = scalar_lea.vmem [#allocation17], %s1357
        // Predicated region
        $region117: #{_lambda_.4} parent=79 // pred_check
          %p1359 = pneg %p374
        $region118: #{_lambda_.4} parent=79 // pred_check_branch
          %1361 = sbr.rel (%p1359) target = $region120
        $region119: #{_lambda_.4} parent=79 // pred_region
          _
        $region120: #{_lambda_.4} parent=79 // pred_fallthru
          _
        // Predicated region
        $region121: #{_lambda_.4} parent=79 // pred_check
          %p1362 = pneg %p400
        $region122: #{_lambda_.4} parent=79 // pred_check_branch
          %1364 = sbr.rel (%p1362) target = $region124
        $region123: #{_lambda_.4} parent=79 // pred_region
          %1366 = vsyncadd %s1355, 0
          %s1367 = smul.addr %s36, 8
          %s1368 = smul.addr %s1367, 8
          %s1369 = scalar_lea.hbm %s16, %s1368
          %s1370 = sshll.u32 %s1358, 4
          %s1371 = int_to_ptr.vmem [resolvable:$true] %s1370
          %s1372 = sshll.u32 %s1369, 4
          %s1373 = int_to_ptr.hbm [resolvable:$true] %s1372
          %1378 = dma.vmem_to_hbm [thread:$0]  %s1371, 1024, %s1373, %s1355, 128, 128, 8
        $region124: #{_lambda_.4} parent=79 // pred_fallthru
          _
      $region80: #{_lambda_.4} parent=5 // pred_fallthru
        _
      %p1379 = scmp.le.s32.totalorder 2, %s31
      // Predicated region
      $region125: #{_lambda_.4} parent=5 // pred_check
        %p1380 = pneg %p1379
      $region126: #{_lambda_.4} parent=5 // pred_check_branch
        %1382 = sbr.rel (%p1380) target = $region128
      $region127: #{_lambda_.4} parent=5 // pred_region
        %s1383 = ssub.s32 %s31, 2
        // Predicated region
        $region129: #{_lambda_.4} parent=127 // pred_check
          %p1384 = pneg %p380
        $region130: #{_lambda_.4} parent=127 // pred_check_branch
          %1386 = sbr.rel (%p1384) target = $region132
        $region131: #{_lambda_.4} parent=127 // pred_region
          %p1387 = scmp.lt.s32.totalorder %s37, 1
          %s1388 = scalar_select %p1387, %s37, 1
          %s1389 = smul.addr %s1388, 2
          %s1390 = smul.addr %s1389, 8
          %s1391 = scalar_lea.vmem %s15, %s1390
        $region132: #{_lambda_.4} parent=127 // pred_fallthru
          _
        // Predicated region
        $region133: #{_lambda_.4} parent=127 // pred_check
          %p1392 = pneg %p406
        $region134: #{_lambda_.4} parent=127 // pred_check_branch
          %1394 = sbr.rel (%p1392) target = $region136
        $region135: #{_lambda_.4} parent=127 // pred_region
          %s1395 = sand.u32 %s391, 1
          %s1396 = scalar_lea.sflag [#allocation4], %s1395
          %s1397 = sand.u32 %s391, 1
          %s1398 = smul.addr %s1397, 64
          %s1399 = scalar_lea.vmem [#allocation17], %s1398
          %1401 = dma.done %s1396, 1024
        $region136: #{_lambda_.4} parent=127 // pred_fallthru
          _
      $region128: #{_lambda_.4} parent=5 // pred_fallthru
        _
    $region6: #{_lambda_.4} parent=1 // loop_footer
      %s35 = sadd.s32 1, %s31
    $region7: #{_lambda_.4} parent=1 // loop_footer_branch
      %30 = sbr.rel target = $region3
    $region8: #{_lambda_.4} parent=1 // loop_exit
      _
    %1402 = vsyncpa [#allocation3], 1
    %s1403 = scalar_lea.sflag [#allocation3], 1
    %1404 = vsyncpa %s1403, 1
    %1405 = vsyncpa [#allocation6], 1
    %1406 = vsyncpa [#allocation9], 1
    %1407 = vsyncpa [#allocation12], 1
    %1408 = vsyncpa [#allocation15], 1
    %1409 = vsyncpa [#allocation4], 1
    %s1410 = scalar_lea.sflag [#allocation4], 1
    %1411 = vsyncpa %s1410, 1

// kernel: _lambda_.7
$region0: #{_lambda_.7}
  #allocation0 [shape = 'u32[]', space=smem, size = 0x4, offset = 0x4, fixed_abs, tag = 'smem constant byte address 0x4 - core index']
  #allocation1 [shape = 'u32[72,128]{1,0:T(1,128)}', space=vmem, size = 0x9000, scoped, tag = 'internal scratch']
  %s0 = inlined_call_operand.vmem [shape: f32[2,9,32], index: 0, kind: input, shape index: {}]
  %s1 = inlined_call_operand.vmem [shape: bf16[32,96], index: 1, kind: input, shape index: {}]
  %s2 = inlined_call_operand.vmem [shape: f32[1,96], index: 2, kind: input, shape index: {}]
  %s3 = inlined_call_operand.hbm [shape: bf16[32,32], index: 3, kind: input, shape index: {}]
  %s4 = inlined_call_operand.vmem [shape: f32[1,32], index: 4, kind: input, shape index: {}]
  %s5 = inlined_call_operand.hbm [shape: bf16[32,64], index: 5, kind: input, shape index: {}]
  %s6 = inlined_call_operand.vmem [shape: f32[1,64], index: 6, kind: input, shape index: {}]
  %s7 = inlined_call_operand.vmem [shape: bf16[64,32], index: 7, kind: input, shape index: {}]
  %s8 = inlined_call_operand.vmem [shape: f32[1,32], index: 8, kind: input, shape index: {}]
  %s9 = inlined_call_operand.vmem [shape: f32[1,32], index: 9, kind: input, shape index: {}]
  %s10 = inlined_call_operand.hbm [shape: f32[1,32], index: 10, kind: input, shape index: {}]
  %s11 = inlined_call_operand.vmem [shape: f32[1,32], index: 11, kind: input, shape index: {}]
  %s12 = inlined_call_operand.hbm [shape: f32[1,32], index: 12, kind: input, shape index: {}]
  %s13 = inlined_call_operand.vmem [shape: f32[1,32], index: 13, kind: input, shape index: {}]
  %s14 = inlined_call_operand.vmem [shape: f32[1,32], index: 14, kind: input, shape index: {}]
  %s15 = inlined_call_operand.vmem [shape: f32[2,9,32], index: 15, kind: output, shape index: {0}]
  %s16 = inlined_call_operand.vmem [shape: f32[2,4,9,9], index: 16, kind: output, shape index: {1}]
  %17 = xla_tuple %s15, %s16
  %s18 = sld [smem:[#allocation0]]
  $region117: #{_lambda_.7} parent=0
    _
  %s20 = ssub.s32 1, %s18
  %s21 = scalar_select 0, %s20, %s18
  $region1: #{_lambda_.7} parent=0
    #allocation2 [shape = 'u8[8192]{0}', space=vmem, size = 0x2000, scoped, tag = 'input window, operand 3, single buffered']
    #allocation3 [shape = 's32[2]{0}', space=sflag, size = 0x8, scoped, tag = 'scoped memory for _lambda_.7']
    #allocation4 [shape = 'u8[8192]{0}', space=vmem, size = 0x2000, scoped, tag = 'input window, operand 5, single buffered']
    #allocation5 [shape = 's32[1]{0}', space=sflag, size = 0x4, scoped, tag = 'scoped memory for _lambda_.7']
    #allocation6 [shape = 'u8[512]{0}', space=vmem, size = 0x400, scoped, tag = 'input window, operand 10, single buffered']
    #allocation7 [shape = 'u8[512]{0}', space=vmem, size = 0x400, scoped, tag = 'input window, operand 12, single buffered']
    #allocation8 [shape = 's32[1]{0}', space=sflag, size = 0x4, scoped, tag = 'scoped memory for _lambda_.7']
    %22 = vsyncpa [#allocation3], 0
    %23 = vsyncpa [#allocation5], 0
    %24 = vsyncpa [#allocation8], 0
    loop: start=0, step=1, limit=4
    $region2: #{_lambda_.7} parent=1 // loop_pre_header
      _
    $region3: #{_lambda_.7} parent=1 // loop_header
      %s26 = sphi 0, %s30
      %p27 = scmp.ge.s32.totalorder %s26, 4
      %s36 = sphi 0, %s38
      %s39 = sphi 0, %s36
      %s40 = sphi 0, %s39
      %s56 = sphi 0, %s40
      %s60 = sphi 0, %s60
      %s62 = sphi 0, %s60
      %s63 = sphi 0, %s62
      %s77 = sphi 0, %s63
      %s81 = sphi 0, %s81
      %s83 = sphi 0, %s81
      %s84 = sphi 0, %s83
      %s98 = sphi 0, %s84
      %s102 = sphi 0, %s102
      %s104 = sphi 0, %s102
      %s105 = sphi 0, %s104
      %s119 = sphi 0, %s105
      %s123 = sphi 0, %s123
      %s125 = sphi 0, %s123
      %s126 = sphi 0, %s125
      %s140 = sphi 0, %s126
      %s144 = sphi 0, %s144
      %s146 = sphi 0, %s144
      %s147 = sphi 0, %s146
      %s161 = sphi 0, %s147
      %s165 = sphi 0, %s165
      %s167 = sphi 0, %s165
      %s168 = sphi 0, %s167
      %s182 = sphi 0, %s168
      %s186 = sphi 0, %s186
      %s188 = sphi 0, %s186
      %s189 = sphi 0, %s188
      %s203 = sphi 0, %s189
      %s207 = sphi 0, %s207
      %s209 = sphi 0, %s207
      %s210 = sphi 0, %s209
      %s224 = sphi 0, %s210
      %s228 = sphi 0, %s228
      %s230 = sphi 0, %s228
      %s231 = sphi 0, %s230
      %s245 = sphi 0, %s231
      %s249 = sphi 0, %s249
      %s251 = sphi 0, %s249
      %s252 = sphi 0, %s251
      %s266 = sphi 0, %s252
      %s270 = sphi 0, %s270
      %s272 = sphi 0, %s270
      %s273 = sphi 0, %s272
      %s287 = sphi 0, %s273
      %s291 = sphi 0, %s291
      %s293 = sphi 0, %s291
      %s294 = sphi 0, %s293
      %s308 = sphi 0, %s294
      %s312 = sphi 0, %s312
      %s314 = sphi 0, %s312
      %s315 = sphi 0, %s314
      %s329 = sphi 0, %s315
      %s333 = sphi 0, %s333
      %s335 = sphi 0, %s333
      %s336 = sphi 0, %s335
      %s350 = sphi 0, %s336
      %s356 = sphi 0, %s358
      %s359 = sphi 0, %s356
      %s360 = sphi 0, %s359
      %s376 = sphi 0, %s360
      %s382 = sphi 0, %s384
      %s385 = sphi 0, %s382
      %s386 = sphi 0, %s385
      %s402 = sphi 0, %s386
    $region4: #{_lambda_.7} parent=1 // loop_header_branch
      %29 = sbr.rel (%p27) target = $region8
    $region5: #{_lambda_.7} parent=1 // loop_body
      %s31 = ssub.s32 %s26, 1
      %s32 = ssub.s32 %s26, 2
      %s33 = sadd.s32 %s26, 1
      %s34 = ssub.s32 %s26, %s33
      %p35 = scmp.eq.s32.totalorder %s34, 0
      %s37 = sadd.s32 %s36, 1
      %s38 = scalar_select %p35, %s36, %s37
      %p41 = pneg %p35
      %p42 = scmp.eq.s32.totalorder %s26, 1
      %p43 = por %p41, %p42
      %p44 = scmp.ne.s32.totalorder %s36, %s39
      %p45 = scmp.eq.s32.totalorder %s26, 0
      %p46 = por %p44, %p45
      %p47 = scmp.ne.s32.totalorder %s36, %s39
      %p48 = scmp.eq.s32.totalorder %s31, 1
      %p49 = por %p47, %p48
      %p50 = scmp.ne.s32.totalorder %s39, %s40
      %p51 = scmp.eq.s32.totalorder %s31, 0
      %p52 = por %p50, %p51
      %p53 = scmp.ne.s32.totalorder %s39, %s40
      %p54 = scmp.eq.s32.totalorder %s32, 1
      %p55 = por %p53, %p54
      %p57 = scmp.ne.s32.totalorder %s40, %s56
      %p58 = scmp.eq.s32.totalorder %s32, 0
      %p59 = por %p57, %p58
      %s61 = sadd.s32 %s60, 1
      %p64 = scmp.eq.s32.totalorder %s26, 1
      %p65 = scmp.ne.s32.totalorder %s60, %s62
      %p66 = scmp.eq.s32.totalorder %s26, 0
      %p67 = por %p65, %p66
      %p68 = scmp.ne.s32.totalorder %s60, %s62
      %p69 = scmp.eq.s32.totalorder %s31, 1
      %p70 = por %p68, %p69
      %p71 = scmp.ne.s32.totalorder %s62, %s63
      %p72 = scmp.eq.s32.totalorder %s31, 0
      %p73 = por %p71, %p72
      %p74 = scmp.ne.s32.totalorder %s62, %s63
      %p75 = scmp.eq.s32.totalorder %s32, 1
      %p76 = por %p74, %p75
      %p78 = scmp.ne.s32.totalorder %s63, %s77
      %p79 = scmp.eq.s32.totalorder %s32, 0
      %p80 = por %p78, %p79
      %s82 = sadd.s32 %s81, 1
      %p85 = scmp.eq.s32.totalorder %s26, 1
      %p86 = scmp.ne.s32.totalorder %s81, %s83
      %p87 = scmp.eq.s32.totalorder %s26, 0
      %p88 = por %p86, %p87
      %p89 = scmp.ne.s32.totalorder %s81, %s83
      %p90 = scmp.eq.s32.totalorder %s31, 1
      %p91 = por %p89, %p90
      %p92 = scmp.ne.s32.totalorder %s83, %s84
      %p93 = scmp.eq.s32.totalorder %s31, 0
      %p94 = por %p92, %p93
      %p95 = scmp.ne.s32.totalorder %s83, %s84
      %p96 = scmp.eq.s32.totalorder %s32, 1
      %p97 = por %p95, %p96
      %p99 = scmp.ne.s32.totalorder %s84, %s98
      %p100 = scmp.eq.s32.totalorder %s32, 0
      %p101 = por %p99, %p100
      %s103 = sadd.s32 %s102, 1
      %p106 = scmp.eq.s32.totalorder %s26, 1
      %p107 = scmp.ne.s32.totalorder %s102, %s104
      %p108 = scmp.eq.s32.totalorder %s26, 0
      %p109 = por %p107, %p108
      %p110 = scmp.ne.s32.totalorder %s102, %s104
      %p111 = scmp.eq.s32.totalorder %s31, 1
      %p112 = por %p110, %p111
      %p113 = scmp.ne.s32.totalorder %s104, %s105
      %p114 = scmp.eq.s32.totalorder %s31, 0
      %p115 = por %p113, %p114
      %p116 = scmp.ne.s32.totalorder %s104, %s105
      %p117 = scmp.eq.s32.totalorder %s32, 1
      %p118 = por %p116, %p117
      %p120 = scmp.ne.s32.totalorder %s105, %s119
      %p121 = scmp.eq.s32.totalorder %s32, 0
      %p122 = por %p120, %p121
      %s124 = sadd.s32 %s123, 1
      %p127 = scmp.eq.s32.totalorder %s26, 1
      %p128 = scmp.ne.s32.totalorder %s123, %s125
      %p129 = scmp.eq.s32.totalorder %s26, 0
      %p130 = por %p128, %p129
      %p131 = scmp.ne.s32.totalorder %s123, %s125
      %p132 = scmp.eq.s32.totalorder %s31, 1
      %p133 = por %p131, %p132
      %p134 = scmp.ne.s32.totalorder %s125, %s126
      %p135 = scmp.eq.s32.totalorder %s31, 0
      %p136 = por %p134, %p135
      %p137 = scmp.ne.s32.totalorder %s125, %s126
      %p138 = scmp.eq.s32.totalorder %s32, 1
      %p139 = por %p137, %p138
      %p141 = scmp.ne.s32.totalorder %s126, %s140
      %p142 = scmp.eq.s32.totalorder %s32, 0
      %p143 = por %p141, %p142
      %s145 = sadd.s32 %s144, 1
      %p148 = scmp.eq.s32.totalorder %s26, 1
      %p149 = scmp.ne.s32.totalorder %s144, %s146
      %p150 = scmp.eq.s32.totalorder %s26, 0
      %p151 = por %p149, %p150
      %p152 = scmp.ne.s32.totalorder %s144, %s146
      %p153 = scmp.eq.s32.totalorder %s31, 1
      %p154 = por %p152, %p153
      %p155 = scmp.ne.s32.totalorder %s146, %s147
      %p156 = scmp.eq.s32.totalorder %s31, 0
      %p157 = por %p155, %p156
      %p158 = scmp.ne.s32.totalorder %s146, %s147
      %p159 = scmp.eq.s32.totalorder %s32, 1
      %p160 = por %p158, %p159
      %p162 = scmp.ne.s32.totalorder %s147, %s161
      %p163 = scmp.eq.s32.totalorder %s32, 0
      %p164 = por %p162, %p163
      %s166 = sadd.s32 %s165, 1
      %p169 = scmp.eq.s32.totalorder %s26, 1
      %p170 = scmp.ne.s32.totalorder %s165, %s167
      %p171 = scmp.eq.s32.totalorder %s26, 0
      %p172 = por %p170, %p171
      %p173 = scmp.ne.s32.totalorder %s165, %s167
      %p174 = scmp.eq.s32.totalorder %s31, 1
      %p175 = por %p173, %p174
      %p176 = scmp.ne.s32.totalorder %s167, %s168
      %p177 = scmp.eq.s32.totalorder %s31, 0
      %p178 = por %p176, %p177
      %p179 = scmp.ne.s32.totalorder %s167, %s168
      %p180 = scmp.eq.s32.totalorder %s32, 1
      %p181 = por %p179, %p180
      %p183 = scmp.ne.s32.totalorder %s168, %s182
      %p184 = scmp.eq.s32.totalorder %s32, 0
      %p185 = por %p183, %p184
      %s187 = sadd.s32 %s186, 1
      %p190 = scmp.eq.s32.totalorder %s26, 1
      %p191 = scmp.ne.s32.totalorder %s186, %s188
      %p192 = scmp.eq.s32.totalorder %s26, 0
      %p193 = por %p191, %p192
      %p194 = scmp.ne.s32.totalorder %s186, %s188
      %p195 = scmp.eq.s32.totalorder %s31, 1
      %p196 = por %p194, %p195
      %p197 = scmp.ne.s32.totalorder %s188, %s189
      %p198 = scmp.eq.s32.totalorder %s31, 0
      %p199 = por %p197, %p198
      %p200 = scmp.ne.s32.totalorder %s188, %s189
      %p201 = scmp.eq.s32.totalorder %s32, 1
      %p202 = por %p200, %p201
      %p204 = scmp.ne.s32.totalorder %s189, %s203
      %p205 = scmp.eq.s32.totalorder %s32, 0
      %p206 = por %p204, %p205
      %s208 = sadd.s32 %s207, 1
      %p211 = scmp.eq.s32.totalorder %s26, 1
      %p212 = scmp.ne.s32.totalorder %s207, %s209
      %p213 = scmp.eq.s32.totalorder %s26, 0
      %p214 = por %p212, %p213
      %p215 = scmp.ne.s32.totalorder %s207, %s209
      %p216 = scmp.eq.s32.totalorder %s31, 1
      %p217 = por %p215, %p216
      %p218 = scmp.ne.s32.totalorder %s209, %s210
      %p219 = scmp.eq.s32.totalorder %s31, 0
      %p220 = por %p218, %p219
      %p221 = scmp.ne.s32.totalorder %s209, %s210
      %p222 = scmp.eq.s32.totalorder %s32, 1
      %p223 = por %p221, %p222
      %p225 = scmp.ne.s32.totalorder %s210, %s224
      %p226 = scmp.eq.s32.totalorder %s32, 0
      %p227 = por %p225, %p226
      %s229 = sadd.s32 %s228, 1
      %p232 = scmp.eq.s32.totalorder %s26, 1
      %p233 = scmp.ne.s32.totalorder %s228, %s230
      %p234 = scmp.eq.s32.totalorder %s26, 0
      %p235 = por %p233, %p234
      %p236 = scmp.ne.s32.totalorder %s228, %s230
      %p237 = scmp.eq.s32.totalorder %s31, 1
      %p238 = por %p236, %p237
      %p239 = scmp.ne.s32.totalorder %s230, %s231
      %p240 = scmp.eq.s32.totalorder %s31, 0
      %p241 = por %p239, %p240
      %p242 = scmp.ne.s32.totalorder %s230, %s231
      %p243 = scmp.eq.s32.totalorder %s32, 1
      %p244 = por %p242, %p243
      %p246 = scmp.ne.s32.totalorder %s231, %s245
      %p247 = scmp.eq.s32.totalorder %s32, 0
      %p248 = por %p246, %p247
      %s250 = sadd.s32 %s249, 1
      %p253 = scmp.eq.s32.totalorder %s26, 1
      %p254 = scmp.ne.s32.totalorder %s249, %s251
      %p255 = scmp.eq.s32.totalorder %s26, 0
      %p256 = por %p254, %p255
      %p257 = scmp.ne.s32.totalorder %s249, %s251
      %p258 = scmp.eq.s32.totalorder %s31, 1
      %p259 = por %p257, %p258
      %p260 = scmp.ne.s32.totalorder %s251, %s252
      %p261 = scmp.eq.s32.totalorder %s31, 0
      %p262 = por %p260, %p261
      %p263 = scmp.ne.s32.totalorder %s251, %s252
      %p264 = scmp.eq.s32.totalorder %s32, 1
      %p265 = por %p263, %p264
      %p267 = scmp.ne.s32.totalorder %s252, %s266
      %p268 = scmp.eq.s32.totalorder %s32, 0
      %p269 = por %p267, %p268
      %s271 = sadd.s32 %s270, 1
      %p274 = scmp.eq.s32.totalorder %s26, 1
      %p275 = scmp.ne.s32.totalorder %s270, %s272
      %p276 = scmp.eq.s32.totalorder %s26, 0
      %p277 = por %p275, %p276
      %p278 = scmp.ne.s32.totalorder %s270, %s272
      %p279 = scmp.eq.s32.totalorder %s31, 1
      %p280 = por %p278, %p279
      %p281 = scmp.ne.s32.totalorder %s272, %s273
      %p282 = scmp.eq.s32.totalorder %s31, 0
      %p283 = por %p281, %p282
      %p284 = scmp.ne.s32.totalorder %s272, %s273
      %p285 = scmp.eq.s32.totalorder %s32, 1
      %p286 = por %p284, %p285
      %p288 = scmp.ne.s32.totalorder %s273, %s287
      %p289 = scmp.eq.s32.totalorder %s32, 0
      %p290 = por %p288, %p289
      %s292 = sadd.s32 %s291, 1
      %p295 = scmp.eq.s32.totalorder %s26, 1
      %p296 = scmp.ne.s32.totalorder %s291, %s293
      %p297 = scmp.eq.s32.totalorder %s26, 0
      %p298 = por %p296, %p297
      %p299 = scmp.ne.s32.totalorder %s291, %s293
      %p300 = scmp.eq.s32.totalorder %s31, 1
      %p301 = por %p299, %p300
      %p302 = scmp.ne.s32.totalorder %s293, %s294
      %p303 = scmp.eq.s32.totalorder %s31, 0
      %p304 = por %p302, %p303
      %p305 = scmp.ne.s32.totalorder %s293, %s294
      %p306 = scmp.eq.s32.totalorder %s32, 1
      %p307 = por %p305, %p306
      %p309 = scmp.ne.s32.totalorder %s294, %s308
      %p310 = scmp.eq.s32.totalorder %s32, 0
      %p311 = por %p309, %p310
      %s313 = sadd.s32 %s312, 1
      %p316 = scmp.eq.s32.totalorder %s26, 1
      %p317 = scmp.ne.s32.totalorder %s312, %s314
      %p318 = scmp.eq.s32.totalorder %s26, 0
      %p319 = por %p317, %p318
      %p320 = scmp.ne.s32.totalorder %s312, %s314
      %p321 = scmp.eq.s32.totalorder %s31, 1
      %p322 = por %p320, %p321
      %p323 = scmp.ne.s32.totalorder %s314, %s315
      %p324 = scmp.eq.s32.totalorder %s31, 0
      %p325 = por %p323, %p324
      %p326 = scmp.ne.s32.totalorder %s314, %s315
      %p327 = scmp.eq.s32.totalorder %s32, 1
      %p328 = por %p326, %p327
      %p330 = scmp.ne.s32.totalorder %s315, %s329
      %p331 = scmp.eq.s32.totalorder %s32, 0
      %p332 = por %p330, %p331
      %s334 = sadd.s32 %s333, 1
      %p337 = scmp.eq.s32.totalorder %s26, 1
      %p338 = scmp.ne.s32.totalorder %s333, %s335
      %p339 = scmp.eq.s32.totalorder %s26, 0
      %p340 = por %p338, %p339
      %p341 = scmp.ne.s32.totalorder %s333, %s335
      %p342 = scmp.eq.s32.totalorder %s31, 1
      %p343 = por %p341, %p342
      %p344 = scmp.ne.s32.totalorder %s335, %s336
      %p345 = scmp.eq.s32.totalorder %s31, 0
      %p346 = por %p344, %p345
      %p347 = scmp.ne.s32.totalorder %s335, %s336
      %p348 = scmp.eq.s32.totalorder %s32, 1
      %p349 = por %p347, %p348
      %p351 = scmp.ne.s32.totalorder %s336, %s350
      %p352 = scmp.eq.s32.totalorder %s32, 0
      %p353 = por %p351, %p352
      %s354 = ssub.s32 %s26, %s33
      %p355 = scmp.eq.s32.totalorder %s354, 0
      %s357 = sadd.s32 %s356, 1
      %s358 = scalar_select %p355, %s356, %s357
      %p361 = pneg %p355
      %p362 = scmp.eq.s32.totalorder %s26, 1
      %p363 = por %p361, %p362
      %p364 = scmp.ne.s32.totalorder %s356, %s359
      %p365 = scmp.eq.s32.totalorder %s26, 0
      %p366 = por %p364, %p365
      %p367 = scmp.ne.s32.totalorder %s356, %s359
      %p368 = scmp.eq.s32.totalorder %s31, 1
      %p369 = por %p367, %p368
      %p370 = scmp.ne.s32.totalorder %s359, %s360
      %p371 = scmp.eq.s32.totalorder %s31, 0
      %p372 = por %p370, %p371
      %p373 = scmp.ne.s32.totalorder %s359, %s360
      %p374 = scmp.eq.s32.totalorder %s32, 1
      %p375 = por %p373, %p374
      %p377 = scmp.ne.s32.totalorder %s360, %s376
      %p378 = scmp.eq.s32.totalorder %s32, 0
      %p379 = por %p377, %p378
      %s380 = ssub.s32 %s26, %s33
      %p381 = scmp.eq.s32.totalorder %s380, 0
      %s383 = sadd.s32 %s382, 1
      %s384 = scalar_select %p381, %s382, %s383
      %p387 = pneg %p381
      %p388 = scmp.eq.s32.totalorder %s26, 1
      %p389 = por %p387, %p388
      %p390 = scmp.ne.s32.totalorder %s382, %s385
      %p391 = scmp.eq.s32.totalorder %s26, 0
      %p392 = por %p390, %p391
      %p393 = scmp.ne.s32.totalorder %s382, %s385
      %p394 = scmp.eq.s32.totalorder %s31, 1
      %p395 = por %p393, %p394
      %p396 = scmp.ne.s32.totalorder %s385, %s386
      %p397 = scmp.eq.s32.totalorder %s31, 0
      %p398 = por %p396, %p397
      %p399 = scmp.ne.s32.totalorder %s385, %s386
      %p400 = scmp.eq.s32.totalorder %s32, 1
      %p401 = por %p399, %p400
      %p403 = scmp.ne.s32.totalorder %s386, %s402
      %p404 = scmp.eq.s32.totalorder %s32, 0
      %p405 = por %p403, %p404
      %p406 = scmp.le.s32.totalorder 1, %s26
      %p407 = scmp.lt.s32.totalorder %s26, 3
      %p408 = pnand %p406, %p407
      %p409 = pneg %p408
      // Predicated region
      $region9: #{_lambda_.7} parent=5 // pred_check
        _
      $region10: #{_lambda_.7} parent=5 // pred_check_branch
        %411 = sbr.rel (%p408) target = $region12
      $region11: #{_lambda_.7} parent=5 // pred_region
        %s412 = ssub.s32 %s26, 1
        // Predicated region
        $region13: #{_lambda_.7} parent=11 // pred_check
          %p413 = pneg %p73
        $region14: #{_lambda_.7} parent=11 // pred_check_branch
          %415 = sbr.rel (%p413) target = $region16
        $region15: #{_lambda_.7} parent=11 // pred_region
          _
        $region16: #{_lambda_.7} parent=11 // pred_fallthru
          _
        // Predicated region
        $region17: #{_lambda_.7} parent=11 // pred_check
          %p416 = pneg %p94
        $region18: #{_lambda_.7} parent=11 // pred_check_branch
          %418 = sbr.rel (%p416) target = $region20
        $region19: #{_lambda_.7} parent=11 // pred_region
          _
        $region20: #{_lambda_.7} parent=11 // pred_fallthru
          _
        // Predicated region
        $region21: #{_lambda_.7} parent=11 // pred_check
          %p419 = pneg %p115
        $region22: #{_lambda_.7} parent=11 // pred_check_branch
          %421 = sbr.rel (%p419) target = $region24
        $region23: #{_lambda_.7} parent=11 // pred_region
          %423 = vsyncadd [#allocation3], 0
          %s424 = sshll.u32 %s3, 4
          %s425 = int_to_ptr.hbm [resolvable:$true] %s424
          %s426 = sshll.u32 [#allocation2], 4
          %s427 = int_to_ptr.vmem [resolvable:$true] %s426
          %432 = dma.hbm_to_vmem [thread:$0]  %s425, 256, %s427, [#allocation3], 64, 64, 4
        $region24: #{_lambda_.7} parent=11 // pred_fallthru
          _
        // Predicated region
        $region25: #{_lambda_.7} parent=11 // pred_check
          %p433 = pneg %p136
        $region26: #{_lambda_.7} parent=11 // pred_check_branch
          %435 = sbr.rel (%p433) target = $region28
        $region27: #{_lambda_.7} parent=11 // pred_region
          _
        $region28: #{_lambda_.7} parent=11 // pred_fallthru
          _
        // Predicated region
        $region29: #{_lambda_.7} parent=11 // pred_check
          %p436 = pneg %p157
        $region30: #{_lambda_.7} parent=11 // pred_check_branch
          %438 = sbr.rel (%p436) target = $region32
        $region31: #{_lambda_.7} parent=11 // pred_region
          %440 = vsyncadd [#allocation5], 0
          %s441 = sshll.u32 %s5, 4
          %s442 = int_to_ptr.hbm [resolvable:$true] %s441
          %s443 = sshll.u32 [#allocation4], 4
          %s444 = int_to_ptr.vmem [resolvable:$true] %s443
          %449 = dma.hbm_to_vmem [thread:$0]  %s442, 256, %s444, [#allocation5], 64, 64, 4
        $region32: #{_lambda_.7} parent=11 // pred_fallthru
          _
        // Predicated region
        $region33: #{_lambda_.7} parent=11 // pred_check
          %p450 = pneg %p178
        $region34: #{_lambda_.7} parent=11 // pred_check_branch
          %452 = sbr.rel (%p450) target = $region36
        $region35: #{_lambda_.7} parent=11 // pred_region
          _
        $region36: #{_lambda_.7} parent=11 // pred_fallthru
          _
        // Predicated region
        $region37: #{_lambda_.7} parent=11 // pred_check
          %p453 = pneg %p199
        $region38: #{_lambda_.7} parent=11 // pred_check_branch
          %455 = sbr.rel (%p453) target = $region40
        $region39: #{_lambda_.7} parent=11 // pred_region
          _
        $region40: #{_lambda_.7} parent=11 // pred_fallthru
          _
        // Predicated region
        $region41: #{_lambda_.7} parent=11 // pred_check
          %p456 = pneg %p220
        $region42: #{_lambda_.7} parent=11 // pred_check_branch
          %458 = sbr.rel (%p456) target = $region44
        $region43: #{_lambda_.7} parent=11 // pred_region
          _
        $region44: #{_lambda_.7} parent=11 // pred_fallthru
          _
        // Predicated region
        $region45: #{_lambda_.7} parent=11 // pred_check
          %p459 = pneg %p241
        $region46: #{_lambda_.7} parent=11 // pred_check_branch
          %461 = sbr.rel (%p459) target = $region48
        $region47: #{_lambda_.7} parent=11 // pred_region
          _
        $region48: #{_lambda_.7} parent=11 // pred_fallthru
          _
        // Predicated region
        $region49: #{_lambda_.7} parent=11 // pred_check
          %p462 = pneg %p262
        $region50: #{_lambda_.7} parent=11 // pred_check_branch
          %464 = sbr.rel (%p462) target = $region52
        $region51: #{_lambda_.7} parent=11 // pred_region
          %466 = vsyncadd [#allocation5], 0
          %s468 = sshll.u32 %s10, 4
          %s469 = int_to_ptr.hbm [resolvable:$true] %s468
          %s470 = sshll.u32 [#allocation6], 4
          %s471 = int_to_ptr.vmem [resolvable:$true] %s470
          %473 = dma.hbm_to_vmem [thread:$0]  %s469, 16, %s471, [#allocation5]
        $region52: #{_lambda_.7} parent=11 // pred_fallthru
          _
        // Predicated region
        $region53: #{_lambda_.7} parent=11 // pred_check
          %p474 = pneg %p283
        $region54: #{_lambda_.7} parent=11 // pred_check_branch
          %476 = sbr.rel (%p474) target = $region56
        $region55: #{_lambda_.7} parent=11 // pred_region
          _
        $region56: #{_lambda_.7} parent=11 // pred_fallthru
          _
        // Predicated region
        $region57: #{_lambda_.7} parent=11 // pred_check
          %p477 = pneg %p304
        $region58: #{_lambda_.7} parent=11 // pred_check_branch
          %479 = sbr.rel (%p477) target = $region60
        $region59: #{_lambda_.7} parent=11 // pred_region
          %481 = vsyncadd [#allocation8], 0
          %s483 = sshll.u32 %s12, 4
          %s484 = int_to_ptr.hbm [resolvable:$true] %s483
          %s485 = sshll.u32 [#allocation7], 4
          %s486 = int_to_ptr.vmem [resolvable:$true] %s485
          %488 = dma.hbm_to_vmem [thread:$0]  %s484, 16, %s486, [#allocation8]
        $region60: #{_lambda_.7} parent=11 // pred_fallthru
          _
        // Predicated region
        $region61: #{_lambda_.7} parent=11 // pred_check
          %p489 = pneg %p325
        $region62: #{_lambda_.7} parent=11 // pred_check_branch
          %491 = sbr.rel (%p489) target = $region64
        $region63: #{_lambda_.7} parent=11 // pred_region
          _
        $region64: #{_lambda_.7} parent=11 // pred_fallthru
          _
        // Predicated region
        $region65: #{_lambda_.7} parent=11 // pred_check
          %p492 = pneg %p346
        $region66: #{_lambda_.7} parent=11 // pred_check_branch
          %494 = sbr.rel (%p492) target = $region68
        $region67: #{_lambda_.7} parent=11 // pred_region
          _
        $region68: #{_lambda_.7} parent=11 // pred_fallthru
          _
      $region12: #{_lambda_.7} parent=5 // pred_fallthru
        _
      %p495 = scmp.lt.s32.totalorder %s26, 2
      // Predicated region
      $region69: #{_lambda_.7} parent=5 // pred_check
        %p496 = pneg %p495
      $region70: #{_lambda_.7} parent=5 // pred_check_branch
        %498 = sbr.rel (%p496) target = $region72
      $region71: #{_lambda_.7} parent=5 // pred_region
        // Predicated region
        $region73: #{_lambda_.7} parent=71 // pred_check
          %p499 = pneg %p46
        $region74: #{_lambda_.7} parent=71 // pred_check_branch
          %501 = sbr.rel (%p499) target = $region76
        $region75: #{_lambda_.7} parent=71 // pred_region
          %p502 = scmp.lt.s32.totalorder %s26, 1
          %s503 = scalar_select %p502, %s26, 1
          %s504 = smul.addr %s503, 2
          %s505 = smul.addr %s504, 8
          %s506 = scalar_lea.vmem %s0, %s505
        $region76: #{_lambda_.7} parent=71 // pred_fallthru
          _
      $region72: #{_lambda_.7} parent=5 // pred_fallthru
        _
      %p507 = scmp.le.s32.totalorder 1, %s26
      %p508 = scmp.lt.s32.totalorder %s26, 3
      %p509 = pnand %p507, %p508
      %p510 = pneg %p509
      // Predicated region
      $region77: #{_lambda_.7} parent=5 // pred_check
        _
      $region78: #{_lambda_.7} parent=5 // pred_check_branch
        %512 = sbr.rel (%p509) target = $region80
      $region79: #{_lambda_.7} parent=5 // pred_region
        %s513 = ssub.s32 %s26, 1
        // Predicated region
        $region81: #{_lambda_.7} parent=79 // pred_check
          %p514 = pneg %p115
        $region82: #{_lambda_.7} parent=79 // pred_check_branch
          %516 = sbr.rel (%p514) target = $region84
        $region83: #{_lambda_.7} parent=79 // pred_region
          %518 = dma.done [#allocation3], 256
        $region84: #{_lambda_.7} parent=79 // pred_fallthru
          _
        // Predicated region
        $region85: #{_lambda_.7} parent=79 // pred_check
          %p519 = pneg %p157
        $region86: #{_lambda_.7} parent=79 // pred_check_branch
          %521 = sbr.rel (%p519) target = $region88
        $region87: #{_lambda_.7} parent=79 // pred_region
          %523 = dma.done [#allocation5], 256
        $region88: #{_lambda_.7} parent=79 // pred_fallthru
          _
        // Predicated region
        $region89: #{_lambda_.7} parent=79 // pred_check
          %p524 = pneg %p262
        $region90: #{_lambda_.7} parent=79 // pred_check_branch
          %526 = sbr.rel (%p524) target = $region92
        $region91: #{_lambda_.7} parent=79 // pred_region
          %528 = dma.done [#allocation5], 16
        $region92: #{_lambda_.7} parent=79 // pred_fallthru
          _
        // Predicated region
        $region93: #{_lambda_.7} parent=79 // pred_check
          %p529 = pneg %p304
        $region94: #{_lambda_.7} parent=79 // pred_check_branch
          %531 = sbr.rel (%p529) target = $region96
        $region95: #{_lambda_.7} parent=79 // pred_region
          %533 = dma.done [#allocation8], 16
        $region96: #{_lambda_.7} parent=79 // pred_fallthru
          _
        %p534 = scmp.lt.s32.totalorder %s31, 1
        %s535 = scalar_select %p534, %s31, 1
        %s536 = smul.addr %s535, 2
        %s537 = smul.addr %s536, 8
        %s538 = scalar_lea.vmem %s0, %s537
        %p539 = pneg %p52
        %p540 = pneg %p49
        %p541 = pneg %p73
        %p542 = pneg %p70
        %p543 = pneg %p94
        %p544 = pneg %p91
        %p545 = pneg %p115
        %p546 = pneg %p112
        %p547 = pneg %p136
        %p548 = pneg %p133
        %p549 = pneg %p157
        %p550 = pneg %p154
        %p551 = pneg %p178
        %p552 = pneg %p175
        %p553 = pneg %p199
        %p554 = pneg %p196
        %p555 = pneg %p220
        %p556 = pneg %p217
        %p557 = pneg %p241
        %p558 = pneg %p238
        %p559 = pneg %p262
        %p560 = pneg %p259
        %p561 = pneg %p283
        %p562 = pneg %p280
        %p563 = pneg %p304
        %p564 = pneg %p301
        %p565 = pneg %p325
        %p566 = pneg %p322
        %p567 = pneg %p346
        %p568 = pneg %p343
        %p569 = pneg %p372
        %p570 = pneg %p369
        %p571 = scmp.lt.s32.totalorder %s31, 1
        %s572 = scalar_select %p571, %s31, 1
        %s573 = smul.addr %s572, 2
        %s574 = smul.addr %s573, 8
        %s575 = scalar_lea.vmem %s15, %s574
        %p576 = pneg %p398
        %p577 = pneg %p395
        %p578 = scmp.lt.s32.totalorder %s31, 1
        %s579 = scalar_select %p578, %s31, 1
        %s580 = smul.addr %s579, 8
        %s581 = smul.addr %s580, 8
        %s582 = scalar_lea.vmem %s16, %s581
        %p583 = scmp.lt.s32.totalorder %s31, 1
        %s584 = scalar_select %p583, %s31, 1
        %s585 = smul.addr %s584, 2
        %s586 = smul.addr %s585, 8
        %s587 = scalar_lea.vmem %s0, %s586
        %p588 = scmp.lt.s32.totalorder %s31, 1
        %s589 = scalar_select %p588, %s31, 1
        %s590 = smul.addr %s589, 2
        %s591 = smul.addr %s590, 8
        %s592 = scalar_lea.vmem %s15, %s591
        %p593 = scmp.lt.s32.totalorder %s31, 1
        %s594 = scalar_select %p593, %s31, 1
        %s595 = smul.addr %s594, 8
        %s596 = smul.addr %s595, 8
        %s597 = scalar_lea.vmem %s16, %s596
        %v599 = vld [vmem:[%s587] sm:$0xff]
        %v600 = vld [vmem:[%s587 + $0x8] sm:$0x1]
        %v601 = vpack.c.bf16 %v600, %v599
        %v602 = vld [vmem:[%s1] sm:$0xf]
        %v603 = vld [vmem:[%s1 + $0x4] sm:$0xf]
        %v604 = vld [vmem:[%s1 + $0x8] sm:$0xf]
        %v605 = vld [vmem:[%s1 + $0xc] sm:$0xf]
        %v606 = vld [vmem:[%s2] sm:$0x1]
        %v608 = vperm.slane %v606, 0
        %v614 = vunpack.c.l.b16 %v602
        %v615 = vunpack.c.l.b16 %v603
        %v616 = vunpack.c.l.b16 %v604
        %v617 = vunpack.c.l.b16 %v605
        %v618 = vpack.c.b16 %v615, %v614
        %v619 = vpack.c.b16 %v617, %v616
        %vm622 = vcmask 261120
        %v624 = vsel %vm622, %v601, 0
        %626 = vmatpush.bf16.msra.mxu0 0
        %627 = vmatpush.bf16.msra.mxu0 0
        %628 = vmatpush.bf16.msra.mxu0 0
        %629 = vmatpush.bf16.msra.mxu0 0
        %630 = vmatpush.bf16.msra.mxu0 0
        %631 = vmatpush.bf16.msra.mxu0 0
        %632 = vmatpush.bf16.msra.mxu0 %v619
        %633 = vmatpush.bf16.msra.mxu0 %v618
        %634 = vmatmul.bf16.gmra.mxu0 %v624
        %v635 = vpop.f32.mrf.mxu0
        %v636 = vadd.f32 %v608, %v635
        %v637 = vpop.f32.mrf.mxu0
        %v638 = vadd.f32 %v608, %v637
        %639 = vdwg.mxu0
        %642 = vrot.lane.b32.xlu0 %v636, 120
        %v643 = vpop.permute.xlu0 %642
        %644 = vrot.lane.b32.xlu0 %v638, 120
        %v645 = vpop.permute.xlu0 %644
        %648 = vrot.lane.b32.xlu0 %v636, 112
        %v649 = vpop.permute.xlu0 %648
        %650 = vrot.lane.b32.xlu0 %v638, 112
        %v651 = vpop.permute.xlu0 %650
        %654 = vrot.lane.b32.xlu0 %v636, 104
        %v655 = vpop.permute.xlu0 %654
        %656 = vrot.lane.b32.xlu0 %v638, 104
        %v657 = vpop.permute.xlu0 %656
        %v660 = vpack.c.bf16 %v636, %v636
        %v661 = vpack.c.bf16 %v638, %v638
        %v662 = vpack.c.bf16 %v643, %v643
        %v663 = vpack.c.bf16 %v645, %v645
        %v664 = vpack.c.bf16 %v649, %v649
        %v665 = vpack.c.bf16 %v651, %v651
        %v666 = vpack.c.bf16 %v655, %v655
        %v667 = vpack.c.bf16 %v657, %v657
        %v670 = vunpack.c.l.b16 %v660
        %v671 = vunpack.c.l.b16 %v661
        %v672 = vpack.c.b16 %v671, %v670
        %673 = vrot.lane.b32.xlu0 %v672, 96
        %v674 = vpop.permute.xlu0 %673
        %vm675 = vcmask 64512
        %v677 = vsel %vm675, %v672, 0
        %v680 = vsel %vm675, %v674, 0
        %682 = vmatpush.bf16.xpose.msra.mxu0 0
        %683 = vmatpush.bf16.xpose.msra.mxu0 0
        %684 = vmatpush.bf16.xpose.msra.mxu0 0
        %685 = vmatpush.bf16.xpose.msra.mxu0 0
        %686 = vmatpush.bf16.xpose.msra.mxu0 0
        %687 = vmatpush.bf16.xpose.msra.mxu0 0
        %688 = vmatpush.bf16.xpose.msra.mxu0 0
        %689 = vmatpush.bf16.xpose.msra.mxu0 %v680
        %690 = vmatmul.bf16.gmra.mxu0 %v677
        %v691 = vpop.f32.mrf.mxu0
        %v692 = vadd.f32 0.0, %v691
        %v693 = vpop.f32.mrf.mxu0
        %v694 = vadd.f32 0.0, %v693
        %695 = vdwg.mxu0
        %v698 = vunpack.c.l.b16 %v662
        %v699 = vunpack.c.l.b16 %v663
        %v700 = vpack.c.b16 %v699, %v698
        %701 = vrot.lane.b32.xlu0 %v700, 96
        %v702 = vpop.permute.xlu0 %701
        %v704 = vsel %vm675, %v700, 0
        %v707 = vsel %vm675, %v702, 0
        %709 = vmatpush.bf16.xpose.msra.mxu0 0
        %710 = vmatpush.bf16.xpose.msra.mxu0 0
        %711 = vmatpush.bf16.xpose.msra.mxu0 0
        %712 = vmatpush.bf16.xpose.msra.mxu0 0
        %713 = vmatpush.bf16.xpose.msra.mxu0 0
        %714 = vmatpush.bf16.xpose.msra.mxu0 0
        %715 = vmatpush.bf16.xpose.msra.mxu0 0
        %716 = vmatpush.bf16.xpose.msra.mxu0 %v707
        %717 = vmatmul.bf16.gmra.mxu0 %v704
        %v718 = vpop.f32.mrf.mxu0
        %v719 = vadd.f32 0.0, %v718
        %v720 = vpop.f32.mrf.mxu0
        %v721 = vadd.f32 0.0, %v720
        %722 = vdwg.mxu0
        %v725 = vunpack.c.l.b16 %v664
        %v726 = vunpack.c.l.b16 %v665
        %v727 = vpack.c.b16 %v726, %v725
        %728 = vrot.lane.b32.xlu0 %v727, 96
        %v729 = vpop.permute.xlu0 %728
        %v731 = vsel %vm675, %v727, 0
        %v734 = vsel %vm675, %v729, 0
        %736 = vmatpush.bf16.xpose.msra.mxu0 0
        %737 = vmatpush.bf16.xpose.msra.mxu0 0
        %738 = vmatpush.bf16.xpose.msra.mxu0 0
        %739 = vmatpush.bf16.xpose.msra.mxu0 0
        %740 = vmatpush.bf16.xpose.msra.mxu0 0
        %741 = vmatpush.bf16.xpose.msra.mxu0 0
        %742 = vmatpush.bf16.xpose.msra.mxu0 0
        %743 = vmatpush.bf16.xpose.msra.mxu0 %v734
        %744 = vmatmul.bf16.gmra.mxu0 %v731
        %v745 = vpop.f32.mrf.mxu0
        %v746 = vadd.f32 0.0, %v745
        %v747 = vpop.f32.mrf.mxu0
        %v748 = vadd.f32 0.0, %v747
        %749 = vdwg.mxu0
        %v752 = vunpack.c.l.b16 %v666
        %v753 = vunpack.c.l.b16 %v667
        %v754 = vpack.c.b16 %v753, %v752
        %755 = vrot.lane.b32.xlu0 %v754, 96
        %v756 = vpop.permute.xlu0 %755
        %v758 = vsel %vm675, %v754, 0
        %v761 = vsel %vm675, %v756, 0
        %763 = vmatpush.bf16.xpose.msra.mxu0 0
        %764 = vmatpush.bf16.xpose.msra.mxu0 0
        %765 = vmatpush.bf16.xpose.msra.mxu0 0
        %766 = vmatpush.bf16.xpose.msra.mxu0 0
        %767 = vmatpush.bf16.xpose.msra.mxu0 0
        %768 = vmatpush.bf16.xpose.msra.mxu0 0
        %769 = vmatpush.bf16.xpose.msra.mxu0 0
        %770 = vmatpush.bf16.xpose.msra.mxu0 %v761
        %771 = vmatmul.bf16.gmra.mxu0 %v758
        %v772 = vpop.f32.mrf.mxu0
        %v773 = vadd.f32 0.0, %v772
        %v774 = vpop.f32.mrf.mxu0
        %v775 = vadd.f32 0.0, %v774
        %776 = vdwg.mxu0
        %v777 = vmul.f32 %v692, 0.35355338
        %v778 = vmul.f32 %v694, 0.35355338
        %v779 = vmul.f32 %v719, 0.35355338
        %v780 = vmul.f32 %v721, 0.35355338
        %v781 = vmul.f32 %v746, 0.35355338
        %v782 = vmul.f32 %v748, 0.35355338
        %v783 = vmul.f32 %v773, 0.35355338
        %v784 = vmul.f32 %v775, 0.35355338
        %vm785 = vcmask 72704
        %v786 = vsel %vm785, %v777, -inf
        %787 = vmax.xlane.f32.xlu0 %v786
        %v788 = vpop.xlane.xlu0 %787
        %vm789 = vcmask 65536
        %v790 = vsel %vm789, %v778, -inf
        %791 = vmax.xlane.f32.xlu0 %v790
        %v792 = vpop.xlane.xlu0 %791
        %v793 = vsel %vm785, %v779, -inf
        %794 = vmax.xlane.f32.xlu0 %v793
        %v795 = vpop.xlane.xlu0 %794
        %v796 = vsel %vm789, %v780, -inf
        %797 = vmax.xlane.f32.xlu0 %v796
        %v798 = vpop.xlane.xlu0 %797
        %v799 = vsel %vm785, %v781, -inf
        %800 = vmax.xlane.f32.xlu0 %v799
        %v801 = vpop.xlane.xlu0 %800
        %v802 = vsel %vm789, %v782, -inf
        %803 = vmax.xlane.f32.xlu0 %v802
        %v804 = vpop.xlane.xlu0 %803
        %v805 = vsel %vm785, %v783, -inf
        %806 = vmax.xlane.f32.xlu0 %v805
        %v807 = vpop.xlane.xlu0 %806
        %v808 = vsel %vm789, %v784, -inf
        %809 = vmax.xlane.f32.xlu0 %v808
        %v810 = vpop.xlane.xlu0 %809
        %v811 = vsub.f32 %v777, %v788
        %v812 = vsub.f32 %v778, %v792
        %v813 = vsub.f32 %v779, %v795
        %v814 = vsub.f32 %v780, %v798
        %v815 = vsub.f32 %v781, %v801
        %v816 = vsub.f32 %v782, %v804
        %v817 = vsub.f32 %v783, %v807
        %v818 = vsub.f32 %v784, %v810
        %v819 = vmul.f32 %v811, 1.442695
        %v820 = vpow.pop %v819
        %v821 = vmul.f32 %v812, 1.442695
        %v822 = vpow.pop %v821
        %v823 = vmul.f32 %v813, 1.442695
        %v824 = vpow.pop %v823
        %v825 = vmul.f32 %v814, 1.442695
        %v826 = vpow.pop %v825
        %v827 = vmul.f32 %v815, 1.442695
        %v828 = vpow.pop %v827
        %v829 = vmul.f32 %v816, 1.442695
        %v830 = vpow.pop %v829
        %v831 = vmul.f32 %v817, 1.442695
        %v832 = vpow.pop %v831
        %v833 = vmul.f32 %v818, 1.442695
        %v834 = vpow.pop %v833
        %v835 = vsel %vm785, %v820, 0.0
        %836 = vadd.xlane.f32.xlu0 %v835
        %v837 = vpop.xlane.xlu0 %836
        %v838 = vsel %vm789, %v822, 0.0
        %839 = vadd.xlane.f32.xlu0 %v838
        %v840 = vpop.xlane.xlu0 %839
        %v841 = vsel %vm785, %v824, 0.0
        %842 = vadd.xlane.f32.xlu0 %v841
        %v843 = vpop.xlane.xlu0 %842
        %v844 = vsel %vm789, %v826, 0.0
        %845 = vadd.xlane.f32.xlu0 %v844
        %v846 = vpop.xlane.xlu0 %845
        %v847 = vsel %vm785, %v828, 0.0
        %848 = vadd.xlane.f32.xlu0 %v847
        %v849 = vpop.xlane.xlu0 %848
        %v850 = vsel %vm789, %v830, 0.0
        %851 = vadd.xlane.f32.xlu0 %v850
        %v852 = vpop.xlane.xlu0 %851
        %v853 = vsel %vm785, %v832, 0.0
        %854 = vadd.xlane.f32.xlu0 %v853
        %v855 = vpop.xlane.xlu0 %854
        %v856 = vsel %vm789, %v834, 0.0
        %857 = vadd.xlane.f32.xlu0 %v856
        %v858 = vpop.xlane.xlu0 %857
        %v859 = vrcp.pop %v837
        %v860 = vrcp.pop %v840
        %v861 = vrcp.pop %v843
        %v862 = vrcp.pop %v846
        %v863 = vrcp.pop %v849
        %v864 = vrcp.pop %v852
        %v865 = vrcp.pop %v855
        %v866 = vrcp.pop %v858
        %v867 = vmul.f32 %v820, %v859
        %v868 = vmul.f32 %v822, %v860
        %v869 = vmul.f32 %v824, %v861
        %v870 = vmul.f32 %v826, %v862
        %v871 = vmul.f32 %v828, %v863
        %v872 = vmul.f32 %v830, %v864
        %v873 = vmul.f32 %v832, %v865
        %v874 = vmul.f32 %v834, %v866
        %875 = vst.msk [vmem:[%s597] sm:$0xff] %vm785, %v867
        %876 = vst.msk [vmem:[%s597 + $0x8] sm:$0x1] %vm789, %v868
        %877 = vst.msk [vmem:[%s597 + $0x10] sm:$0xff] %vm785, %v869
        %878 = vst.msk [vmem:[%s597 + $0x18] sm:$0x1] %vm789, %v870
        %879 = vst.msk [vmem:[%s597 + $0x20] sm:$0xff] %vm785, %v871
        %880 = vst.msk [vmem:[%s597 + $0x28] sm:$0x1] %vm789, %v872
        %881 = vst.msk [vmem:[%s597 + $0x30] sm:$0xff] %vm785, %v873
        %882 = vst.msk [vmem:[%s597 + $0x38] sm:$0x1] %vm789, %v874
        %v883 = vpack.c.bf16 %v867, %v867
        %v884 = vpack.c.bf16 %v868, %v868
        %v885 = vpack.c.bf16 %v869, %v869
        %v886 = vpack.c.bf16 %v870, %v870
        %v887 = vpack.c.bf16 %v871, %v871
        %v888 = vpack.c.bf16 %v872, %v872
        %v889 = vpack.c.bf16 %v873, %v873
        %v890 = vpack.c.bf16 %v874, %v874
        %v893 = vunpack.c.l.b16 %v883
        %v894 = vunpack.c.l.b16 %v884
        %v895 = vpack.c.b16 %v894, %v893
        %896 = vrot.lane.b32.xlu0 %v672, 64
        %v897 = vpop.permute.xlu0 %896
        %v899 = vsel %vm785, %v895, 0
        %vm901 = vcmask 1043456
        %vm902 = vcmask 1044480
        %v903 = vsel %vm901, 4294967295, 65535
        %v904 = vsel %vm902, %v903, 0
        %v906 = vand.u32 %v897, %v904
        %908 = vmatpush.bf16.msra.mxu0 0
        %909 = vmatpush.bf16.msra.mxu0 0
        %910 = vmatpush.bf16.msra.mxu0 0
        %911 = vmatpush.bf16.msra.mxu0 0
        %912 = vmatpush.bf16.msra.mxu0 0
        %913 = vmatpush.bf16.msra.mxu0 0
        %914 = vmatpush.bf16.msra.mxu0 0
        %915 = vmatpush.bf16.msra.mxu0 %v906
        %916 = vmatmul.bf16.gmra.mxu0 %v899
        %v917 = vpop.f32.mrf.mxu0
        %v918 = vadd.f32 0.0, %v917
        %v919 = vpop.f32.mrf.mxu0
        %v920 = vadd.f32 0.0, %v919
        %921 = vdwg.mxu0
        %v924 = vunpack.c.l.b16 %v885
        %v925 = vunpack.c.l.b16 %v886
        %v926 = vpack.c.b16 %v925, %v924
        %927 = vrot.lane.b32.xlu0 %v700, 64
        %v928 = vpop.permute.xlu0 %927
        %v930 = vsel %vm785, %v926, 0
        %v933 = vand.u32 %v928, %v904
        %935 = vmatpush.bf16.msra.mxu0 0
        %936 = vmatpush.bf16.msra.mxu0 0
        %937 = vmatpush.bf16.msra.mxu0 0
        %938 = vmatpush.bf16.msra.mxu0 0
        %939 = vmatpush.bf16.msra.mxu0 0
        %940 = vmatpush.bf16.msra.mxu0 0
        %941 = vmatpush.bf16.msra.mxu0 0
        %942 = vmatpush.bf16.msra.mxu0 %v933
        %943 = vmatmul.bf16.gmra.mxu0 %v930
        %v944 = vpop.f32.mrf.mxu0
        %v945 = vadd.f32 0.0, %v944
        %v946 = vpop.f32.mrf.mxu0
        %v947 = vadd.f32 0.0, %v946
        %948 = vdwg.mxu0
        %v951 = vunpack.c.l.b16 %v887
        %v952 = vunpack.c.l.b16 %v888
        %v953 = vpack.c.b16 %v952, %v951
        %954 = vrot.lane.b32.xlu0 %v727, 64
        %v955 = vpop.permute.xlu0 %954
        %v957 = vsel %vm785, %v953, 0
        %v960 = vand.u32 %v955, %v904
        %962 = vmatpush.bf16.msra.mxu0 0
        %963 = vmatpush.bf16.msra.mxu0 0
        %964 = vmatpush.bf16.msra.mxu0 0
        %965 = vmatpush.bf16.msra.mxu0 0
        %966 = vmatpush.bf16.msra.mxu0 0
        %967 = vmatpush.bf16.msra.mxu0 0
        %968 = vmatpush.bf16.msra.mxu0 0
        %969 = vmatpush.bf16.msra.mxu0 %v960
        %970 = vmatmul.bf16.gmra.mxu0 %v957
        %v971 = vpop.f32.mrf.mxu0
        %v972 = vadd.f32 0.0, %v971
        %v973 = vpop.f32.mrf.mxu0
        %v974 = vadd.f32 0.0, %v973
        %975 = vdwg.mxu0
        %v978 = vunpack.c.l.b16 %v889
        %v979 = vunpack.c.l.b16 %v890
        %v980 = vpack.c.b16 %v979, %v978
        %981 = vrot.lane.b32.xlu0 %v754, 64
        %v982 = vpop.permute.xlu0 %981
        %v984 = vsel %vm785, %v980, 0
        %v987 = vand.u32 %v982, %v904
        %989 = vmatpush.bf16.msra.mxu0 0
        %990 = vmatpush.bf16.msra.mxu0 0
        %991 = vmatpush.bf16.msra.mxu0 0
        %992 = vmatpush.bf16.msra.mxu0 0
        %993 = vmatpush.bf16.msra.mxu0 0
        %994 = vmatpush.bf16.msra.mxu0 0
        %995 = vmatpush.bf16.msra.mxu0 0
        %996 = vmatpush.bf16.msra.mxu0 %v987
        %997 = vmatmul.bf16.gmra.mxu0 %v984
        %v998 = vpop.f32.mrf.mxu0
        %v999 = vadd.f32 0.0, %v998
        %v1000 = vpop.f32.mrf.mxu0
        %v1001 = vadd.f32 0.0, %v1000
        %1002 = vdwg.mxu0
        %1005 = vrot.lane.b32.xlu0 %v945, 8
        %v1006 = vpop.permute.xlu0 %1005
        %1007 = vrot.lane.b32.xlu0 %v947, 8
        %v1008 = vpop.permute.xlu0 %1007
        %1013 = vrot.lane.b32.xlu0 %v972, 16
        %v1014 = vpop.permute.xlu0 %1013
        %1015 = vrot.lane.b32.xlu0 %v974, 16
        %v1016 = vpop.permute.xlu0 %1015
        %1021 = vrot.lane.b32.xlu0 %v999, 24
        %v1022 = vpop.permute.xlu0 %1021
        %1023 = vrot.lane.b32.xlu0 %v1001, 24
        %v1024 = vpop.permute.xlu0 %1023
        %v1027 = vsel %vm675, %v918, %v1006
        %v1028 = vsel %vm675, %v920, %v1008
        %vm1029 = vcmask 130048
        %v1030 = vsel %vm1029, %v1027, %v1014
        %v1031 = vsel %vm1029, %v1028, %v1016
        %vm1032 = vcmask 195584
        %v1033 = vsel %vm1032, %v1030, %v1022
        %v1034 = vsel %vm1032, %v1031, %v1024
        %v1035 = vpack.c.bf16 %v1034, %v1033
        %v1036 = vld [vmem:[#allocation2] sm:$0xf]
        %v1037 = vld [vmem:[#allocation2 + $0x4] sm:$0xf]
        %v1038 = vld [vmem:[#allocation2 + $0x8] sm:$0xf]
        %v1039 = vld [vmem:[#allocation2 + $0xc] sm:$0xf]
        %v1040 = vld [vmem:[%s4] sm:$0x1]
        %v1042 = vperm.slane %v1040, 0
        %v1048 = vunpack.c.l.b16 %v1036
        %v1049 = vunpack.c.l.b16 %v1037
        %v1050 = vunpack.c.l.b16 %v1038
        %v1051 = vunpack.c.l.b16 %v1039
        %v1052 = vpack.c.b16 %v1049, %v1048
        %v1053 = vpack.c.b16 %v1051, %v1050
        %v1057 = vsel %vm622, %v1035, 0
        %1059 = vmatpush.bf16.msra.mxu0 0
        %1060 = vmatpush.bf16.msra.mxu0 0
        %1061 = vmatpush.bf16.msra.mxu0 0
        %1062 = vmatpush.bf16.msra.mxu0 0
        %1063 = vmatpush.bf16.msra.mxu0 0
        %1064 = vmatpush.bf16.msra.mxu0 0
        %1065 = vmatpush.bf16.msra.mxu0 %v1053
        %1066 = vmatpush.bf16.msra.mxu0 %v1052
        %1067 = vmatmul.bf16.gmra.mxu0 %v1057
        %v1068 = vpop.f32.mrf.mxu0
        %v1069 = vadd.f32 %v1042, %v1068
        %v1070 = vpop.f32.mrf.mxu0
        %v1071 = vadd.f32 %v1042, %v1070
        %1072 = vdwg.mxu0
        %v1073 = vadd.f32 %v599, %v1069
        %v1074 = vadd.f32 %v600, %v1071
        %v1075 = vld [vmem:[%s9] sm:$0x1]
        %v1076 = vld [vmem:[#allocation6] sm:$0x1]
        %v1077 = vsel %vm622, %v1073, 0.0
        %1078 = vadd.xlane.f32.xlu0 %v1077
        %v1079 = vpop.xlane.xlu0 %1078
        %vm1080 = vcmask 253952
        %v1081 = vsel %vm1080, %v1074, 0.0
        %1082 = vadd.xlane.f32.xlu0 %v1081
        %v1083 = vpop.xlane.xlu0 %1082
        %v1084 = vrcp.pop 32.0
        %v1085 = vmul.f32 32.0, %v1084
        %v1086 = vsub.f32 1.0, %v1085
        %v1087 = vmul.f32 %v1084, %v1086
        %v1088 = vadd.f32 %v1084, %v1087
        %vm1089 = vweird.f32 %v1084
        %v1090 = vsel %vm1089, %v1084, %v1088
        %v1091 = vmul.f32 %v1079, %v1090
        %v1092 = vmul.f32 %v1083, %v1090
        %v1093 = vsub.f32 %v1073, %v1091
        %v1094 = vsub.f32 %v1074, %v1092
        %v1095 = vmul.f32 %v1093, %v1093
        %v1096 = vmul.f32 %v1094, %v1094
        %v1097 = vsel %vm622, %v1095, 0.0
        %1098 = vadd.xlane.f32.xlu0 %v1097
        %v1099 = vpop.xlane.xlu0 %1098
        %v1100 = vsel %vm1080, %v1096, 0.0
        %1101 = vadd.xlane.f32.xlu0 %v1100
        %v1102 = vpop.xlane.xlu0 %1101
        %v1103 = vmul.f32 %v1099, %v1090
        %v1104 = vmul.f32 %v1102, %v1090
        %v1105 = vadd.f32 %v1103, 1e-05
        %v1106 = vadd.f32 %v1104, 1e-05
        %v1107 = vrsqrt.pop %v1105
        %v1108 = vmul.f32 %v1107, %v1105
        %v1109 = vmul.f32 %v1108, %v1107
        %v1110 = vmul.f32 0.5, %v1109
        %v1111 = vsub.f32 1.5, %v1110
        %v1112 = vmul.f32 %v1107, %v1111
        %vm1113 = vweird.f32 %v1105
        %vm1114 = vweird.f32 %v1107
        %vm1115 = vmor %vm1113, %vm1114
        %v1116 = vsel %vm1115, %v1107, %v1112
        %v1117 = vrsqrt.pop %v1106
        %v1118 = vmul.f32 %v1117, %v1106
        %v1119 = vmul.f32 %v1118, %v1117
        %v1120 = vmul.f32 0.5, %v1119
        %v1121 = vsub.f32 1.5, %v1120
        %v1122 = vmul.f32 %v1117, %v1121
        %vm1123 = vweird.f32 %v1106
        %vm1124 = vweird.f32 %v1117
        %vm1125 = vmor %vm1123, %vm1124
        %v1126 = vsel %vm1125, %v1117, %v1122
        %v1127 = vmul.f32 %v1093, %v1116
        %v1128 = vmul.f32 %v1094, %v1126
        %v1130 = vperm.slane %v1075, 0
        %v1132 = vmul.f32 %v1127, %v1130
        %v1133 = vmul.f32 %v1128, %v1130
        %v1135 = vperm.slane %v1076, 0
        %v1137 = vadd.f32 %v1132, %v1135
        %v1138 = vadd.f32 %v1133, %v1135
        %v1139 = vpack.c.bf16 %v1138, %v1137
        %v1140 = vld [vmem:[#allocation4] sm:$0xf]
        %v1141 = vld [vmem:[#allocation4 + $0x4] sm:$0xf]
        %v1142 = vld [vmem:[#allocation4 + $0x8] sm:$0xf]
        %v1143 = vld [vmem:[#allocation4 + $0xc] sm:$0xf]
        %v1144 = vld [vmem:[%s6] sm:$0x1]
        %v1146 = vperm.slane %v1144, 0
        %v1152 = vunpack.c.l.b16 %v1140
        %v1153 = vunpack.c.l.b16 %v1141
        %v1154 = vunpack.c.l.b16 %v1142
        %v1155 = vunpack.c.l.b16 %v1143
        %v1156 = vpack.c.b16 %v1153, %v1152
        %v1157 = vpack.c.b16 %v1155, %v1154
        %v1161 = vsel %vm622, %v1139, 0
        %1163 = vmatpush.bf16.msra.mxu0 0
        %1164 = vmatpush.bf16.msra.mxu0 0
        %1165 = vmatpush.bf16.msra.mxu0 0
        %1166 = vmatpush.bf16.msra.mxu0 0
        %1167 = vmatpush.bf16.msra.mxu0 0
        %1168 = vmatpush.bf16.msra.mxu0 0
        %1169 = vmatpush.bf16.msra.mxu0 %v1157
        %1170 = vmatpush.bf16.msra.mxu0 %v1156
        %1171 = vmatmul.bf16.gmra.mxu0 %v1161
        %v1172 = vpop.f32.mrf.mxu0
        %v1173 = vadd.f32 %v1146, %v1172
        %v1174 = vpop.f32.mrf.mxu0
        %v1175 = vadd.f32 %v1146, %v1174
        %1176 = vdwg.mxu0
        %v1177 = vmax.f32 %v1173, 0.0
        %v1178 = vmax.f32 %v1175, 0.0
        %v1179 = vpack.c.bf16 %v1178, %v1177
        %v1180 = vld [vmem:[%s7] sm:$0xf]
        %v1181 = vld [vmem:[%s7 + $0x4] sm:$0xf]
        %v1182 = vld [vmem:[%s7 + $0x8] sm:$0xf]
        %v1183 = vld [vmem:[%s7 + $0xc] sm:$0xf]
        %v1184 = vld [vmem:[%s7 + $0x10] sm:$0xf]
        %v1185 = vld [vmem:[%s7 + $0x14] sm:$0xf]
        %v1186 = vld [vmem:[%s7 + $0x18] sm:$0xf]
        %v1187 = vld [vmem:[%s7 + $0x1c] sm:$0xf]
        %v1188 = vld [vmem:[%s8] sm:$0x1]
        %v1190 = vperm.slane %v1188, 0
        %v1200 = vunpack.c.l.b16 %v1180
        %v1201 = vunpack.c.l.b16 %v1181
        %v1202 = vunpack.c.l.b16 %v1182
        %v1203 = vunpack.c.l.b16 %v1183
        %v1204 = vunpack.c.l.b16 %v1184
        %v1205 = vunpack.c.l.b16 %v1185
        %v1206 = vunpack.c.l.b16 %v1186
        %v1207 = vunpack.c.l.b16 %v1187
        %v1208 = vpack.c.b16 %v1201, %v1200
        %v1209 = vpack.c.b16 %v1203, %v1202
        %v1210 = vpack.c.b16 %v1205, %v1204
        %v1211 = vpack.c.b16 %v1207, %v1206
        %vm1216 = vcmask 523264
        %v1218 = vsel %vm1216, %v1179, 0
        %1220 = vmatpush.bf16.msra.mxu0 0
        %1221 = vmatpush.bf16.msra.mxu0 0
        %1222 = vmatpush.bf16.msra.mxu0 0
        %1223 = vmatpush.bf16.msra.mxu0 0
        %1224 = vmatpush.bf16.msra.mxu0 %v1211
        %1225 = vmatpush.bf16.msra.mxu0 %v1210
        %1226 = vmatpush.bf16.msra.mxu0 %v1209
        %1227 = vmatpush.bf16.msra.mxu0 %v1208
        %1228 = vmatmul.bf16.gmra.mxu0 %v1218
        %v1229 = vpop.f32.mrf.mxu0
        %v1230 = vadd.f32 %v1190, %v1229
        %v1231 = vpop.f32.mrf.mxu0
        %v1232 = vadd.f32 %v1190, %v1231
        %1233 = vdwg.mxu0
        %v1234 = vadd.f32 %v1137, %v1230
        %v1235 = vadd.f32 %v1138, %v1232
        %v1236 = vld [vmem:[%s11] sm:$0x1]
        %v1237 = vld [vmem:[#allocation7] sm:$0x1]
        %v1238 = vsel %vm622, %v1234, 0.0
        %1239 = vadd.xlane.f32.xlu0 %v1238
        %v1240 = vpop.xlane.xlu0 %1239
        %v1241 = vsel %vm1080, %v1235, 0.0
        %1242 = vadd.xlane.f32.xlu0 %v1241
        %v1243 = vpop.xlane.xlu0 %1242
        %v1244 = vmul.f32 %v1240, %v1090
        %v1245 = vmul.f32 %v1243, %v1090
        %v1246 = vsub.f32 %v1234, %v1244
        %v1247 = vsub.f32 %v1235, %v1245
        %v1248 = vmul.f32 %v1246, %v1246
        %v1249 = vmul.f32 %v1247, %v1247
        %v1250 = vsel %vm622, %v1248, 0.0
        %1251 = vadd.xlane.f32.xlu0 %v1250
        %v1252 = vpop.xlane.xlu0 %1251
        %v1253 = vsel %vm1080, %v1249, 0.0
        %1254 = vadd.xlane.f32.xlu0 %v1253
        %v1255 = vpop.xlane.xlu0 %1254
        %v1256 = vmul.f32 %v1252, %v1090
        %v1257 = vmul.f32 %v1255, %v1090
        %v1258 = vadd.f32 %v1256, 1e-05
        %v1259 = vadd.f32 %v1257, 1e-05
        %v1260 = vrsqrt.pop %v1258
        %v1261 = vmul.f32 %v1260, %v1258
        %v1262 = vmul.f32 %v1261, %v1260
        %v1263 = vmul.f32 0.5, %v1262
        %v1264 = vsub.f32 1.5, %v1263
        %v1265 = vmul.f32 %v1260, %v1264
        %vm1266 = vweird.f32 %v1258
        %vm1267 = vweird.f32 %v1260
        %vm1268 = vmor %vm1266, %vm1267
        %v1269 = vsel %vm1268, %v1260, %v1265
        %v1270 = vrsqrt.pop %v1259
        %v1271 = vmul.f32 %v1270, %v1259
        %v1272 = vmul.f32 %v1271, %v1270
        %v1273 = vmul.f32 0.5, %v1272
        %v1274 = vsub.f32 1.5, %v1273
        %v1275 = vmul.f32 %v1270, %v1274
        %vm1276 = vweird.f32 %v1259
        %vm1277 = vweird.f32 %v1270
        %vm1278 = vmor %vm1276, %vm1277
        %v1279 = vsel %vm1278, %v1270, %v1275
        %v1280 = vmul.f32 %v1246, %v1269
        %v1281 = vmul.f32 %v1247, %v1279
        %v1283 = vperm.slane %v1236, 0
        %v1285 = vmul.f32 %v1280, %v1283
        %v1286 = vmul.f32 %v1281, %v1283
        %v1288 = vperm.slane %v1237, 0
        %v1290 = vadd.f32 %v1285, %v1288
        %v1291 = vadd.f32 %v1286, %v1288
        %v1292 = vld [vmem:[%s13] sm:$0x1]
        %v1293 = vld [vmem:[%s14] sm:$0x1]
        %v1294 = vsel %vm622, %v1290, 0.0
        %1295 = vadd.xlane.f32.xlu0 %v1294
        %v1296 = vpop.xlane.xlu0 %1295
        %v1297 = vsel %vm1080, %v1291, 0.0
        %1298 = vadd.xlane.f32.xlu0 %v1297
        %v1299 = vpop.xlane.xlu0 %1298
        %v1300 = vmul.f32 %v1296, %v1090
        %v1301 = vmul.f32 %v1299, %v1090
        %v1302 = vsub.f32 %v1290, %v1300
        %v1303 = vsub.f32 %v1291, %v1301
        %v1304 = vmul.f32 %v1302, %v1302
        %v1305 = vmul.f32 %v1303, %v1303
        %v1306 = vsel %vm622, %v1304, 0.0
        %1307 = vadd.xlane.f32.xlu0 %v1306
        %v1308 = vpop.xlane.xlu0 %1307
        %v1309 = vsel %vm1080, %v1305, 0.0
        %1310 = vadd.xlane.f32.xlu0 %v1309
        %v1311 = vpop.xlane.xlu0 %1310
        %v1312 = vmul.f32 %v1308, %v1090
        %v1313 = vmul.f32 %v1311, %v1090
        %v1314 = vadd.f32 %v1312, 1e-05
        %v1315 = vadd.f32 %v1313, 1e-05
        %v1316 = vrsqrt.pop %v1314
        %v1317 = vmul.f32 %v1316, %v1314
        %v1318 = vmul.f32 %v1317, %v1316
        %v1319 = vmul.f32 0.5, %v1318
        %v1320 = vsub.f32 1.5, %v1319
        %v1321 = vmul.f32 %v1316, %v1320
        %vm1322 = vweird.f32 %v1314
        %vm1323 = vweird.f32 %v1316
        %vm1324 = vmor %vm1322, %vm1323
        %v1325 = vsel %vm1324, %v1316, %v1321
        %v1326 = vrsqrt.pop %v1315
        %v1327 = vmul.f32 %v1326, %v1315
        %v1328 = vmul.f32 %v1327, %v1326
        %v1329 = vmul.f32 0.5, %v1328
        %v1330 = vsub.f32 1.5, %v1329
        %v1331 = vmul.f32 %v1326, %v1330
        %vm1332 = vweird.f32 %v1315
        %vm1333 = vweird.f32 %v1326
        %vm1334 = vmor %vm1332, %vm1333
        %v1335 = vsel %vm1334, %v1326, %v1331
        %v1336 = vmul.f32 %v1302, %v1325
        %v1337 = vmul.f32 %v1303, %v1335
        %v1339 = vperm.slane %v1292, 0
        %v1341 = vmul.f32 %v1336, %v1339
        %v1342 = vmul.f32 %v1337, %v1339
        %v1344 = vperm.slane %v1293, 0
        %v1346 = vadd.f32 %v1341, %v1344
        %v1347 = vadd.f32 %v1342, %v1344
        %1348 = vst.msk [vmem:[%s592] sm:$0xff] %vm622, %v1346
        %1349 = vst.msk [vmem:[%s592 + $0x8] sm:$0x1] %vm1080, %v1347
        %p1350 = scmp.lt.s32.totalorder %s31, 1
        %s1351 = scalar_select %p1350, %s31, 1
        %s1352 = smul.addr %s1351, 2
        %s1353 = smul.addr %s1352, 8
        %s1354 = scalar_lea.vmem %s15, %s1353
        %p1355 = scmp.lt.s32.totalorder %s31, 1
        %s1356 = scalar_select %p1355, %s31, 1
        %s1357 = smul.addr %s1356, 8
        %s1358 = smul.addr %s1357, 8
        %s1359 = scalar_lea.vmem %s16, %s1358
        // Predicated region
        $region97: #{_lambda_.7} parent=79 // pred_check
          %p1360 = pneg %p369
        $region98: #{_lambda_.7} parent=79 // pred_check_branch
          %1362 = sbr.rel (%p1360) target = $region100
        $region99: #{_lambda_.7} parent=79 // pred_region
          _
        $region100: #{_lambda_.7} parent=79 // pred_fallthru
          _
        // Predicated region
        $region101: #{_lambda_.7} parent=79 // pred_check
          %p1363 = pneg %p395
        $region102: #{_lambda_.7} parent=79 // pred_check_branch
          %1365 = sbr.rel (%p1363) target = $region104
        $region103: #{_lambda_.7} parent=79 // pred_region
          _
        $region104: #{_lambda_.7} parent=79 // pred_fallthru
          _
      $region80: #{_lambda_.7} parent=5 // pred_fallthru
        _
      %p1366 = scmp.le.s32.totalorder 2, %s26
      // Predicated region
      $region105: #{_lambda_.7} parent=5 // pred_check
        %p1367 = pneg %p1366
      $region106: #{_lambda_.7} parent=5 // pred_check_branch
        %1369 = sbr.rel (%p1367) target = $region108
      $region107: #{_lambda_.7} parent=5 // pred_region
        %s1370 = ssub.s32 %s26, 2
        // Predicated region
        $region109: #{_lambda_.7} parent=107 // pred_check
          %p1371 = pneg %p375
        $region110: #{_lambda_.7} parent=107 // pred_check_branch
          %1373 = sbr.rel (%p1371) target = $region112
        $region111: #{_lambda_.7} parent=107 // pred_region
          %p1374 = scmp.lt.s32.totalorder %s32, 1
          %s1375 = scalar_select %p1374, %s32, 1
          %s1376 = smul.addr %s1375, 2
          %s1377 = smul.addr %s1376, 8
          %s1378 = scalar_lea.vmem %s15, %s1377
        $region112: #{_lambda_.7} parent=107 // pred_fallthru
          _
        // Predicated region
        $region113: #{_lambda_.7} parent=107 // pred_check
          %p1379 = pneg %p401
        $region114: #{_lambda_.7} parent=107 // pred_check_branch
          %1381 = sbr.rel (%p1379) target = $region116
        $region115: #{_lambda_.7} parent=107 // pred_region
          %p1382 = scmp.lt.s32.totalorder %s32, 1
          %s1383 = scalar_select %p1382, %s32, 1
          %s1384 = smul.addr %s1383, 8
          %s1385 = smul.addr %s1384, 8
          %s1386 = scalar_lea.vmem %s16, %s1385
        $region116: #{_lambda_.7} parent=107 // pred_fallthru
          _
      $region108: #{_lambda_.7} parent=5 // pred_fallthru
        _
    $region6: #{_lambda_.7} parent=1 // loop_footer
      %s30 = sadd.s32 1, %s26
    $region7: #{_lambda_.7} parent=1 // loop_footer_branch
      %25 = sbr.rel target = $region3
    $region8: #{_lambda_.7} parent=1 // loop_exit
      _
    %1387 = vsyncpa [#allocation3], 1
    %s1388 = scalar_lea.sflag [#allocation3], 1
    %1389 = vsyncpa %s1388, 1
    %1390 = vsyncpa [#allocation5], 1
    %1391 = vsyncpa [#allocation8], 1

</llo_original>
